<compile_context>
chip_gen: v5e
topology: v5e:2x2
jax: 0.10.0
libtpu: 0.0.40
codegen_flags: <defaults>
</compile_context>

<pallas_src>
import functools

import jax
import jax.numpy as jnp
from jax import lax
from jax.experimental import pallas as pl
from jax.experimental.pallas import tpu as pltpu


def _round_up(x, m):
    return ((x + m - 1) // m) * m


# ---------------------------------------------------------------------------
# Kernel 1: fused l-layer LightGCL propagation, row-tiled over the adjacency.
#
# grid = (n_layers, n_row_tiles); both axes "arbitrary" (layer carries E_prev,
# the row axis carries the Z_i / ut@E_u reductions).
# Reference semantics per layer:
#   Z_u = A @ E_i_prev                G_u_l = u_mul_s @ (vt @ E_i_prev)
#   Z_i = A.T @ E_u_prev              G_i_l = v_mul_s @ (ut @ E_u_prev)
#   E_u_prev <- Z_u ; E_i_prev <- Z_i ; running sums += (Z, G)
# ---------------------------------------------------------------------------

def _prop_kernel(adj_ref, umuls_ref, ut_ref, vt_ref, vmuls_ref, eu0_ref, ei0_ref,
                 eu_sum_ref, ei_sum_ref, gu_sum_ref, gi_sum_ref,
                 eu_prev, ei_prev, zi_acc, uteu_acc, vtei_buf):
    L = pl.program_id(0)                 # layer index
    i = pl.program_id(1)                 # adjacency row tile
    n_tiles = pl.num_programs(1)
    tm = adj_ref.shape[0]
    row0 = pl.multiple_of(i * tm, tm)
    rows = pl.ds(row0, tm)

    # ---- one-time init (very first grid step): item side, fully resident ----
    @pl.when(jnp.logical_and(L == 0, i == 0))
    def _():
        ei0 = ei0_ref[...]
        ei_sum_ref[...] = ei0                       # E_i_list[0]
        gi_sum_ref[...] = ei0                       # G_i_list[0]
        ei_prev[...] = ei0.astype(jnp.bfloat16)

    # ---- layer-0 init of this row tile: user side ----
    @pl.when(L == 0)
    def _():
        eu0_t = eu0_ref[...]
        eu_sum_ref[rows, :] = eu0_t                 # E_u_list[0]
        gu_sum_ref[rows, :] = eu0_t                 # G_u_list[0]
        eu_prev[rows, :] = eu0_t.astype(jnp.bfloat16)

    # ---- per-layer init (first row tile): rank-r factored SVD branch + accumulators ----
    @pl.when(i == 0)
    def _():
        # vt @ E_i_prev : [r_pad, d_pad]  (tiny; replaces the dense (U*S)@Vt expansion)
        vtei_buf[...] = jnp.dot(vt_ref[...], ei_prev[...],
                                preferred_element_type=jnp.float32)
        zi_acc[...] = jnp.zeros_like(zi_acc)
        uteu_acc[...] = jnp.zeros_like(uteu_acc)

    # ---- per adjacency row tile (the only big streamed operand) ----
    a_t = adj_ref[...]                               # [tm, n_i_pad] bf16
    eu_prev_t = eu_prev[rows, :]                     # [tm, d_pad]   bf16 (layer L-1 value)

    # Z_u tile = A_tile @ E_i_prev
    z_u = jnp.dot(a_t, ei_prev[...], preferred_element_type=jnp.float32)   # [tm, d_pad]

    # Z_i partial via transposed contraction (A.T never materialized):
    #   zi_acc[d, n_i] += E_u_prev_tile^T @ A_tile
    zi_acc[...] += lax.dot_general(eu_prev_t, a_t, (((0,), (0,)), ((), ())),
                                   preferred_element_type=jnp.float32)

    # (ut @ E_u_prev) partial: uteu_acc[r, d] += ut[:, tile] @ E_u_prev_tile
    uteu_acc[...] += jnp.dot(ut_ref[...], eu_prev_t,
                             preferred_element_type=jnp.float32)

    # G_u tile = u_mul_s_tile @ (vt @ E_i_prev)
    g_u = jnp.dot(umuls_ref[...], vtei_buf[...].astype(jnp.bfloat16),
                  preferred_element_type=jnp.float32)                       # [tm, d_pad]

    eu_sum_ref[rows, :] = eu_sum_ref[rows, :] + z_u
    gu_sum_ref[rows, :] = gu_sum_ref[rows, :] + g_u
    eu_prev[rows, :] = z_u.astype(jnp.bfloat16)      # E_u_list[L]

    # ---- per-layer finalize (last row tile): item side ----
    @pl.when(i == n_tiles - 1)
    def _():
        z_i = zi_acc[...].T                                           # one transpose / layer
        g_i = jnp.dot(vmuls_ref[...], uteu_acc[...].astype(jnp.bfloat16),
                      preferred_element_type=jnp.float32)             # v_mul_s @ (ut @ E_u_prev)
        ei_sum_ref[...] += z_i
        gi_sum_ref[...] += g_i
        ei_prev[...] = z_i.astype(jnp.bfloat16)      # E_i_list[L]


def lightgcl_propagate(adj_p, umuls_p, ut_p, vt_p, vmuls_p, eu0_p, ei0_p, *,
                       n_layers, tm):
    n_u_pad, n_i_pad = adj_p.shape
    d_pad = eu0_p.shape[1]
    r_pad = vt_p.shape[0]
    assert n_u_pad % tm == 0
    n_tiles = n_u_pad // tm

    # Explicit VMEM budget (review item): streamed tiles are double-buffered,
    # the O(n*d) state stays resident.  Toy sizes land well below 16 MiB; at
    # real dataset sizes re-derive per generation (64 MiB physical on v7x).
    bytes_streamed = 2 * (tm * n_i_pad * 2 + tm * r_pad * 2 + r_pad * tm * 2
                          + tm * d_pad * 4)
    bytes_resident = (n_i_pad * d_pad * 4                       # E_i_0
                      + r_pad * n_i_pad * 2 + n_i_pad * r_pad * 2   # vt, v_mul_s
                      + 2 * n_u_pad * d_pad * 4                 # E_u / G_u running sums
                      + 2 * n_i_pad * d_pad * 4                 # E_i / G_i running sums
                      + n_u_pad * d_pad * 2 + n_i_pad * d_pad * 2   # E_prev (bf16)
                      + d_pad * n_i_pad * 4 + 2 * r_pad * d_pad * 4)  # Z_i^T acc + rank-r accs
    vmem_limit = max(16 * 1024 * 1024,
                     min(int(1.5 * (bytes_streamed + bytes_resident)) + (2 << 20),
                         56 * 1024 * 1024))

    # TODO(synk): the row axis stays "arbitrary" because Z_i / ut@E_u reduce over it;
    #             v7x dual-TC parallelism would need per-core partial accumulators
    #             plus a cross-core reduce.  A deeper pipeline (pl.Buffered(3)) on
    #             the adjacency tile is a further v7x-only option.
    return pl.pallas_call(
        _prop_kernel,
        grid=(n_layers, n_tiles),
        in_specs=[
            pl.BlockSpec((tm, n_i_pad), lambda L, i: (i, 0)),        # adj row tile (streamed)
            pl.BlockSpec((tm, r_pad), lambda L, i: (i, 0)),          # u_mul_s row tile
            pl.BlockSpec((r_pad, tm), lambda L, i: (0, i)),          # ut column tile
            pl.BlockSpec((r_pad, n_i_pad), lambda L, i: (0, 0)),     # vt (resident)
            pl.BlockSpec((n_i_pad, r_pad), lambda L, i: (0, 0)),     # v_mul_s (resident)
            pl.BlockSpec((tm, d_pad), lambda L, i: (i, 0)),          # E_u_0 row tile
            pl.BlockSpec((n_i_pad, d_pad), lambda L, i: (0, 0)),     # E_i_0 (resident)
        ],
        out_specs=[
            pl.BlockSpec((n_u_pad, d_pad), lambda L, i: (0, 0)),     # E_u sum (resident acc)
            pl.BlockSpec((n_i_pad, d_pad), lambda L, i: (0, 0)),     # E_i sum
            pl.BlockSpec((n_u_pad, d_pad), lambda L, i: (0, 0)),     # G_u sum
            pl.BlockSpec((n_i_pad, d_pad), lambda L, i: (0, 0)),     # G_i sum
        ],
        out_shape=(
            jax.ShapeDtypeStruct((n_u_pad, d_pad), jnp.float32),
            jax.ShapeDtypeStruct((n_i_pad, d_pad), jnp.float32),
            jax.ShapeDtypeStruct((n_u_pad, d_pad), jnp.float32),
            jax.ShapeDtypeStruct((n_i_pad, d_pad), jnp.float32),
        ),
        scratch_shapes=[
            pltpu.VMEM((n_u_pad, d_pad), jnp.bfloat16),    # E_u_prev
            pltpu.VMEM((n_i_pad, d_pad), jnp.bfloat16),    # E_i_prev
            pltpu.VMEM((d_pad, n_i_pad), jnp.float32),     # Z_i^T accumulator
            pltpu.VMEM((r_pad, d_pad), jnp.float32),       # ut @ E_u_prev
            pltpu.VMEM((r_pad, d_pad), jnp.float32),       # vt @ E_i_prev
        ],
        compiler_params=pltpu.CompilerParams(
            dimension_semantics=("arbitrary", "arbitrary"),
            vmem_limit_bytes=vmem_limit),
    )(adj_p, umuls_p, ut_p, vt_p, vmuls_p, eu0_p, ei0_p)


# ---------------------------------------------------------------------------
# Kernel 2: fused loss tail.  Grid over node tiles of the pre-transposed,
# column-concatenated [d_pad, n_u_pad + n_i_pad] negatives operand with an
# online logsumexp (exact w.r.t. the reference log(sum exp(s) + 1e-8)).
# BPR + clipped positive scores are computed at the last grid step; the result
# is one lane-dense (1, 128) store.
# ---------------------------------------------------------------------------

def _loss_kernel(inv_temp, n_u, n_i, n_u_pad, n_tiles_u,
                 ecat_ref, gu_ref, gi_ref, eu_ref, ei_ref, pos_ref, neg_ref,
                 out_ref,
                 m_u, s_u, m_i, s_i):
    j = pl.program_id(0)
    nj = pl.num_programs(0)
    tn = ecat_ref.shape[1]
    b = gu_ref.shape[0]
    inv_b = 1.0 / b

    @pl.when(j == 0)
    def _():
        m_u[...] = jnp.full_like(m_u, -1e30)
        m_i[...] = jnp.full_like(m_i, -1e30)
        s_u[...] = jnp.zeros_like(s_u)
        s_i[...] = jnp.zeros_like(s_i)
        out_ref[...] = jnp.zeros_like(out_ref)

    is_user = j < n_tiles_u
    g = jnp.where(is_user, gu_ref[...], gi_ref[...])                       # [b, d_pad]
    # f32 score matmul (precision-consistent with the positive scores).
    scores = jnp.dot(g, ecat_ref[...],
                     preferred_element_type=jnp.float32) * inv_temp        # [b, tn]
    col = j * tn + lax.broadcasted_iota(jnp.int32, (1, tn), 1)
    limit = jnp.where(is_user, n_u, n_u_pad + n_i)                         # valid-column bound
    scores = jnp.where(col < limit, scores, -1e30)

    t_max = jnp.max(scores, axis=1, keepdims=True)                         # [b, 1]
    m_prev = jnp.where(is_user, m_u[...], m_i[...])
    s_prev = jnp.where(is_user, s_u[...], s_i[...])
    m_new = jnp.maximum(m_prev, t_max)
    s_new = s_prev * jnp.exp(m_prev - m_new) + jnp.sum(jnp.exp(scores - m_new),
                                                       axis=1, keepdims=True)
    m_u[...] = jnp.where(is_user, m_new, m_u[...])
    s_u[...] = jnp.where(is_user, s_new, s_u[...])
    m_i[...] = jnp.where(is_user, m_i[...], m_new)
    s_i[...] = jnp.where(is_user, s_i[...], s_new)

    @pl.when(j == nj - 1)
    def _():
        def lse(m, s):
            # exact, overflow-safe rewrite of  log(sum_j exp(score_j) + 1e-8)
            m_fin = jnp.maximum(m, 0.0)
            return m_fin + jnp.log(s * jnp.exp(m - m_fin) + 1e-8 * jnp.exp(-m_fin))

        neg_score = (jnp.sum(lse(m_u[...], s_u[...]))
                     + jnp.sum(lse(m_i[...], s_i[...]))) * inv_b

        gu = gu_ref[...]
        gi = gi_ref[...]
        eu = eu_ref[...]
        ei = ei_ref[...]
        pos_u = jnp.clip(jnp.sum(gu * eu, axis=1, keepdims=True) * inv_temp, -5.0, 5.0)
        pos_i = jnp.clip(jnp.sum(gi * ei, axis=1, keepdims=True) * inv_temp, -5.0, 5.0)
        pos_score = (jnp.sum(pos_u) + jnp.sum(pos_i)) * inv_b
        loss_s = neg_score - pos_score

        # BPR: -mean(log(sigmoid(<u,pos>-<u,neg>))) == mean(softplus(-(diff)))
        diff = jnp.sum(eu * (pos_ref[...] - neg_ref[...]), axis=1, keepdims=True)
        z = -diff
        loss_r = jnp.sum(jnp.maximum(z, 0.0)
                         + jnp.log(1.0 + jnp.exp(-jnp.abs(z)))) * inv_b

        lane = lax.broadcasted_iota(jnp.int32, (1, 128), 1)
        vec = jnp.where(lane == 0, loss_s, 0.0)
        vec = jnp.where(lane == 1, loss_r, vec)
        out_ref[...] = vec


def lightgcl_loss(e_cat_T, g_u_sel, g_i_sel, e_u_sel, e_i_sel, pos_emb, neg_emb, *,
                  temp, n_u, n_i, n_u_pad, tn):
    d_pad, n_cat = e_cat_T.shape
    assert n_cat % tn == 0 and n_u_pad % tn == 0
    n_tiles = n_cat // tn
    n_tiles_u = n_u_pad // tn
    b = g_u_sel.shape[0]

    kernel = functools.partial(_loss_kernel, 1.0 / temp, n_u, n_i, n_u_pad, n_tiles_u)
    batch_spec = pl.BlockSpec((b, d_pad), lambda j: (0, 0))
    # TODO(synk): at large batch/n the [b, d_pad] gathered rows could instead be
    #             fetched in-kernel via PrefetchScalarGridSpec + pl.Element row maps.
    return pl.pallas_call(
        kernel,
        grid=(n_tiles,),
        in_specs=[
            pl.BlockSpec((d_pad, tn), lambda j: (0, j)),   # streamed negatives tile
            batch_spec, batch_spec, batch_spec, batch_spec, batch_spec, batch_spec,
        ],
        out_specs=pl.BlockSpec((1, 128), lambda j: (0, 0)),
        out_shape=jax.ShapeDtypeStruct((1, 128), jnp.float32),
        scratch_shapes=[pltpu.VMEM((b, 1), jnp.float32) for _ in range(4)],
        compiler_params=pltpu.CompilerParams(
            dimension_semantics=("arbitrary",)),
    )(e_cat_T, g_u_sel, g_i_sel, e_u_sel, e_i_sel, pos_emb, neg_emb)


# ---------------------------------------------------------------------------
# LightGCL forward (train branch)
# ---------------------------------------------------------------------------

def lightgcl_forward(params, uids, iids, pos, neg, *, l, temp, lambda_1, lambda_2,
                     tm=128, tn=128):
    E_u_0 = params["E_u_0"]
    E_i_0 = params["E_i_0"]
    adj = params["adj_norm"]
    u_mul_s = params["u_mul_s"]
    v_mul_s = params["v_mul_s"]
    ut = params["ut"]
    vt = params["vt"]

    n_u, d = E_u_0.shape
    n_i = E_i_0.shape[0]
    r = ut.shape[0]
    n_u_pad = _round_up(n_u, max(tm, tn))
    n_i_pad = _round_up(n_i, max(128, tn))
    d_pad = _round_up(d, 128)                  # pad embedding dim to 128 lanes
    r_pad = _round_up(r, 16)

    def pad2(x, rr, cc, dtype):
        return jnp.pad(x, ((0, rr - x.shape[0]), (0, cc - x.shape[1]))).astype(dtype)

    # TODO(synk): sparse_dropout(adj_norm, dropout) is stochastic; dropout=0 -> identity here.
    adj_p = pad2(adj, n_u_pad, n_i_pad, jnp.bfloat16)
    umuls_p = pad2(u_mul_s, n_u_pad, r_pad, jnp.bfloat16)
    vmuls_p = pad2(v_mul_s, n_i_pad, r_pad, jnp.bfloat16)
    ut_p = pad2(ut, r_pad, n_u_pad, jnp.bfloat16)
    vt_p = pad2(vt, r_pad, n_i_pad, jnp.bfloat16)
    eu0_p = pad2(E_u_0, n_u_pad, d_pad, jnp.float32)
    ei0_p = pad2(E_i_0, n_i_pad, d_pad, jnp.float32)

    E_u, E_i, G_u, G_i = lightgcl_propagate(adj_p, umuls_p, ut_p, vt_p, vmuls_p,
                                            eu0_p, ei0_p, n_layers=l, tm=tm)

    # Negatives operand for the loss kernel: transpose + concat ONCE per step in the
    # wrapper so the in-kernel score matmul is a plain [b, d] @ [d, tile].
    e_cat_T = jnp.concatenate([E_u.T, E_i.T], axis=1)      # [d_pad, n_u_pad + n_i_pad]

    # Batch-row gathers (plain XLA gather; padded rows are never indexed).
    g_u_sel = jnp.take(G_u, uids, axis=0)
    g_i_sel = jnp.take(G_i, iids, axis=0)
    e_u_sel = jnp.take(E_u, uids, axis=0)
    e_i_sel = jnp.take(E_i, iids, axis=0)
    pos_emb = jnp.take(E_i, pos, axis=0)
    neg_emb = jnp.take(E_i, neg, axis=0)

    res = lightgcl_loss(e_cat_T, g_u_sel, g_i_sel, e_u_sel, e_i_sel, pos_emb, neg_emb,
                        temp=temp, n_u=n_u, n_i=n_i, n_u_pad=n_u_pad, tn=tn)
    loss_s = res[0, 0]
    loss_r = res[0, 1]

    # L2 regularizer over the nn.Parameters (sum of squared Frobenius norms).
    loss_reg = lambda_2 * (jnp.sum(E_u_0 * E_u_0) + jnp.sum(E_i_0 * E_i_0))

    # TODO(synk): cacl_loss (lambda_3 term) needs preprocessing() over data/train.txt
    #             plus python random sampling; omitted (== lambda_3 * 0).
    loss = loss_r + lambda_1 * loss_s + loss_reg
    return loss, loss_r, lambda_1 * loss_s


# ---------------------------------------------------------------------------
# Deterministic setup + run
# ---------------------------------------------------------------------------

def xavier_uniform(key, shape):
    fan_in, fan_out = shape[0], shape[1]
    bound = (6.0 / (fan_in + fan_out)) ** 0.5
    return jax.random.uniform(key, shape, jnp.float32, minval=-bound, maxval=bound)


if __name__ == "__main__":
    n_u, n_i, d, r = 200, 176, 32, 8      # deliberately non-multiples to exercise padding/masking
    l = 2
    temp = 0.2
    lambda_1 = 0.2
    lambda_2 = 1e-7
    batch = 16

    key = jax.random.PRNGKey(0)
    k_eu, k_ei, k_adj, k_us, k_vs, k_ut, k_vt, k_idx = jax.random.split(key, 8)

    E_u_0 = xavier_uniform(k_eu, (n_u, d))
    E_i_0 = xavier_uniform(k_ei, (n_i, d))

    # Deterministic normalized bipartite adjacency (dense stand-in for the sparse adj_norm).
    mask = jax.random.bernoulli(k_adj, 0.1, (n_u, n_i)).astype(jnp.float32)
    du = jnp.clip(mask.sum(1, keepdims=True), 1.0, None)
    di = jnp.clip(mask.sum(0, keepdims=True), 1.0, None)
    adj_norm = mask / jnp.sqrt(du) / jnp.sqrt(di)

    # SVD-factor stand-ins with the module's shapes (u_mul_s=U*S [n_u,r], ut=U.T [r,n_u], ...).
    u_mul_s = 0.1 * jax.random.normal(k_us, (n_u, r), jnp.float32)
    v_mul_s = 0.1 * jax.random.normal(k_vs, (n_i, r), jnp.float32)
    ut = 0.1 * jax.random.normal(k_ut, (r, n_u), jnp.float32)
    vt = 0.1 * jax.random.normal(k_vt, (r, n_i), jnp.float32)

    k_u, k_i, k_p, k_n = jax.random.split(k_idx, 4)
    uids = jax.random.randint(k_u, (batch,), 0, n_u)
    iids = jax.random.randint(k_i, (batch,), 0, n_i)
    pos = jax.random.randint(k_p, (batch,), 0, n_i)
    neg = jax.random.randint(k_n, (batch,), 0, n_i)

    params = dict(E_u_0=E_u_0, E_i_0=E_i_0, adj_norm=adj_norm,
                  u_mul_s=u_mul_s, v_mul_s=v_mul_s, ut=ut, vt=vt)

    fwd = jax.jit(functools.partial(lightgcl_forward, l=l, temp=temp,
                                    lambda_1=lambda_1, lambda_2=lambda_2))
    loss, loss_r, loss_s_scaled = fwd(params, uids, iids, pos, neg)
    jax.block_until_ready((loss, loss_r, loss_s_scaled))

    assert jnp.isfinite(loss) and jnp.isfinite(loss_r) and jnp.isfinite(loss_s_scaled)
    print("KERNEL_OK")
</pallas_src>

<mosaic_0001>
module attributes {stable_mosaic.version = 11 : i64} {
  func.func @_prop_kernel(%arg0: i32, %arg1: i32, %arg2: memref<128x256xbf16, #tpu.memory_space<vmem>>, %arg3: memref<128x16xbf16, #tpu.memory_space<vmem>>, %arg4: memref<16x128xbf16, #tpu.memory_space<vmem>>, %arg5: memref<16x256xbf16, #tpu.memory_space<vmem>>, %arg6: memref<256x16xbf16, #tpu.memory_space<vmem>>, %arg7: memref<128x128xf32, #tpu.memory_space<vmem>>, %arg8: memref<256x128xf32, #tpu.memory_space<vmem>>, %arg9: memref<256x128xf32, #tpu.memory_space<vmem>>, %arg10: memref<256x128xf32, #tpu.memory_space<vmem>>, %arg11: memref<256x128xf32, #tpu.memory_space<vmem>>, %arg12: memref<256x128xf32, #tpu.memory_space<vmem>>, %arg13: memref<256x128xbf16, #tpu.memory_space<vmem>>, %arg14: memref<256x128xbf16, #tpu.memory_space<vmem>>, %arg15: memref<128x256xf32, #tpu.memory_space<vmem>>, %arg16: memref<16x128xf32, #tpu.memory_space<vmem>>, %arg17: memref<16x128xf32, #tpu.memory_space<vmem>>) attributes {dimension_semantics = [#tpu.dimension_semantics<arbitrary>, #tpu.dimension_semantics<arbitrary>], iteration_bounds = array<i64: 2, 2>, scalar_prefetch = 0 : i64, scratch_operands = 5 : i64, tpu.core_type = #tpu.core_type<tc>, window_params = [{transform_indices = @transform_0, window_bounds = array<i64: 128, 256>}, {transform_indices = @transform_1, window_bounds = array<i64: 128, 16>}, {transform_indices = @transform_2, window_bounds = array<i64: 16, 128>}, {pipeline_mode = #tpu.pipeline_mode<synchronous>, transform_indices = @transform_3, window_bounds = array<i64: 16, 256>}, {pipeline_mode = #tpu.pipeline_mode<synchronous>, transform_indices = @transform_4, window_bounds = array<i64: 256, 16>}, {transform_indices = @transform_5, window_bounds = array<i64: 128, 128>}, {pipeline_mode = #tpu.pipeline_mode<synchronous>, transform_indices = @transform_6, window_bounds = array<i64: 256, 128>}, {pipeline_mode = #tpu.pipeline_mode<synchronous>, transform_indices = @transform_7, window_bounds = array<i64: 256, 128>}, {pipeline_mode = #tpu.pipeline_mode<synchronous>, transform_indices = @transform_8, window_bounds = array<i64: 256, 128>}, {pipeline_mode = #tpu.pipeline_mode<synchronous>, transform_indices = @transform_9, window_bounds = array<i64: 256, 128>}, {pipeline_mode = #tpu.pipeline_mode<synchronous>, transform_indices = @transform_10, window_bounds = array<i64: 256, 128>}]} {
    %c128_i32 = arith.constant 128 : i32
    %0 = arith.muli %arg1, %c128_i32 : i32
    %1 = tpu.assume_multiple %0, 128 : i32
    %c0_i32 = arith.constant 0 : i32
    %2 = arith.cmpi eq, %arg0, %c0_i32 : i32
    %c0_i32_0 = arith.constant 0 : i32
    %3 = arith.cmpi eq, %arg1, %c0_i32_0 : i32
    %4 = arith.andi %2, %3 : i1
    %5 = arith.extui %4 : i1 to i32
    %c0_i32_1 = arith.constant 0 : i32
    %6 = arith.cmpi ne, %5, %c0_i32_1 : i32
    scf.if %6 {
      %c0_33 = arith.constant 0 : index
      %c0_34 = arith.constant 0 : index
      %47 = vector.load %arg8[%c0_33, %c0_34] : memref<256x128xf32, #tpu.memory_space<vmem>>, vector<256x128xf32>
      %c0_35 = arith.constant 0 : index
      %c0_36 = arith.constant 0 : index
      %48 = vector.load %arg10[%c0_35, %c0_36] : memref<256x128xf32, #tpu.memory_space<vmem>>, vector<256x128xf32>
      tpu.vector_store %arg10[%c0_35, %c0_36], %47 {strides = array<i32>} : memref<256x128xf32, #tpu.memory_space<vmem>>, vector<256x128xf32>,
      %c0_37 = arith.constant 0 : index
      %c0_38 = arith.constant 0 : index
      %49 = vector.load %arg12[%c0_37, %c0_38] : memref<256x128xf32, #tpu.memory_space<vmem>>, vector<256x128xf32>
      tpu.vector_store %arg12[%c0_37, %c0_38], %47 {strides = array<i32>} : memref<256x128xf32, #tpu.memory_space<vmem>>, vector<256x128xf32>,
      %50 = arith.truncf %47 : vector<256x128xf32> to vector<256x128xbf16>
      %c0_39 = arith.constant 0 : index
      %c0_40 = arith.constant 0 : index
      %51 = vector.load %arg14[%c0_39, %c0_40] : memref<256x128xbf16, #tpu.memory_space<vmem>>, vector<256x128xbf16>
      tpu.vector_store %arg14[%c0_39, %c0_40], %50 {strides = array<i32>} : memref<256x128xbf16, #tpu.memory_space<vmem>>, vector<256x128xbf16>,
    } else {
    }
    %c0_i32_2 = arith.constant 0 : i32
    %7 = arith.cmpi eq, %arg0, %c0_i32_2 : i32
    %8 = arith.extui %7 : i1 to i32
    %c0_i32_3 = arith.constant 0 : i32
    %9 = arith.cmpi ne, %8, %c0_i32_3 : i32
    scf.if %9 {
      %c0_33 = arith.constant 0 : index
      %c0_34 = arith.constant 0 : index
      %47 = vector.load %arg7[%c0_33, %c0_34] : memref<128x128xf32, #tpu.memory_space<vmem>>, vector<128x128xf32>
      %48 = arith.index_cast %1 : i32 to index
      %c0_35 = arith.constant 0 : index
      %49 = vector.load %arg9[%48, %c0_35] : memref<256x128xf32, #tpu.memory_space<vmem>>, vector<128x128xf32>
      tpu.vector_store %arg9[%48, %c0_35], %47 {strides = array<i32>} : memref<256x128xf32, #tpu.memory_space<vmem>>, vector<128x128xf32>,
      %50 = arith.index_cast %1 : i32 to index
      %c0_36 = arith.constant 0 : index
      %51 = vector.load %arg11[%50, %c0_36] : memref<256x128xf32, #tpu.memory_space<vmem>>, vector<128x128xf32>
      tpu.vector_store %arg11[%50, %c0_36], %47 {strides = array<i32>} : memref<256x128xf32, #tpu.memory_space<vmem>>, vector<128x128xf32>,
      %52 = arith.truncf %47 : vector<128x128xf32> to vector<128x128xbf16>
      %53 = arith.index_cast %1 : i32 to index
      %c0_37 = arith.constant 0 : index
      %54 = vector.load %arg13[%53, %c0_37] : memref<256x128xbf16, #tpu.memory_space<vmem>>, vector<128x128xbf16>
      tpu.vector_store %arg13[%53, %c0_37], %52 {strides = array<i32>} : memref<256x128xbf16, #tpu.memory_space<vmem>>, vector<128x128xbf16>,
    } else {
    }
    %c0_i32_4 = arith.constant 0 : i32
    %10 = arith.cmpi eq, %arg1, %c0_i32_4 : i32
    %11 = arith.extui %10 : i1 to i32
    %c0_i32_5 = arith.constant 0 : i32
    %12 = arith.cmpi ne, %11, %c0_i32_5 : i32
    scf.if %12 {
      %c0_33 = arith.constant 0 : index
      %c0_34 = arith.constant 0 : index
      %47 = vector.load %arg5[%c0_33, %c0_34] : memref<16x256xbf16, #tpu.memory_space<vmem>>, vector<16x256xbf16>
      %c0_35 = arith.constant 0 : index
      %c0_36 = arith.constant 0 : index
      %48 = vector.load %arg14[%c0_35, %c0_36] : memref<256x128xbf16, #tpu.memory_space<vmem>>, vector<256x128xbf16>
      %cst_37 = arith.constant dense<0.000000e+00> : vector<16x128xf32>
      %49 = tpu.matmul %47, %48, %cst_37 {dimension_numbers = #tpu.dot_dimension_numbers<[1], [0], [0], [1], [0, 0, 1, 1], [], []>} : vector<16x256xbf16>, vector<256x128xbf16>, vector<16x128xf32> -> vector<16x128xf32>
      %c0_38 = arith.constant 0 : index
      %c0_39 = arith.constant 0 : index
      %50 = vector.load %arg17[%c0_38, %c0_39] : memref<16x128xf32, #tpu.memory_space<vmem>>, vector<16x128xf32>
      tpu.vector_store %arg17[%c0_38, %c0_39], %49 {strides = array<i32>} : memref<16x128xf32, #tpu.memory_space<vmem>>, vector<16x128xf32>,
      %cst_40 = arith.constant 0.000000e+00 : f32
      %51 = vector.broadcast %cst_40 : f32 to vector<128x256xf32>
      %c0_41 = arith.constant 0 : index
      %c0_42 = arith.constant 0 : index
      %52 = vector.load %arg15[%c0_41, %c0_42] : memref<128x256xf32, #tpu.memory_space<vmem>>, vector<128x256xf32>
      tpu.vector_store %arg15[%c0_41, %c0_42], %51 {strides = array<i32>} : memref<128x256xf32, #tpu.memory_space<vmem>>, vector<128x256xf32>,
      %cst_43 = arith.constant 0.000000e+00 : f32
      %53 = vector.broadcast %cst_43 : f32 to vector<16x128xf32>
      %c0_44 = arith.constant 0 : index
      %c0_45 = arith.constant 0 : index
      %54 = vector.load %arg16[%c0_44, %c0_45] : memref<16x128xf32, #tpu.memory_space<vmem>>, vector<16x128xf32>
      tpu.vector_store %arg16[%c0_44, %c0_45], %53 {strides = array<i32>} : memref<16x128xf32, #tpu.memory_space<vmem>>, vector<16x128xf32>,
    } else {
    }
    %c0 = arith.constant 0 : index
    %c0_6 = arith.constant 0 : index
    %13 = vector.load %arg2[%c0, %c0_6] : memref<128x256xbf16, #tpu.memory_space<vmem>>, vector<128x256xbf16>
    %14 = arith.index_cast %1 : i32 to index
    %c0_7 = arith.constant 0 : index
    %15 = vector.load %arg13[%14, %c0_7] : memref<256x128xbf16, #tpu.memory_space<vmem>>, vector<128x128xbf16>
    %c0_8 = arith.constant 0 : index
    %c0_9 = arith.constant 0 : index
    %16 = vector.load %arg14[%c0_8, %c0_9] : memref<256x128xbf16, #tpu.memory_space<vmem>>, vector<256x128xbf16>
    %cst = arith.constant dense<0.000000e+00> : vector<128x128xf32>
    %17 = tpu.matmul %13, %16, %cst {dimension_numbers = #tpu.dot_dimension_numbers<[1], [0], [0], [1], [0, 0, 1, 1], [], []>} : vector<128x256xbf16>, vector<256x128xbf16>, vector<128x128xf32> -> vector<128x128xf32>
    %c0_10 = arith.constant 0 : index
    %c0_11 = arith.constant 0 : index
    %18 = vector.load %arg15[%c0_10, %c0_11] : memref<128x256xf32, #tpu.memory_space<vmem>>, vector<128x256xf32>
    %cst_12 = arith.constant dense<0.000000e+00> : vector<128x256xf32>
    %19 = tpu.matmul %15, %13, %cst_12 {dimension_numbers = #tpu.dot_dimension_numbers<[0], [0], [1], [1], [0, 1, 1, 1], [], []>} : vector<128x128xbf16>, vector<128x256xbf16>, vector<128x256xf32> -> vector<128x256xf32>
    %20 = arith.addf %18, %19 : vector<128x256xf32>
    %c0_13 = arith.constant 0 : index
    %c0_14 = arith.constant 0 : index
    %21 = vector.load %arg15[%c0_13, %c0_14] : memref<128x256xf32, #tpu.memory_space<vmem>>, vector<128x256xf32>
    tpu.vector_store %arg15[%c0_13, %c0_14], %20 {strides = array<i32>} : memref<128x256xf32, #tpu.memory_space<vmem>>, vector<128x256xf32>,
    %c0_15 = arith.constant 0 : index
    %c0_16 = arith.constant 0 : index
    %22 = vector.load %arg16[%c0_15, %c0_16] : memref<16x128xf32, #tpu.memory_space<vmem>>, vector<16x128xf32>
    %c0_17 = arith.constant 0 : index
    %c0_18 = arith.constant 0 : index
    %23 = vector.load %arg4[%c0_17, %c0_18] : memref<16x128xbf16, #tpu.memory_space<vmem>>, vector<16x128xbf16>
    %cst_19 = arith.constant dense<0.000000e+00> : vector<16x128xf32>
    %24 = tpu.matmul %23, %15, %cst_19 {dimension_numbers = #tpu.dot_dimension_numbers<[1], [0], [0], [1], [0, 0, 1, 1], [], []>} : vector<16x128xbf16>, vector<128x128xbf16>, vector<16x128xf32> -> vector<16x128xf32>
    %25 = arith.addf %22, %24 : vector<16x128xf32>
    %c0_20 = arith.constant 0 : index
    %c0_21 = arith.constant 0 : index
    %26 = vector.load %arg16[%c0_20, %c0_21] : memref<16x128xf32, #tpu.memory_space<vmem>>, vector<16x128xf32>
    tpu.vector_store %arg16[%c0_20, %c0_21], %25 {strides = array<i32>} : memref<16x128xf32, #tpu.memory_space<vmem>>, vector<16x128xf32>,
    %c0_22 = arith.constant 0 : index
    %c0_23 = arith.constant 0 : index
    %27 = vector.load %arg3[%c0_22, %c0_23] : memref<128x16xbf16, #tpu.memory_space<vmem>>, vector<128x16xbf16>
    %c0_24 = arith.constant 0 : index
    %c0_25 = arith.constant 0 : index
    %28 = vector.load %arg17[%c0_24, %c0_25] : memref<16x128xf32, #tpu.memory_space<vmem>>, vector<16x128xf32>
    %29 = arith.truncf %28 : vector<16x128xf32> to vector<16x128xbf16>
    %cst_26 = arith.constant dense<0.000000e+00> : vector<128x128xf32>
    %30 = tpu.matmul %27, %29, %cst_26 {dimension_numbers = #tpu.dot_dimension_numbers<[1], [0], [0], [1], [0, 0, 1, 1], [], []>} : vector<128x16xbf16>, vector<16x128xbf16>, vector<128x128xf32> -> vector<128x128xf32>
    %31 = arith.index_cast %1 : i32 to index
    %c0_27 = arith.constant 0 : index
    %32 = vector.load %arg9[%31, %c0_27] : memref<256x128xf32, #tpu.memory_space<vmem>>, vector<128x128xf32>
    %33 = arith.addf %32, %17 : vector<128x128xf32>
    %34 = arith.index_cast %1 : i32 to index
    %c0_28 = arith.constant 0 : index
    %35 = vector.load %arg9[%34, %c0_28] : memref<256x128xf32, #tpu.memory_space<vmem>>, vector<128x128xf32>
    tpu.vector_store %arg9[%34, %c0_28], %33 {strides = array<i32>} : memref<256x128xf32, #tpu.memory_space<vmem>>, vector<128x128xf32>,
    %36 = arith.index_cast %1 : i32 to index
    %c0_29 = arith.constant 0 : index
    %37 = vector.load %arg11[%36, %c0_29] : memref<256x128xf32, #tpu.memory_space<vmem>>, vector<128x128xf32>
    %38 = arith.addf %37, %30 : vector<128x128xf32>
    %39 = arith.index_cast %1 : i32 to index
    %c0_30 = arith.constant 0 : index
    %40 = vector.load %arg11[%39, %c0_30] : memref<256x128xf32, #tpu.memory_space<vmem>>, vector<128x128xf32>
    tpu.vector_store %arg11[%39, %c0_30], %38 {strides = array<i32>} : memref<256x128xf32, #tpu.memory_space<vmem>>, vector<128x128xf32>,
    %41 = arith.truncf %17 : vector<128x128xf32> to vector<128x128xbf16>
    %42 = arith.index_cast %1 : i32 to index
    %c0_31 = arith.constant 0 : index
    %43 = vector.load %arg13[%42, %c0_31] : memref<256x128xbf16, #tpu.memory_space<vmem>>, vector<128x128xbf16>
    tpu.vector_store %arg13[%42, %c0_31], %41 {strides = array<i32>} : memref<256x128xbf16, #tpu.memory_space<vmem>>, vector<128x128xbf16>,
    %c1_i32 = arith.constant 1 : i32
    %44 = arith.cmpi eq, %arg1, %c1_i32 : i32
    %45 = arith.extui %44 : i1 to i32
    %c0_i32_32 = arith.constant 0 : i32
    %46 = arith.cmpi ne, %45, %c0_i32_32 : i32
    scf.if %46 {
      %c0_33 = arith.constant 0 : index
      %c0_34 = arith.constant 0 : index
      %47 = vector.load %arg15[%c0_33, %c0_34] : memref<128x256xf32, #tpu.memory_space<vmem>>, vector<128x256xf32>
      %48 = tpu.transpose %47, [1, 0] : vector<128x256xf32> -> vector<256x128xf32>
      %c0_35 = arith.constant 0 : index
      %c0_36 = arith.constant 0 : index
      %49 = vector.load %arg6[%c0_35, %c0_36] : memref<256x16xbf16, #tpu.memory_space<vmem>>, vector<256x16xbf16>
      %c0_37 = arith.constant 0 : index
      %c0_38 = arith.constant 0 : index
      %50 = vector.load %arg16[%c0_37, %c0_38] : memref<16x128xf32, #tpu.memory_space<vmem>>, vector<16x128xf32>
      %51 = arith.truncf %50 : vector<16x128xf32> to vector<16x128xbf16>
      %cst_39 = arith.constant dense<0.000000e+00> : vector<256x128xf32>
      %52 = tpu.matmul %49, %51, %cst_39 {dimension_numbers = #tpu.dot_dimension_numbers<[1], [0], [0], [1], [0, 0, 1, 1], [], []>} : vector<256x16xbf16>, vector<16x128xbf16>, vector<256x128xf32> -> vector<256x128xf32>
      %c0_40 = arith.constant 0 : index
      %c0_41 = arith.constant 0 : index
      %53 = vector.load %arg10[%c0_40, %c0_41] : memref<256x128xf32, #tpu.memory_space<vmem>>, vector<256x128xf32>
      %54 = arith.addf %53, %48 : vector<256x128xf32>
      %c0_42 = arith.constant 0 : index
      %c0_43 = arith.constant 0 : index
      %55 = vector.load %arg10[%c0_42, %c0_43] : memref<256x128xf32, #tpu.memory_space<vmem>>, vector<256x128xf32>
      tpu.vector_store %arg10[%c0_42, %c0_43], %54 {strides = array<i32>} : memref<256x128xf32, #tpu.memory_space<vmem>>, vector<256x128xf32>,
      %c0_44 = arith.constant 0 : index
      %c0_45 = arith.constant 0 : index
      %56 = vector.load %arg12[%c0_44, %c0_45] : memref<256x128xf32, #tpu.memory_space<vmem>>, vector<256x128xf32>
      %57 = arith.addf %56, %52 : vector<256x128xf32>
      %c0_46 = arith.constant 0 : index
      %c0_47 = arith.constant 0 : index
      %58 = vector.load %arg12[%c0_46, %c0_47] : memref<256x128xf32, #tpu.memory_space<vmem>>, vector<256x128xf32>
      tpu.vector_store %arg12[%c0_46, %c0_47], %57 {strides = array<i32>} : memref<256x128xf32, #tpu.memory_space<vmem>>, vector<256x128xf32>,
      %59 = arith.truncf %48 : vector<256x128xf32> to vector<256x128xbf16>
      %c0_48 = arith.constant 0 : index
      %c0_49 = arith.constant 0 : index
      %60 = vector.load %arg14[%c0_48, %c0_49] : memref<256x128xbf16, #tpu.memory_space<vmem>>, vector<256x128xbf16>
      tpu.vector_store %arg14[%c0_48, %c0_49], %59 {strides = array<i32>} : memref<256x128xbf16, #tpu.memory_space<vmem>>, vector<256x128xbf16>,
    } else {
    }
    return
  }
  func.func @transform_0(%arg0: i32, %arg1: i32) -> (i32, i32) {
    %c0_i32 = arith.constant 0 : i32
    %c0_i32_0 = arith.constant 0 : i32
    return %arg1, %c0_i32 : i32, i32
  }
  func.func @transform_1(%arg0: i32, %arg1: i32) -> (i32, i32) {
    %c0_i32 = arith.constant 0 : i32
    %c0_i32_0 = arith.constant 0 : i32
    return %arg1, %c0_i32 : i32, i32
  }
  func.func @transform_2(%arg0: i32, %arg1: i32) -> (i32, i32) {
    %c0_i32 = arith.constant 0 : i32
    %c0_i32_0 = arith.constant 0 : i32
    return %c0_i32, %arg1 : i32, i32
  }
  func.func @transform_3(%arg0: i32, %arg1: i32) -> (i32, i32) {
    %c0_i32 = arith.constant 0 : i32
    %c0_i32_0 = arith.constant 0 : i32
    %c0_i32_1 = arith.constant 0 : i32
    return %c0_i32, %c0_i32_0 : i32, i32
  }
  func.func @transform_4(%arg0: i32, %arg1: i32) -> (i32, i32) {
    %c0_i32 = arith.constant 0 : i32
    %c0_i32_0 = arith.constant 0 : i32
    %c0_i32_1 = arith.constant 0 : i32
    return %c0_i32, %c0_i32_0 : i32, i32
  }
  func.func @transform_5(%arg0: i32, %arg1: i32) -> (i32, i32) {
    %c0_i32 = arith.constant 0 : i32
    %c0_i32_0 = arith.constant 0 : i32
    return %arg1, %c0_i32 : i32, i32
  }
  func.func @transform_6(%arg0: i32, %arg1: i32) -> (i32, i32) {
    %c0_i32 = arith.constant 0 : i32
    %c0_i32_0 = arith.constant 0 : i32
    %c0_i32_1 = arith.constant 0 : i32
    return %c0_i32, %c0_i32_0 : i32, i32
  }
  func.func @transform_7(%arg0: i32, %arg1: i32) -> (i32, i32) {
    %c0_i32 = arith.constant 0 : i32
    %c0_i32_0 = arith.constant 0 : i32
    %c0_i32_1 = arith.constant 0 : i32
    return %c0_i32, %c0_i32_0 : i32, i32
  }
  func.func @transform_8(%arg0: i32, %arg1: i32) -> (i32, i32) {
    %c0_i32 = arith.constant 0 : i32
    %c0_i32_0 = arith.constant 0 : i32
    %c0_i32_1 = arith.constant 0 : i32
    return %c0_i32, %c0_i32_0 : i32, i32
  }
  func.func @transform_9(%arg0: i32, %arg1: i32) -> (i32, i32) {
    %c0_i32 = arith.constant 0 : i32
    %c0_i32_0 = arith.constant 0 : i32
    %c0_i32_1 = arith.constant 0 : i32
    return %c0_i32, %c0_i32_0 : i32, i32
  }
  func.func @transform_10(%arg0: i32, %arg1: i32) -> (i32, i32) {
    %c0_i32 = arith.constant 0 : i32
    %c0_i32_0 = arith.constant 0 : i32
    %c0_i32_1 = arith.constant 0 : i32
    return %c0_i32, %c0_i32_0 : i32, i32
  }
}

module attributes {stable_mosaic.version = 11 : i64} {
  func.func @_loss_kernel(%arg0: i32, %arg1: memref<128x128xf32, #tpu.memory_space<vmem>>, %arg2: memref<16x128xf32, #tpu.memory_space<vmem>>, %arg3: memref<16x128xf32, #tpu.memory_space<vmem>>, %arg4: memref<16x128xf32, #tpu.memory_space<vmem>>, %arg5: memref<16x128xf32, #tpu.memory_space<vmem>>, %arg6: memref<16x128xf32, #tpu.memory_space<vmem>>, %arg7: memref<16x128xf32, #tpu.memory_space<vmem>>, %arg8: memref<1x128xf32, #tpu.memory_space<vmem>>, %arg9: memref<16x1xf32, #tpu.memory_space<vmem>>, %arg10: memref<16x1xf32, #tpu.memory_space<vmem>>, %arg11: memref<16x1xf32, #tpu.memory_space<vmem>>, %arg12: memref<16x1xf32, #tpu.memory_space<vmem>>) attributes {dimension_semantics = [#tpu.dimension_semantics<arbitrary>], iteration_bounds = array<i64: 4>, scalar_prefetch = 0 : i64, scratch_operands = 4 : i64, tpu.core_type = #tpu.core_type<tc>, window_params = [{transform_indices = @transform_0, window_bounds = array<i64: 128, 128>}, {pipeline_mode = #tpu.pipeline_mode<synchronous>, transform_indices = @transform_1, window_bounds = array<i64: 16, 128>}, {pipeline_mode = #tpu.pipeline_mode<synchronous>, transform_indices = @transform_2, window_bounds = array<i64: 16, 128>}, {pipeline_mode = #tpu.pipeline_mode<synchronous>, transform_indices = @transform_3, window_bounds = array<i64: 16, 128>}, {pipeline_mode = #tpu.pipeline_mode<synchronous>, transform_indices = @transform_4, window_bounds = array<i64: 16, 128>}, {pipeline_mode = #tpu.pipeline_mode<synchronous>, transform_indices = @transform_5, window_bounds = array<i64: 16, 128>}, {pipeline_mode = #tpu.pipeline_mode<synchronous>, transform_indices = @transform_6, window_bounds = array<i64: 16, 128>}, {pipeline_mode = #tpu.pipeline_mode<synchronous>, transform_indices = @transform_7, window_bounds = array<i64: 1, 128>}]} {
    %c0_i32 = arith.constant 0 : i32
    %0 = arith.cmpi eq, %arg0, %c0_i32 : i32
    %1 = arith.extui %0 : i1 to i32
    %c0_i32_0 = arith.constant 0 : i32
    %2 = arith.cmpi ne, %1, %c0_i32_0 : i32
    scf.if %2 {
      %cst_35 = arith.constant -1.000000e+30 : f32
      %55 = vector.broadcast %cst_35 : f32 to vector<16x1xf32>
      %c0_36 = arith.constant 0 : index
      %c0_37 = arith.constant 0 : index
      %56 = vector.load %arg9[%c0_36, %c0_37] : memref<16x1xf32, #tpu.memory_space<vmem>>, vector<16x1xf32>
      tpu.vector_store %arg9[%c0_36, %c0_37], %55 {strides = array<i32>} : memref<16x1xf32, #tpu.memory_space<vmem>>, vector<16x1xf32>,
      %cst_38 = arith.constant -1.000000e+30 : f32
      %57 = vector.broadcast %cst_38 : f32 to vector<16x1xf32>
      %c0_39 = arith.constant 0 : index
      %c0_40 = arith.constant 0 : index
      %58 = vector.load %arg11[%c0_39, %c0_40] : memref<16x1xf32, #tpu.memory_space<vmem>>, vector<16x1xf32>
      tpu.vector_store %arg11[%c0_39, %c0_40], %57 {strides = array<i32>} : memref<16x1xf32, #tpu.memory_space<vmem>>, vector<16x1xf32>,
      %cst_41 = arith.constant 0.000000e+00 : f32
      %59 = vector.broadcast %cst_41 : f32 to vector<16x1xf32>
      %c0_42 = arith.constant 0 : index
      %c0_43 = arith.constant 0 : index
      %60 = vector.load %arg10[%c0_42, %c0_43] : memref<16x1xf32, #tpu.memory_space<vmem>>, vector<16x1xf32>
      tpu.vector_store %arg10[%c0_42, %c0_43], %59 {strides = array<i32>} : memref<16x1xf32, #tpu.memory_space<vmem>>, vector<16x1xf32>,
      %cst_44 = arith.constant 0.000000e+00 : f32
      %61 = vector.broadcast %cst_44 : f32 to vector<16x1xf32>
      %c0_45 = arith.constant 0 : index
      %c0_46 = arith.constant 0 : index
      %62 = vector.load %arg12[%c0_45, %c0_46] : memref<16x1xf32, #tpu.memory_space<vmem>>, vector<16x1xf32>
      tpu.vector_store %arg12[%c0_45, %c0_46], %61 {strides = array<i32>} : memref<16x1xf32, #tpu.memory_space<vmem>>, vector<16x1xf32>,
      %cst_47 = arith.constant 0.000000e+00 : f32
      %63 = vector.broadcast %cst_47 : f32 to vector<1x128xf32>
      %c0_48 = arith.constant 0 : index
      %c0_49 = arith.constant 0 : index
      %64 = vector.load %arg8[%c0_48, %c0_49] : memref<1x128xf32, #tpu.memory_space<vmem>>, vector<1x128xf32>
      tpu.vector_store %arg8[%c0_48, %c0_49], %63 {strides = array<i32>} : memref<1x128xf32, #tpu.memory_space<vmem>>, vector<1x128xf32>,
    } else {
    }
    %c2_i32 = arith.constant 2 : i32
    %3 = arith.cmpi slt, %arg0, %c2_i32 : i32
    %c0 = arith.constant 0 : index
    %c0_1 = arith.constant 0 : index
    %4 = vector.load %arg2[%c0, %c0_1] : memref<16x128xf32, #tpu.memory_space<vmem>>, vector<16x128xf32>
    %c0_2 = arith.constant 0 : index
    %c0_3 = arith.constant 0 : index
    %5 = vector.load %arg3[%c0_2, %c0_3] : memref<16x128xf32, #tpu.memory_space<vmem>>, vector<16x128xf32>
    %6 = arith.select %3, %4, %5 : vector<16x128xf32>
    %c0_4 = arith.constant 0 : index
    %c0_5 = arith.constant 0 : index
    %7 = vector.load %arg1[%c0_4, %c0_5] : memref<128x128xf32, #tpu.memory_space<vmem>>, vector<128x128xf32>
    %cst = arith.constant dense<0.000000e+00> : vector<16x128xf32>
    %8 = tpu.matmul %6, %7, %cst {dimension_numbers = #tpu.dot_dimension_numbers<[1], [0], [0], [1], [0, 0, 1, 1], [], []>} : vector<16x128xf32>, vector<128x128xf32>, vector<16x128xf32> -> vector<16x128xf32>
    %cst_6 = arith.constant 5.000000e+00 : f32
    %9 = vector.broadcast %cst_6 : f32 to vector<16x128xf32>
    %10 = arith.mulf %8, %9 : vector<16x128xf32>
    %c128_i32 = arith.constant 128 : i32
    %11 = arith.muli %arg0, %c128_i32 : i32
    %12 = tpu.iota {dimensions = array<i32: 1>} : vector<1x128xi32>
    %13 = vector.broadcast %11 : i32 to vector<1x128xi32>
    %14 = arith.addi %13, %12 : vector<1x128xi32>
    %c200_i32 = arith.constant 200 : i32
    %c432_i32 = arith.constant 432 : i32
    %15 = arith.select %3, %c200_i32, %c432_i32 : i32
    %16 = vector.broadcast %15 : i32 to vector<1x128xi32>
    %17 = arith.cmpi slt, %14, %16 : vector<1x128xi32>
    %cst_7 = arith.constant -1.000000e+30 : f32
    %18 = vector.shape_cast %17 : vector<1x128xi1> to vector<1x128xi1>
    %19 = vector.broadcast %18 : vector<1x128xi1> to vector<16x128xi1>
    %20 = vector.broadcast %cst_7 : f32 to vector<16x128xf32>
    %21 = arith.select %19, %10, %20 : vector<16x128xi1>, vector<16x128xf32>
    %cst_8 = arith.constant dense<0xFF800000> : vector<16xf32>
    %22 = vector.multi_reduction <maximumf>, %21, %cst_8 [1] : vector<16x128xf32> to vector<16xf32>
    %23 = vector.shape_cast %22 : vector<16xf32> to vector<16x1xf32>
    %c0_9 = arith.constant 0 : index
    %c0_10 = arith.constant 0 : index
    %24 = vector.load %arg9[%c0_9, %c0_10] : memref<16x1xf32, #tpu.memory_space<vmem>>, vector<16x1xf32>
    %c0_11 = arith.constant 0 : index
    %c0_12 = arith.constant 0 : index
    %25 = vector.load %arg11[%c0_11, %c0_12] : memref<16x1xf32, #tpu.memory_space<vmem>>, vector<16x1xf32>
    %26 = arith.select %3, %24, %25 : vector<16x1xf32>
    %c0_13 = arith.constant 0 : index
    %c0_14 = arith.constant 0 : index
    %27 = vector.load %arg10[%c0_13, %c0_14] : memref<16x1xf32, #tpu.memory_space<vmem>>, vector<16x1xf32>
    %c0_15 = arith.constant 0 : index
    %c0_16 = arith.constant 0 : index
    %28 = vector.load %arg12[%c0_15, %c0_16] : memref<16x1xf32, #tpu.memory_space<vmem>>, vector<16x1xf32>
    %29 = arith.select %3, %27, %28 : vector<16x1xf32>
    %30 = arith.maximumf %26, %23 : vector<16x1xf32>
    %31 = arith.subf %26, %30 : vector<16x1xf32>
    %32 = math.exp %31 : vector<16x1xf32>
    %33 = arith.mulf %29, %32 : vector<16x1xf32>
    %34 = vector.broadcast %30 : vector<16x1xf32> to vector<16x128xf32>
    %35 = arith.subf %21, %34 : vector<16x128xf32>
    %36 = math.exp %35 : vector<16x128xf32>
    %cst_17 = arith.constant dense<0.000000e+00> : vector<16xf32>
    %37 = vector.multi_reduction <add>, %36, %cst_17 [1] : vector<16x128xf32> to vector<16xf32>
    %38 = vector.shape_cast %37 : vector<16xf32> to vector<16x1xf32>
    %39 = arith.addf %33, %38 : vector<16x1xf32>
    %c0_18 = arith.constant 0 : index
    %c0_19 = arith.constant 0 : index
    %40 = vector.load %arg9[%c0_18, %c0_19] : memref<16x1xf32, #tpu.memory_space<vmem>>, vector<16x1xf32>
    %41 = arith.select %3, %30, %40 : vector<16x1xf32>
    %c0_20 = arith.constant 0 : index
    %c0_21 = arith.constant 0 : index
    %42 = vector.load %arg9[%c0_20, %c0_21] : memref<16x1xf32, #tpu.memory_space<vmem>>, vector<16x1xf32>
    tpu.vector_store %arg9[%c0_20, %c0_21], %41 {strides = array<i32>} : memref<16x1xf32, #tpu.memory_space<vmem>>, vector<16x1xf32>,
    %c0_22 = arith.constant 0 : index
    %c0_23 = arith.constant 0 : index
    %43 = vector.load %arg10[%c0_22, %c0_23] : memref<16x1xf32, #tpu.memory_space<vmem>>, vector<16x1xf32>
    %44 = arith.select %3, %39, %43 : vector<16x1xf32>
    %c0_24 = arith.constant 0 : index
    %c0_25 = arith.constant 0 : index
    %45 = vector.load %arg10[%c0_24, %c0_25] : memref<16x1xf32, #tpu.memory_space<vmem>>, vector<16x1xf32>
    tpu.vector_store %arg10[%c0_24, %c0_25], %44 {strides = array<i32>} : memref<16x1xf32, #tpu.memory_space<vmem>>, vector<16x1xf32>,
    %c0_26 = arith.constant 0 : index
    %c0_27 = arith.constant 0 : index
    %46 = vector.load %arg11[%c0_26, %c0_27] : memref<16x1xf32, #tpu.memory_space<vmem>>, vector<16x1xf32>
    %47 = arith.select %3, %46, %30 : vector<16x1xf32>
    %c0_28 = arith.constant 0 : index
    %c0_29 = arith.constant 0 : index
    %48 = vector.load %arg11[%c0_28, %c0_29] : memref<16x1xf32, #tpu.memory_space<vmem>>, vector<16x1xf32>
    tpu.vector_store %arg11[%c0_28, %c0_29], %47 {strides = array<i32>} : memref<16x1xf32, #tpu.memory_space<vmem>>, vector<16x1xf32>,
    %c0_30 = arith.constant 0 : index
    %c0_31 = arith.constant 0 : index
    %49 = vector.load %arg12[%c0_30, %c0_31] : memref<16x1xf32, #tpu.memory_space<vmem>>, vector<16x1xf32>
    %50 = arith.select %3, %49, %39 : vector<16x1xf32>
    %c0_32 = arith.constant 0 : index
    %c0_33 = arith.constant 0 : index
    %51 = vector.load %arg12[%c0_32, %c0_33] : memref<16x1xf32, #tpu.memory_space<vmem>>, vector<16x1xf32>
    tpu.vector_store %arg12[%c0_32, %c0_33], %50 {strides = array<i32>} : memref<16x1xf32, #tpu.memory_space<vmem>>, vector<16x1xf32>,
    %c3_i32 = arith.constant 3 : i32
    %52 = arith.cmpi eq, %arg0, %c3_i32 : i32
    %53 = arith.extui %52 : i1 to i32
    %c0_i32_34 = arith.constant 0 : i32
    %54 = arith.cmpi ne, %53, %c0_i32_34 : i32
    scf.if %54 {
      %c0_35 = arith.constant 0 : index
      %c0_36 = arith.constant 0 : index
      %55 = vector.load %arg9[%c0_35, %c0_36] : memref<16x1xf32, #tpu.memory_space<vmem>>, vector<16x1xf32>
      %c0_37 = arith.constant 0 : index
      %c0_38 = arith.constant 0 : index
      %56 = vector.load %arg10[%c0_37, %c0_38] : memref<16x1xf32, #tpu.memory_space<vmem>>, vector<16x1xf32>
      %cst_39 = arith.constant 0.000000e+00 : f32
      %57 = vector.broadcast %cst_39 : f32 to vector<16x1xf32>
      %58 = arith.maximumf %55, %57 : vector<16x1xf32>
      %59 = arith.subf %55, %58 : vector<16x1xf32>
      %60 = math.exp %59 : vector<16x1xf32>
      %61 = arith.mulf %56, %60 : vector<16x1xf32>
      %cst_40 = arith.constant 0.000000e+00 : f32
      %62 = vector.broadcast %cst_40 : f32 to vector<16x1xf32>
      %63 = arith.subf %62, %58 : vector<16x1xf32>
      %64 = math.exp %63 : vector<16x1xf32>
      %cst_41 = arith.constant 9.99999993E-9 : f32
      %65 = vector.broadcast %cst_41 : f32 to vector<16x1xf32>
      %66 = arith.mulf %65, %64 : vector<16x1xf32>
      %67 = arith.addf %61, %66 : vector<16x1xf32>
      %68 = math.log %67 : vector<16x1xf32>
      %69 = arith.addf %58, %68 : vector<16x1xf32>
      %70 = vector.shape_cast %69 : vector<16x1xf32> to vector<1x16x1xf32>
      %cst_42 = arith.constant dense<0.000000e+00> : vector<1xf32>
      %71 = vector.multi_reduction <add>, %70, %cst_42 [1, 2] : vector<1x16x1xf32> to vector<1xf32>
      %72 = vector.shape_cast %71 : vector<1xf32> to vector<1x1x1xf32>
      %73 = vector.extract %72[0, 0, 0] : f32 from vector<1x1x1xf32>
      %c0_43 = arith.constant 0 : index
      %c0_44 = arith.constant 0 : index
      %74 = vector.load %arg11[%c0_43, %c0_44] : memref<16x1xf32, #tpu.memory_space<vmem>>, vector<16x1xf32>
      %c0_45 = arith.constant 0 : index
      %c0_46 = arith.constant 0 : index
      %75 = vector.load %arg12[%c0_45, %c0_46] : memref<16x1xf32, #tpu.memory_space<vmem>>, vector<16x1xf32>
      %cst_47 = arith.constant 0.000000e+00 : f32
      %76 = vector.broadcast %cst_47 : f32 to vector<16x1xf32>
      %77 = arith.maximumf %74, %76 : vector<16x1xf32>
      %78 = arith.subf %74, %77 : vector<16x1xf32>
      %79 = math.exp %78 : vector<16x1xf32>
      %80 = arith.mulf %75, %79 : vector<16x1xf32>
      %cst_48 = arith.constant 0.000000e+00 : f32
      %81 = vector.broadcast %cst_48 : f32 to vector<16x1xf32>
      %82 = arith.subf %81, %77 : vector<16x1xf32>
      %83 = math.exp %82 : vector<16x1xf32>
      %cst_49 = arith.constant 9.99999993E-9 : f32
      %84 = vector.broadcast %cst_49 : f32 to vector<16x1xf32>
      %85 = arith.mulf %84, %83 : vector<16x1xf32>
      %86 = arith.addf %80, %85 : vector<16x1xf32>
      %87 = math.log %86 : vector<16x1xf32>
      %88 = arith.addf %77, %87 : vector<16x1xf32>
      %89 = vector.shape_cast %88 : vector<16x1xf32> to vector<1x16x1xf32>
      %cst_50 = arith.constant dense<0.000000e+00> : vector<1xf32>
      %90 = vector.multi_reduction <add>, %89, %cst_50 [1, 2] : vector<1x16x1xf32> to vector<1xf32>
      %91 = vector.shape_cast %90 : vector<1xf32> to vector<1x1x1xf32>
      %92 = vector.extract %91[0, 0, 0] : f32 from vector<1x1x1xf32>
      %93 = arith.addf %73, %92 : f32
      %cst_51 = arith.constant 6.250000e-02 : f32
      %94 = arith.mulf %93, %cst_51 : f32
      %c0_52 = arith.constant 0 : index
      %c0_53 = arith.constant 0 : index
      %95 = vector.load %arg2[%c0_52, %c0_53] : memref<16x128xf32, #tpu.memory_space<vmem>>, vector<16x128xf32>
      %c0_54 = arith.constant 0 : index
      %c0_55 = arith.constant 0 : index
      %96 = vector.load %arg3[%c0_54, %c0_55] : memref<16x128xf32, #tpu.memory_space<vmem>>, vector<16x128xf32>
      %c0_56 = arith.constant 0 : index
      %c0_57 = arith.constant 0 : index
      %97 = vector.load %arg4[%c0_56, %c0_57] : memref<16x128xf32, #tpu.memory_space<vmem>>, vector<16x128xf32>
      %c0_58 = arith.constant 0 : index
      %c0_59 = arith.constant 0 : index
      %98 = vector.load %arg5[%c0_58, %c0_59] : memref<16x128xf32, #tpu.memory_space<vmem>>, vector<16x128xf32>
      %99 = arith.mulf %95, %97 : vector<16x128xf32>
      %cst_60 = arith.constant dense<0.000000e+00> : vector<16xf32>
      %100 = vector.multi_reduction <add>, %99, %cst_60 [1] : vector<16x128xf32> to vector<16xf32>
      %101 = vector.shape_cast %100 : vector<16xf32> to vector<16x1xf32>
      %cst_61 = arith.constant 5.000000e+00 : f32
      %102 = vector.broadcast %cst_61 : f32 to vector<16x1xf32>
      %103 = arith.mulf %101, %102 : vector<16x1xf32>
      %cst_62 = arith.constant -5.000000e+00 : f32
      %cst_63 = arith.constant 5.000000e+00 : f32
      %104 = vector.broadcast %cst_62 : f32 to vector<16x1xf32>
      %105 = arith.maximumf %104, %103 : vector<16x1xf32>
      %106 = vector.broadcast %cst_63 : f32 to vector<16x1xf32>
      %107 = arith.minimumf %106, %105 : vector<16x1xf32>
      %108 = arith.mulf %96, %98 : vector<16x128xf32>
      %cst_64 = arith.constant dense<0.000000e+00> : vector<16xf32>
      %109 = vector.multi_reduction <add>, %108, %cst_64 [1] : vector<16x128xf32> to vector<16xf32>
      %110 = vector.shape_cast %109 : vector<16xf32> to vector<16x1xf32>
      %cst_65 = arith.constant 5.000000e+00 : f32
      %111 = vector.broadcast %cst_65 : f32 to vector<16x1xf32>
      %112 = arith.mulf %110, %111 : vector<16x1xf32>
      %cst_66 = arith.constant -5.000000e+00 : f32
      %cst_67 = arith.constant 5.000000e+00 : f32
      %113 = vector.broadcast %cst_66 : f32 to vector<16x1xf32>
      %114 = arith.maximumf %113, %112 : vector<16x1xf32>
      %115 = vector.broadcast %cst_67 : f32 to vector<16x1xf32>
      %116 = arith.minimumf %115, %114 : vector<16x1xf32>
      %117 = vector.shape_cast %107 : vector<16x1xf32> to vector<1x16x1xf32>
      %cst_68 = arith.constant dense<0.000000e+00> : vector<1xf32>
      %118 = vector.multi_reduction <add>, %117, %cst_68 [1, 2] : vector<1x16x1xf32> to vector<1xf32>
      %119 = vector.shape_cast %118 : vector<1xf32> to vector<1x1x1xf32>
      %120 = vector.extract %119[0, 0, 0] : f32 from vector<1x1x1xf32>
      %121 = vector.shape_cast %116 : vector<16x1xf32> to vector<1x16x1xf32>
      %cst_69 = arith.constant dense<0.000000e+00> : vector<1xf32>
      %122 = vector.multi_reduction <add>, %121, %cst_69 [1, 2] : vector<1x16x1xf32> to vector<1xf32>
      %123 = vector.shape_cast %122 : vector<1xf32> to vector<1x1x1xf32>
      %124 = vector.extract %123[0, 0, 0] : f32 from vector<1x1x1xf32>
      %125 = arith.addf %120, %124 : f32
      %cst_70 = arith.constant 6.250000e-02 : f32
      %126 = arith.mulf %125, %cst_70 : f32
      %127 = arith.subf %94, %126 : f32
      %c0_71 = arith.constant 0 : index
      %c0_72 = arith.constant 0 : index
      %128 = vector.load %arg6[%c0_71, %c0_72] : memref<16x128xf32, #tpu.memory_space<vmem>>, vector<16x128xf32>
      %c0_73 = arith.constant 0 : index
      %c0_74 = arith.constant 0 : index
      %129 = vector.load %arg7[%c0_73, %c0_74] : memref<16x128xf32, #tpu.memory_space<vmem>>, vector<16x128xf32>
      %130 = arith.subf %128, %129 : vector<16x128xf32>
      %131 = arith.mulf %97, %130 : vector<16x128xf32>
      %cst_75 = arith.constant dense<0.000000e+00> : vector<16xf32>
      %132 = vector.multi_reduction <add>, %131, %cst_75 [1] : vector<16x128xf32> to vector<16xf32>
      %133 = vector.shape_cast %132 : vector<16xf32> to vector<16x1xf32>
      %cst_76 = arith.constant 0.000000e+00 : f32
      %134 = vector.broadcast %cst_76 : f32 to vector<16x1xf32>
      %135 = arith.subf %134, %133 : vector<16x1xf32>
      %cst_77 = arith.constant 0.000000e+00 : f32
      %136 = vector.broadcast %cst_77 : f32 to vector<16x1xf32>
      %137 = arith.maximumf %135, %136 : vector<16x1xf32>
      %138 = math.absf %135 : vector<16x1xf32>
      %cst_78 = arith.constant 0.000000e+00 : f32
      %139 = vector.broadcast %cst_78 : f32 to vector<16x1xf32>
      %140 = arith.subf %139, %138 : vector<16x1xf32>
      %141 = math.exp %140 : vector<16x1xf32>
      %cst_79 = arith.constant 1.000000e+00 : f32
      %142 = vector.broadcast %cst_79 : f32 to vector<16x1xf32>
      %143 = arith.addf %142, %141 : vector<16x1xf32>
      %144 = math.log %143 : vector<16x1xf32>
      %145 = arith.addf %137, %144 : vector<16x1xf32>
      %146 = vector.shape_cast %145 : vector<16x1xf32> to vector<1x16x1xf32>
      %cst_80 = arith.constant dense<0.000000e+00> : vector<1xf32>
      %147 = vector.multi_reduction <add>, %146, %cst_80 [1, 2] : vector<1x16x1xf32> to vector<1xf32>
      %148 = vector.shape_cast %147 : vector<1xf32> to vector<1x1x1xf32>
      %149 = vector.extract %148[0, 0, 0] : f32 from vector<1x1x1xf32>
      %cst_81 = arith.constant 6.250000e-02 : f32
      %150 = arith.mulf %149, %cst_81 : f32
      %151 = tpu.iota {dimensions = array<i32: 1>} : vector<1x128xi32>
      %c0_i32_82 = arith.constant 0 : i32
      %152 = vector.broadcast %c0_i32_82 : i32 to vector<1x128xi32>
      %153 = arith.cmpi eq, %151, %152 : vector<1x128xi32>
      %cst_83 = arith.constant 0.000000e+00 : f32
      %154 = vector.broadcast %127 : f32 to vector<1x128xf32>
      %155 = vector.broadcast %cst_83 : f32 to vector<1x128xf32>
      %156 = arith.select %153, %154, %155 : vector<1x128xi1>, vector<1x128xf32>
      %c1_i32 = arith.constant 1 : i32
      %157 = vector.broadcast %c1_i32 : i32 to vector<1x128xi32>
      %158 = arith.cmpi eq, %151, %157 : vector<1x128xi32>
      %159 = vector.broadcast %150 : f32 to vector<1x128xf32>
      %160 = arith.select %158, %159, %156 : vector<1x128xi1>, vector<1x128xf32>
      %c0_84 = arith.constant 0 : index
      %c0_85 = arith.constant 0 : index
      %161 = vector.load %arg8[%c0_84, %c0_85] : memref<1x128xf32, #tpu.memory_space<vmem>>, vector<1x128xf32>
      tpu.vector_store %arg8[%c0_84, %c0_85], %160 {strides = array<i32>} : memref<1x128xf32, #tpu.memory_space<vmem>>, vector<1x128xf32>,
    } else {
    }
    return
  }
  func.func @transform_0(%arg0: i32) -> (i32, i32) {
    %c0_i32 = arith.constant 0 : i32
    %c0_i32_0 = arith.constant 0 : i32
    return %c0_i32, %arg0 : i32, i32
  }
  func.func @transform_1(%arg0: i32) -> (i32, i32) {
    %c0_i32 = arith.constant 0 : i32
    %c0_i32_0 = arith.constant 0 : i32
    %c0_i32_1 = arith.constant 0 : i32
    return %c0_i32, %c0_i32_0 : i32, i32
  }
  func.func @transform_2(%arg0: i32) -> (i32, i32) {
    %c0_i32 = arith.constant 0 : i32
    %c0_i32_0 = arith.constant 0 : i32
    %c0_i32_1 = arith.constant 0 : i32
    return %c0_i32, %c0_i32_0 : i32, i32
  }
  func.func @transform_3(%arg0: i32) -> (i32, i32) {
    %c0_i32 = arith.constant 0 : i32
    %c0_i32_0 = arith.constant 0 : i32
    %c0_i32_1 = arith.constant 0 : i32
    return %c0_i32, %c0_i32_0 : i32, i32
  }
  func.func @transform_4(%arg0: i32) -> (i32, i32) {
    %c0_i32 = arith.constant 0 : i32
    %c0_i32_0 = arith.constant 0 : i32
    %c0_i32_1 = arith.constant 0 : i32
    return %c0_i32, %c0_i32_0 : i32, i32
  }
  func.func @transform_5(%arg0: i32) -> (i32, i32) {
    %c0_i32 = arith.constant 0 : i32
    %c0_i32_0 = arith.constant 0 : i32
    %c0_i32_1 = arith.constant 0 : i32
    return %c0_i32, %c0_i32_0 : i32, i32
  }
  func.func @transform_6(%arg0: i32) -> (i32, i32) {
    %c0_i32 = arith.constant 0 : i32
    %c0_i32_0 = arith.constant 0 : i32
    %c0_i32_1 = arith.constant 0 : i32
    return %c0_i32, %c0_i32_0 : i32, i32
  }
  func.func @transform_7(%arg0: i32) -> (i32, i32) {
    %c0_i32 = arith.constant 0 : i32
    %c0_i32_0 = arith.constant 0 : i32
    %c0_i32_1 = arith.constant 0 : i32
    return %c0_i32, %c0_i32_0 : i32, i32
  }
}

</mosaic_0001>

<llo_original>
// kernel: lightgcl_forward.3
$region0: #{lightgcl_forward.3}
  #allocation0 [shape = 'u32[]', space=smem, size = 0x4, offset = 0x4, fixed_abs, tag = 'smem constant byte address 0x4 - core index']
  #allocation1 [shape = 'u32[72,128]{1,0:T(1,128)}', space=vmem, size = 0x9000, scoped, tag = 'internal scratch']
  #allocation2 [shape = 'f32[16,1]{1,0:T(8,128)}', space=vmem, size = 0x2000, scoped, tag = 'scratch operand']
  #allocation3 [shape = 'f32[16,1]{1,0:T(8,128)}', space=vmem, size = 0x2000, scoped, tag = 'scratch operand']
  #allocation4 [shape = 'f32[16,1]{1,0:T(8,128)}', space=vmem, size = 0x2000, scoped, tag = 'scratch operand']
  #allocation5 [shape = 'f32[16,1]{1,0:T(8,128)}', space=vmem, size = 0x2000, scoped, tag = 'scratch operand']
  %s0 = inlined_call_operand.vmem [shape: f32[128,512], index: 0, kind: input, shape index: {}]
  %s1 = inlined_call_operand.vmem [shape: f32[16,128], index: 1, kind: input, shape index: {}]
  %s2 = inlined_call_operand.vmem [shape: f32[16,128], index: 2, kind: input, shape index: {}]
  %s3 = inlined_call_operand.vmem [shape: f32[16,128], index: 3, kind: input, shape index: {}]
  %s4 = inlined_call_operand.vmem [shape: f32[16,128], index: 4, kind: input, shape index: {}]
  %s5 = inlined_call_operand.vmem [shape: f32[16,128], index: 5, kind: input, shape index: {}]
  %s6 = inlined_call_operand.vmem [shape: f32[16,128], index: 6, kind: input, shape index: {}]
  %s7 = inlined_call_operand.vmem [shape: f32[1,128], index: 7, kind: output, shape index: {}]
  %s8 = sld [smem:[#allocation0]]
  $region107: #{lightgcl_forward.3} parent=0
    _
  %s10 = ssub.s32 1, %s8
  %s11 = scalar_select 0, %s10, %s8
  $region1: #{lightgcl_forward.3} parent=0
    #allocation6 [shape = 'u8[131072]{0}', space=vmem, size = 0x20000, scoped, tag = 'input window, operand 0']
    loop: start=0, step=1, limit=6
    $region2: #{lightgcl_forward.3} parent=1 // loop_pre_header
      _
    $region3: #{lightgcl_forward.3} parent=1 // loop_header
      %s13 = sphi 0, %s17
      %p14 = scmp.ge.s32.totalorder %s13, 6
      %s23 = sphi 0, %s25
      %s26 = sphi 0, %s23
      %s27 = sphi 0, %s26
      %s43 = sphi 0, %s27
      %s47 = sphi 0, %s47
      %s49 = sphi 0, %s47
      %s50 = sphi 0, %s49
      %s64 = sphi 0, %s50
      %s68 = sphi 0, %s68
      %s70 = sphi 0, %s68
      %s71 = sphi 0, %s70
      %s85 = sphi 0, %s71
      %s89 = sphi 0, %s89
      %s91 = sphi 0, %s89
      %s92 = sphi 0, %s91
      %s106 = sphi 0, %s92
      %s110 = sphi 0, %s110
      %s112 = sphi 0, %s110
      %s113 = sphi 0, %s112
      %s127 = sphi 0, %s113
      %s131 = sphi 0, %s131
      %s133 = sphi 0, %s131
      %s134 = sphi 0, %s133
      %s148 = sphi 0, %s134
      %s152 = sphi 0, %s152
      %s154 = sphi 0, %s152
      %s155 = sphi 0, %s154
      %s169 = sphi 0, %s155
      %s173 = sphi 0, %s173
      %s175 = sphi 0, %s173
      %s176 = sphi 0, %s175
      %s190 = sphi 0, %s176
    $region4: #{lightgcl_forward.3} parent=1 // loop_header_branch
      %16 = sbr.rel (%p14) target = $region8
    $region5: #{lightgcl_forward.3} parent=1 // loop_body
      %s18 = ssub.s32 %s13, 1
      %s19 = ssub.s32 %s13, 2
      %s20 = sadd.s32 %s13, 1
      %s21 = ssub.s32 %s13, %s20
      %p22 = scmp.eq.s32.totalorder %s21, 0
      %s24 = sadd.s32 %s23, 1
      %s25 = scalar_select %p22, %s23, %s24
      %p28 = pneg %p22
      %p29 = scmp.eq.s32.totalorder %s13, 3
      %p30 = por %p28, %p29
      %p31 = scmp.ne.s32.totalorder %s23, %s26
      %p32 = scmp.eq.s32.totalorder %s13, 0
      %p33 = por %p31, %p32
      %p34 = scmp.ne.s32.totalorder %s23, %s26
      %p35 = scmp.eq.s32.totalorder %s18, 3
      %p36 = por %p34, %p35
      %p37 = scmp.ne.s32.totalorder %s26, %s27
      %p38 = scmp.eq.s32.totalorder %s18, 0
      %p39 = por %p37, %p38
      %p40 = scmp.ne.s32.totalorder %s26, %s27
      %p41 = scmp.eq.s32.totalorder %s19, 3
      %p42 = por %p40, %p41
      %p44 = scmp.ne.s32.totalorder %s27, %s43
      %p45 = scmp.eq.s32.totalorder %s19, 0
      %p46 = por %p44, %p45
      %s48 = sadd.s32 %s47, 1
      %p51 = scmp.eq.s32.totalorder %s13, 3
      %p52 = scmp.ne.s32.totalorder %s47, %s49
      %p53 = scmp.eq.s32.totalorder %s13, 0
      %p54 = por %p52, %p53
      %p55 = scmp.ne.s32.totalorder %s47, %s49
      %p56 = scmp.eq.s32.totalorder %s18, 3
      %p57 = por %p55, %p56
      %p58 = scmp.ne.s32.totalorder %s49, %s50
      %p59 = scmp.eq.s32.totalorder %s18, 0
      %p60 = por %p58, %p59
      %p61 = scmp.ne.s32.totalorder %s49, %s50
      %p62 = scmp.eq.s32.totalorder %s19, 3
      %p63 = por %p61, %p62
      %p65 = scmp.ne.s32.totalorder %s50, %s64
      %p66 = scmp.eq.s32.totalorder %s19, 0
      %p67 = por %p65, %p66
      %s69 = sadd.s32 %s68, 1
      %p72 = scmp.eq.s32.totalorder %s13, 3
      %p73 = scmp.ne.s32.totalorder %s68, %s70
      %p74 = scmp.eq.s32.totalorder %s13, 0
      %p75 = por %p73, %p74
      %p76 = scmp.ne.s32.totalorder %s68, %s70
      %p77 = scmp.eq.s32.totalorder %s18, 3
      %p78 = por %p76, %p77
      %p79 = scmp.ne.s32.totalorder %s70, %s71
      %p80 = scmp.eq.s32.totalorder %s18, 0
      %p81 = por %p79, %p80
      %p82 = scmp.ne.s32.totalorder %s70, %s71
      %p83 = scmp.eq.s32.totalorder %s19, 3
      %p84 = por %p82, %p83
      %p86 = scmp.ne.s32.totalorder %s71, %s85
      %p87 = scmp.eq.s32.totalorder %s19, 0
      %p88 = por %p86, %p87
      %s90 = sadd.s32 %s89, 1
      %p93 = scmp.eq.s32.totalorder %s13, 3
      %p94 = scmp.ne.s32.totalorder %s89, %s91
      %p95 = scmp.eq.s32.totalorder %s13, 0
      %p96 = por %p94, %p95
      %p97 = scmp.ne.s32.totalorder %s89, %s91
      %p98 = scmp.eq.s32.totalorder %s18, 3
      %p99 = por %p97, %p98
      %p100 = scmp.ne.s32.totalorder %s91, %s92
      %p101 = scmp.eq.s32.totalorder %s18, 0
      %p102 = por %p100, %p101
      %p103 = scmp.ne.s32.totalorder %s91, %s92
      %p104 = scmp.eq.s32.totalorder %s19, 3
      %p105 = por %p103, %p104
      %p107 = scmp.ne.s32.totalorder %s92, %s106
      %p108 = scmp.eq.s32.totalorder %s19, 0
      %p109 = por %p107, %p108
      %s111 = sadd.s32 %s110, 1
      %p114 = scmp.eq.s32.totalorder %s13, 3
      %p115 = scmp.ne.s32.totalorder %s110, %s112
      %p116 = scmp.eq.s32.totalorder %s13, 0
      %p117 = por %p115, %p116
      %p118 = scmp.ne.s32.totalorder %s110, %s112
      %p119 = scmp.eq.s32.totalorder %s18, 3
      %p120 = por %p118, %p119
      %p121 = scmp.ne.s32.totalorder %s112, %s113
      %p122 = scmp.eq.s32.totalorder %s18, 0
      %p123 = por %p121, %p122
      %p124 = scmp.ne.s32.totalorder %s112, %s113
      %p125 = scmp.eq.s32.totalorder %s19, 3
      %p126 = por %p124, %p125
      %p128 = scmp.ne.s32.totalorder %s113, %s127
      %p129 = scmp.eq.s32.totalorder %s19, 0
      %p130 = por %p128, %p129
      %s132 = sadd.s32 %s131, 1
      %p135 = scmp.eq.s32.totalorder %s13, 3
      %p136 = scmp.ne.s32.totalorder %s131, %s133
      %p137 = scmp.eq.s32.totalorder %s13, 0
      %p138 = por %p136, %p137
      %p139 = scmp.ne.s32.totalorder %s131, %s133
      %p140 = scmp.eq.s32.totalorder %s18, 3
      %p141 = por %p139, %p140
      %p142 = scmp.ne.s32.totalorder %s133, %s134
      %p143 = scmp.eq.s32.totalorder %s18, 0
      %p144 = por %p142, %p143
      %p145 = scmp.ne.s32.totalorder %s133, %s134
      %p146 = scmp.eq.s32.totalorder %s19, 3
      %p147 = por %p145, %p146
      %p149 = scmp.ne.s32.totalorder %s134, %s148
      %p150 = scmp.eq.s32.totalorder %s19, 0
      %p151 = por %p149, %p150
      %s153 = sadd.s32 %s152, 1
      %p156 = scmp.eq.s32.totalorder %s13, 3
      %p157 = scmp.ne.s32.totalorder %s152, %s154
      %p158 = scmp.eq.s32.totalorder %s13, 0
      %p159 = por %p157, %p158
      %p160 = scmp.ne.s32.totalorder %s152, %s154
      %p161 = scmp.eq.s32.totalorder %s18, 3
      %p162 = por %p160, %p161
      %p163 = scmp.ne.s32.totalorder %s154, %s155
      %p164 = scmp.eq.s32.totalorder %s18, 0
      %p165 = por %p163, %p164
      %p166 = scmp.ne.s32.totalorder %s154, %s155
      %p167 = scmp.eq.s32.totalorder %s19, 3
      %p168 = por %p166, %p167
      %p170 = scmp.ne.s32.totalorder %s155, %s169
      %p171 = scmp.eq.s32.totalorder %s19, 0
      %p172 = por %p170, %p171
      %s174 = sadd.s32 %s173, 1
      %p177 = scmp.eq.s32.totalorder %s13, 3
      %p178 = scmp.ne.s32.totalorder %s173, %s175
      %p179 = scmp.eq.s32.totalorder %s13, 0
      %p180 = por %p178, %p179
      %p181 = scmp.ne.s32.totalorder %s173, %s175
      %p182 = scmp.eq.s32.totalorder %s18, 3
      %p183 = por %p181, %p182
      %p184 = scmp.ne.s32.totalorder %s175, %s176
      %p185 = scmp.eq.s32.totalorder %s18, 0
      %p186 = por %p184, %p185
      %p187 = scmp.ne.s32.totalorder %s175, %s176
      %p188 = scmp.eq.s32.totalorder %s19, 3
      %p189 = por %p187, %p188
      %p191 = scmp.ne.s32.totalorder %s176, %s190
      %p192 = scmp.eq.s32.totalorder %s19, 0
      %p193 = por %p191, %p192
      %p194 = scmp.le.s32.totalorder 1, %s13
      %p195 = scmp.lt.s32.totalorder %s13, 5
      %p196 = pnand %p194, %p195
      %p197 = pneg %p196
      // Predicated region
      $region9: #{lightgcl_forward.3} parent=5 // pred_check
        _
      $region10: #{lightgcl_forward.3} parent=5 // pred_check_branch
        %199 = sbr.rel (%p196) target = $region12
      $region11: #{lightgcl_forward.3} parent=5 // pred_region
        %s200 = ssub.s32 %s13, 1
        // Predicated region
        $region13: #{lightgcl_forward.3} parent=11 // pred_check
          %p201 = pneg %p60
        $region14: #{lightgcl_forward.3} parent=11 // pred_check_branch
          %203 = sbr.rel (%p201) target = $region16
        $region15: #{lightgcl_forward.3} parent=11 // pred_region
          _
        $region16: #{lightgcl_forward.3} parent=11 // pred_fallthru
          _
        // Predicated region
        $region17: #{lightgcl_forward.3} parent=11 // pred_check
          %p204 = pneg %p81
        $region18: #{lightgcl_forward.3} parent=11 // pred_check_branch
          %206 = sbr.rel (%p204) target = $region20
        $region19: #{lightgcl_forward.3} parent=11 // pred_region
          _
        $region20: #{lightgcl_forward.3} parent=11 // pred_fallthru
          _
        // Predicated region
        $region21: #{lightgcl_forward.3} parent=11 // pred_check
          %p207 = pneg %p102
        $region22: #{lightgcl_forward.3} parent=11 // pred_check_branch
          %209 = sbr.rel (%p207) target = $region24
        $region23: #{lightgcl_forward.3} parent=11 // pred_region
          _
        $region24: #{lightgcl_forward.3} parent=11 // pred_fallthru
          _
        // Predicated region
        $region25: #{lightgcl_forward.3} parent=11 // pred_check
          %p210 = pneg %p123
        $region26: #{lightgcl_forward.3} parent=11 // pred_check_branch
          %212 = sbr.rel (%p210) target = $region28
        $region27: #{lightgcl_forward.3} parent=11 // pred_region
          _
        $region28: #{lightgcl_forward.3} parent=11 // pred_fallthru
          _
        // Predicated region
        $region29: #{lightgcl_forward.3} parent=11 // pred_check
          %p213 = pneg %p144
        $region30: #{lightgcl_forward.3} parent=11 // pred_check_branch
          %215 = sbr.rel (%p213) target = $region32
        $region31: #{lightgcl_forward.3} parent=11 // pred_region
          _
        $region32: #{lightgcl_forward.3} parent=11 // pred_fallthru
          _
        // Predicated region
        $region33: #{lightgcl_forward.3} parent=11 // pred_check
          %p216 = pneg %p165
        $region34: #{lightgcl_forward.3} parent=11 // pred_check_branch
          %218 = sbr.rel (%p216) target = $region36
        $region35: #{lightgcl_forward.3} parent=11 // pred_region
          _
        $region36: #{lightgcl_forward.3} parent=11 // pred_fallthru
          _
      $region12: #{lightgcl_forward.3} parent=5 // pred_fallthru
        _
      %p219 = scmp.lt.s32.totalorder %s13, 4
      // Predicated region
      $region37: #{lightgcl_forward.3} parent=5 // pred_check
        %p220 = pneg %p219
      $region38: #{lightgcl_forward.3} parent=5 // pred_check_branch
        %222 = sbr.rel (%p220) target = $region40
      $region39: #{lightgcl_forward.3} parent=5 // pred_region
        // Predicated region
        $region41: #{lightgcl_forward.3} parent=39 // pred_check
          %p223 = pneg %p33
        $region42: #{lightgcl_forward.3} parent=39 // pred_check_branch
          %225 = sbr.rel (%p223) target = $region44
        $region43: #{lightgcl_forward.3} parent=39 // pred_region
          %s226 = sand.u32 %s23, 1
          %s227 = sand.u32 %s23, 1
          %s228 = smul.addr %s227, 128
          %s229 = scalar_lea.vmem [#allocation6], %s228
          %s230 = smul.addr %s13, 8
          %s231 = scalar_lea.vmem %s0, %s230
          // Predicated region
          $region45: #{lightgcl_forward.3} parent=43 // pred_check
            _
          $region46: #{lightgcl_forward.3} parent=43 // pred_check_branch
            %233 = sbr.rel (0) target = $region48
          $region47: #{lightgcl_forward.3} parent=43 // pred_region
            // Predicated region
            $region49: #{lightgcl_forward.3} parent=47 // pred_check
              _
            $region50: #{lightgcl_forward.3} parent=47 // pred_check_branch
              %235 = sbr.rel (0) target = $region52
            $region51: #{lightgcl_forward.3} parent=47 // pred_region
              // Predicated region
              $region64: #{lightgcl_forward.3} parent=51 // pred_check
                _
              $region65: #{lightgcl_forward.3} parent=51 // pred_check_branch
                %281 = sbr.rel (0) target = $region67
              $region66: #{lightgcl_forward.3} parent=51 // pred_region
                loop: start=0, step=1, limit=1
                $region68: #{lightgcl_forward.3} parent=66 // loop_pre_header
                  _
                $region69: #{lightgcl_forward.3} parent=66 // loop_header
                  %s283 = sphi 0, %s287
                  %p284 = scmp.ge.s32.totalorder %s283, 1
                  %s288 = sphi %s231, %s231
                  %s289 = sphi %s229, %s229
                $region70: #{lightgcl_forward.3} parent=66 // loop_header_branch
                  %286 = sbr.rel (%p284) target = $region74
                $region71: #{lightgcl_forward.3} parent=66 // loop_body
                  %v290 = vld [vmem:[%s288] sm:$0xff]
                  %291 = vst [vmem:[%s289] sm:$0xff] %v290
                  %v292 = vld [vmem:[%s288 + $0x20] sm:$0xff]
                  %293 = vst [vmem:[%s289 + $0x8] sm:$0xff] %v292
                  %v294 = vld [vmem:[%s288 + $0x40] sm:$0xff]
                  %295 = vst [vmem:[%s289 + $0x10] sm:$0xff] %v294
                  %v296 = vld [vmem:[%s288 + $0x60] sm:$0xff]
                  %297 = vst [vmem:[%s289 + $0x18] sm:$0xff] %v296
                  %v298 = vld [vmem:[%s288 + $0x80] sm:$0xff]
                  %299 = vst [vmem:[%s289 + $0x20] sm:$0xff] %v298
                  %v300 = vld [vmem:[%s288 + $0xa0] sm:$0xff]
                  %301 = vst [vmem:[%s289 + $0x28] sm:$0xff] %v300
                  %v302 = vld [vmem:[%s288 + $0xc0] sm:$0xff]
                  %303 = vst [vmem:[%s289 + $0x30] sm:$0xff] %v302
                  %v304 = vld [vmem:[%s288 + $0xe0] sm:$0xff]
                  %305 = vst [vmem:[%s289 + $0x38] sm:$0xff] %v304
                  %v306 = vld [vmem:[%s288 + $0x100] sm:$0xff]
                  %307 = vst [vmem:[%s289 + $0x40] sm:$0xff] %v306
                  %v308 = vld [vmem:[%s288 + $0x120] sm:$0xff]
                  %309 = vst [vmem:[%s289 + $0x48] sm:$0xff] %v308
                  %v310 = vld [vmem:[%s288 + $0x140] sm:$0xff]
                  %311 = vst [vmem:[%s289 + $0x50] sm:$0xff] %v310
                  %v312 = vld [vmem:[%s288 + $0x160] sm:$0xff]
                  %313 = vst [vmem:[%s289 + $0x58] sm:$0xff] %v312
                  %v314 = vld [vmem:[%s288 + $0x180] sm:$0xff]
                  %315 = vst [vmem:[%s289 + $0x60] sm:$0xff] %v314
                  %v316 = vld [vmem:[%s288 + $0x1a0] sm:$0xff]
                  %317 = vst [vmem:[%s289 + $0x68] sm:$0xff] %v316
                  %v318 = vld [vmem:[%s288 + $0x1c0] sm:$0xff]
                  %319 = vst [vmem:[%s289 + $0x70] sm:$0xff] %v318
                  %v320 = vld [vmem:[%s288 + $0x1e0] sm:$0xff]
                  %321 = vst [vmem:[%s289 + $0x78] sm:$0xff] %v320
                $region72: #{lightgcl_forward.3} parent=66 // loop_footer
                  %s287 = sadd.s32 1, %s283
                $region73: #{lightgcl_forward.3} parent=66 // loop_footer_branch
                  %282 = sbr.rel target = $region69
                $region74: #{lightgcl_forward.3} parent=66 // loop_exit
                  _
              $region67: #{lightgcl_forward.3} parent=51 // pred_fallthru
                _
              // Predicated region
              $region75: #{lightgcl_forward.3} parent=51 // pred_check
                _
              $region76: #{lightgcl_forward.3} parent=51 // pred_check_branch
                %323 = sbr.rel target = $region78
              $region77: #{lightgcl_forward.3} parent=51 // pred_region
                _
              $region78: #{lightgcl_forward.3} parent=51 // pred_fallthru
                _
            $region52: #{lightgcl_forward.3} parent=47 // pred_fallthru
              _
            // Predicated region
            $region53: #{lightgcl_forward.3} parent=47 // pred_check
              _
            $region54: #{lightgcl_forward.3} parent=47 // pred_check_branch
              %237 = sbr.rel target = $region56
            $region55: #{lightgcl_forward.3} parent=47 // pred_region
              %s239 = ssub.s32 256, 1
              loop: start=0, step=1, limit=1
              $region57: #{lightgcl_forward.3} parent=55 // loop_pre_header
                _
              $region58: #{lightgcl_forward.3} parent=55 // loop_header
                %s241 = sphi 0, %s245
                %p242 = scmp.ge.s32.totalorder %s241, 1
                %s246 = sphi %s231, %s231
                %s247 = sphi %s229, %s229
              $region59: #{lightgcl_forward.3} parent=55 // loop_header_branch
                %244 = sbr.rel (%p242) target = $region63
              $region60: #{lightgcl_forward.3} parent=55 // loop_body
                %v248 = vld [vmem:[%s246] sm:%s239]
                %249 = vst [vmem:[%s247] sm:%s239] %v248
                %v250 = vld [vmem:[%s246 + $0x20] sm:%s239]
                %251 = vst [vmem:[%s247 + $0x8] sm:%s239] %v250
                %v252 = vld [vmem:[%s246 + $0x40] sm:%s239]
                %253 = vst [vmem:[%s247 + $0x10] sm:%s239] %v252
                %v254 = vld [vmem:[%s246 + $0x60] sm:%s239]
                %255 = vst [vmem:[%s247 + $0x18] sm:%s239] %v254
                %v256 = vld [vmem:[%s246 + $0x80] sm:%s239]
                %257 = vst [vmem:[%s247 + $0x20] sm:%s239] %v256
                %v258 = vld [vmem:[%s246 + $0xa0] sm:%s239]
                %259 = vst [vmem:[%s247 + $0x28] sm:%s239] %v258
                %v260 = vld [vmem:[%s246 + $0xc0] sm:%s239]
                %261 = vst [vmem:[%s247 + $0x30] sm:%s239] %v260
                %v262 = vld [vmem:[%s246 + $0xe0] sm:%s239]
                %263 = vst [vmem:[%s247 + $0x38] sm:%s239] %v262
                %v264 = vld [vmem:[%s246 + $0x100] sm:%s239]
                %265 = vst [vmem:[%s247 + $0x40] sm:%s239] %v264
                %v266 = vld [vmem:[%s246 + $0x120] sm:%s239]
                %267 = vst [vmem:[%s247 + $0x48] sm:%s239] %v266
                %v268 = vld [vmem:[%s246 + $0x140] sm:%s239]
                %269 = vst [vmem:[%s247 + $0x50] sm:%s239] %v268
                %v270 = vld [vmem:[%s246 + $0x160] sm:%s239]
                %271 = vst [vmem:[%s247 + $0x58] sm:%s239] %v270
                %v272 = vld [vmem:[%s246 + $0x180] sm:%s239]
                %273 = vst [vmem:[%s247 + $0x60] sm:%s239] %v272
                %v274 = vld [vmem:[%s246 + $0x1a0] sm:%s239]
                %275 = vst [vmem:[%s247 + $0x68] sm:%s239] %v274
                %v276 = vld [vmem:[%s246 + $0x1c0] sm:%s239]
                %277 = vst [vmem:[%s247 + $0x70] sm:%s239] %v276
                %v278 = vld [vmem:[%s246 + $0x1e0] sm:%s239]
                %279 = vst [vmem:[%s247 + $0x78] sm:%s239] %v278
              $region61: #{lightgcl_forward.3} parent=55 // loop_footer
                %s245 = sadd.s32 1, %s241
              $region62: #{lightgcl_forward.3} parent=55 // loop_footer_branch
                %240 = sbr.rel target = $region58
              $region63: #{lightgcl_forward.3} parent=55 // loop_exit
                _
            $region56: #{lightgcl_forward.3} parent=47 // pred_fallthru
              _
          $region48: #{lightgcl_forward.3} parent=43 // pred_fallthru
            _
          %324 = vnop
        $region44: #{lightgcl_forward.3} parent=39 // pred_fallthru
          _
      $region40: #{lightgcl_forward.3} parent=5 // pred_fallthru
        _
      %p325 = scmp.le.s32.totalorder 1, %s13
      %p326 = scmp.lt.s32.totalorder %s13, 5
      %p327 = pnand %p325, %p326
      %p328 = pneg %p327
      // Predicated region
      $region79: #{lightgcl_forward.3} parent=5 // pred_check
        _
      $region80: #{lightgcl_forward.3} parent=5 // pred_check_branch
        %330 = sbr.rel (%p327) target = $region82
      $region81: #{lightgcl_forward.3} parent=5 // pred_region
        %s331 = ssub.s32 %s13, 1
        %s332 = sand.u32 %s26, 1
        %s333 = sand.u32 %s26, 1
        %s334 = smul.addr %s333, 128
        %s335 = scalar_lea.vmem [#allocation6], %s334
        // Predicated region
        $region83: #{lightgcl_forward.3} parent=81 // pred_check
          %p336 = pneg %p39
        $region84: #{lightgcl_forward.3} parent=81 // pred_check_branch
          %338 = sbr.rel (%p336) target = $region86
        $region85: #{lightgcl_forward.3} parent=81 // pred_region
          _
        $region86: #{lightgcl_forward.3} parent=81 // pred_fallthru
          _
        %s339 = sand.u32 %s26, 1
        %s340 = sand.u32 %s26, 1
        %s341 = smul.addr %s340, 128
        %s342 = scalar_lea.vmem [#allocation6], %s341
        %p343 = pneg %p39
        %p344 = pneg %p36
        %p345 = pneg %p60
        %p346 = pneg %p57
        %p347 = pneg %p81
        %p348 = pneg %p78
        %p349 = pneg %p102
        %p350 = pneg %p99
        %p351 = pneg %p123
        %p352 = pneg %p120
        %p353 = pneg %p144
        %p354 = pneg %p141
        %p355 = pneg %p165
        %p356 = pneg %p162
        %p357 = pneg %p186
        %p358 = pneg %p183
        %p359 = scmp.eq.s32.totalorder %s18, 0
        // Predicated region
        $region87: #{lightgcl_forward.3} parent=81 // pred_check
          %p360 = pneg %p359
        $region88: #{lightgcl_forward.3} parent=81 // pred_check_branch
          %362 = sbr.rel (%p360) target = $region90
        $region89: #{lightgcl_forward.3} parent=81 // pred_region
          %vm363 = vcmask 7168
          %364 = vst.msk [vmem:[#allocation2] sm:$0xff] %vm363, -1e+30
          %365 = vst.msk [vmem:[#allocation2 + $0x8] sm:$0xff] %vm363, -1e+30
          %366 = vst.msk [vmem:[#allocation4] sm:$0xff] %vm363, -1e+30
          %367 = vst.msk [vmem:[#allocation4 + $0x8] sm:$0xff] %vm363, -1e+30
          %368 = vst.msk [vmem:[#allocation3] sm:$0xff] %vm363, 0.0
          %369 = vst.msk [vmem:[#allocation3 + $0x8] sm:$0xff] %vm363, 0.0
          %370 = vst.msk [vmem:[#allocation5] sm:$0xff] %vm363, 0.0
          %371 = vst.msk [vmem:[#allocation5 + $0x8] sm:$0xff] %vm363, 0.0
          %372 = vst [vmem:[%s7] sm:$0x1] 0.0
        $region90: #{lightgcl_forward.3} parent=81 // pred_fallthru
          _
        %p373 = scmp.lt.s32.totalorder %s18, 2
        %v374 = vld [vmem:[%s1] sm:$0xff]
        %v375 = vld [vmem:[%s1 + $0x8] sm:$0xff]
        %v376 = vld [vmem:[%s2] sm:$0xff]
        %v377 = vld [vmem:[%s2 + $0x8] sm:$0xff]
        %s378 = scalar_select %p373, 1, 0
        %v379 = vstv %s378
        %vm380 = vcmp.eq.s32.totalorder %v379, 1
        %v381 = vsel %vm380, %v374, %v376
        %v382 = vsel %vm380, %v375, %v377
        %v383 = vld [vmem:[%s335] sm:$0xff]
        %v384 = vld [vmem:[%s335 + $0x8] sm:$0xff]
        %v385 = vld [vmem:[%s335 + $0x10] sm:$0xff]
        %v386 = vld [vmem:[%s335 + $0x18] sm:$0xff]
        %v387 = vld [vmem:[%s335 + $0x20] sm:$0xff]
        %v388 = vld [vmem:[%s335 + $0x28] sm:$0xff]
        %v389 = vld [vmem:[%s335 + $0x30] sm:$0xff]
        %v390 = vld [vmem:[%s335 + $0x38] sm:$0xff]
        %v391 = vld [vmem:[%s335 + $0x40] sm:$0xff]
        %v392 = vld [vmem:[%s335 + $0x48] sm:$0xff]
        %v393 = vld [vmem:[%s335 + $0x50] sm:$0xff]
        %v394 = vld [vmem:[%s335 + $0x58] sm:$0xff]
        %v395 = vld [vmem:[%s335 + $0x60] sm:$0xff]
        %v396 = vld [vmem:[%s335 + $0x68] sm:$0xff]
        %v397 = vld [vmem:[%s335 + $0x70] sm:$0xff]
        %v398 = vld [vmem:[%s335 + $0x78] sm:$0xff]
        %399 = vmatpush.msra.mxu0 %v398
        %400 = vmatpush.msra.mxu0 %v397
        %401 = vmatpush.msra.mxu0 %v396
        %402 = vmatpush.msra.mxu0 %v395
        %403 = vmatpush.msra.mxu0 %v394
        %404 = vmatpush.msra.mxu0 %v393
        %405 = vmatpush.msra.mxu0 %v392
        %406 = vmatpush.msra.mxu0 %v391
        %407 = vmatpush.msra.mxu0 %v390
        %408 = vmatpush.msra.mxu0 %v389
        %409 = vmatpush.msra.mxu0 %v388
        %410 = vmatpush.msra.mxu0 %v387
        %411 = vmatpush.msra.mxu0 %v386
        %412 = vmatpush.msra.mxu0 %v385
        %413 = vmatpush.msra.mxu0 %v384
        %414 = vmatpush.msra.mxu0 %v383
        %415 = vmatmul.f32.gmra.mxu0 %v381
        %v416 = vpop.f32.mrf.mxu0
        %v417 = vadd.f32 0.0, %v416
        %418 = vmatmul.f32.gmra.mxu0 %v382
        %v419 = vpop.f32.mrf.mxu0
        %v420 = vadd.f32 0.0, %v419
        %421 = vdwg.mxu0
        %v422 = vmul.f32 %v417, 5.0
        %v423 = vmul.f32 %v420, 5.0
        %s424 = smul.u32 %s18, 128
        %v425 = vlaneseq
        %v426 = vand.u32 %v425, 127
        %v427 = vstv %s424
        %v428 = vadd.s32 %v427, %v426
        %s429 = scalar_select %p373, 200, 432
        %v430 = vstv %s429
        %vm431 = vcmp.lt.s32.totalorder %v428, %v430
        %v432 = vsel %vm431, 1, 0
        %vm433 = vcmp.eq.s32.totalorder %v432, 1
        %v434 = vsel %vm433, %v422, -1e+30
        %v435 = vsel %vm433, %v423, -1e+30
        %436 = vmax.xlane.f32.xlu0 %v434
        %v437 = vpop.xlane.xlu0 %436
        %438 = vmax.xlane.f32.xlu0 %v435
        %v439 = vpop.xlane.xlu0 %438
        %v440 = vld [vmem:[#allocation2] sm:$0xff]
        %v441 = vld [vmem:[#allocation2 + $0x8] sm:$0xff]
        %v442 = vld [vmem:[#allocation4] sm:$0xff]
        %v443 = vld [vmem:[#allocation4 + $0x8] sm:$0xff]
        %v444 = vsel %vm380, %v440, %v442
        %v445 = vsel %vm380, %v441, %v443
        %v446 = vld [vmem:[#allocation3] sm:$0xff]
        %v447 = vld [vmem:[#allocation3 + $0x8] sm:$0xff]
        %v448 = vld [vmem:[#allocation5] sm:$0xff]
        %v449 = vld [vmem:[#allocation5 + $0x8] sm:$0xff]
        %v450 = vsel %vm380, %v446, %v448
        %v451 = vsel %vm380, %v447, %v449
        %v452 = vmax.f32 %v444, %v437
        %v453 = vmax.f32 %v445, %v439
        %v454 = vsub.f32 %v444, %v452
        %v455 = vsub.f32 %v445, %v453
        %v456 = vmul.f32 %v454, 1.442695
        %v457 = vpow.pop %v456
        %v458 = vmul.f32 %v455, 1.442695
        %v459 = vpow.pop %v458
        %v460 = vmul.f32 %v450, %v457
        %v461 = vmul.f32 %v451, %v459
        %463 = vset.pattern.permute.xlu0 0
        %464 = vperm.xlu0 %463, %v452
        %v465 = vpop.permute.xlu0 %464
        %468 = vset.pattern.permute.xlu0 0
        %469 = vperm.xlu0 %468, %v453
        %v470 = vpop.permute.xlu0 %469
        %v472 = vsub.f32 %v434, %v465
        %v473 = vsub.f32 %v435, %v470
        %v474 = vmul.f32 %v472, 1.442695
        %v475 = vpow.pop %v474
        %v476 = vmul.f32 %v473, 1.442695
        %v477 = vpow.pop %v476
        %478 = vadd.xlane.f32.xlu0 %v475
        %v479 = vpop.xlane.xlu0 %478
        %480 = vadd.xlane.f32.xlu0 %v477
        %v481 = vpop.xlane.xlu0 %480
        %v482 = vadd.f32 %v460, %v479
        %v483 = vadd.f32 %v461, %v481
        %v484 = vsel %vm380, %v452, %v440
        %v485 = vsel %vm380, %v453, %v441
        %vm486 = vcmask 7168
        %487 = vst.msk [vmem:[#allocation2] sm:$0xff] %vm486, %v484
        %488 = vst.msk [vmem:[#allocation2 + $0x8] sm:$0xff] %vm486, %v485
        %v489 = vld [vmem:[#allocation3] sm:$0xff]
        %v490 = vld [vmem:[#allocation3 + $0x8] sm:$0xff]
        %v491 = vsel %vm380, %v482, %v489
        %v492 = vsel %vm380, %v483, %v490
        %493 = vst.msk [vmem:[#allocation3] sm:$0xff] %vm486, %v491
        %494 = vst.msk [vmem:[#allocation3 + $0x8] sm:$0xff] %vm486, %v492
        %v495 = vld [vmem:[#allocation4] sm:$0xff]
        %v496 = vld [vmem:[#allocation4 + $0x8] sm:$0xff]
        %v497 = vsel %vm380, %v495, %v452
        %v498 = vsel %vm380, %v496, %v453
        %499 = vst.msk [vmem:[#allocation4] sm:$0xff] %vm486, %v497
        %500 = vst.msk [vmem:[#allocation4 + $0x8] sm:$0xff] %vm486, %v498
        %v501 = vld [vmem:[#allocation5] sm:$0xff]
        %v502 = vld [vmem:[#allocation5 + $0x8] sm:$0xff]
        %v503 = vsel %vm380, %v501, %v482
        %v504 = vsel %vm380, %v502, %v483
        %505 = vst.msk [vmem:[#allocation5] sm:$0xff] %vm486, %v503
        %506 = vst.msk [vmem:[#allocation5 + $0x8] sm:$0xff] %vm486, %v504
        %p507 = scmp.eq.s32.totalorder %s18, 3
        // Predicated region
        $region91: #{lightgcl_forward.3} parent=81 // pred_check
          %p508 = pneg %p507
        $region92: #{lightgcl_forward.3} parent=81 // pred_check_branch
          %510 = sbr.rel (%p508) target = $region94
        $region93: #{lightgcl_forward.3} parent=81 // pred_region
          %v511 = vld [vmem:[#allocation2] sm:$0xff]
          %v512 = vld [vmem:[#allocation2 + $0x8] sm:$0xff]
          %v513 = vld [vmem:[#allocation3] sm:$0xff]
          %v514 = vld [vmem:[#allocation3 + $0x8] sm:$0xff]
          %v515 = vmax.f32 %v511, 0.0
          %v516 = vmax.f32 %v512, 0.0
          %v517 = vsub.f32 %v511, %v515
          %v518 = vsub.f32 %v512, %v516
          %v519 = vmul.f32 %v517, 1.442695
          %v520 = vpow.pop %v519
          %v521 = vmul.f32 %v518, 1.442695
          %v522 = vpow.pop %v521
          %v523 = vmul.f32 %v513, %v520
          %v524 = vmul.f32 %v514, %v522
          %v525 = vsub.f32 0.0, %v515
          %v526 = vsub.f32 0.0, %v516
          %v527 = vmul.f32 %v525, 1.442695
          %v528 = vpow.pop %v527
          %v529 = vmul.f32 %v526, 1.442695
          %v530 = vpow.pop %v529
          %v531 = vmul.f32 %v528, 1e-08
          %v532 = vmul.f32 %v530, 1e-08
          %v533 = vadd.f32 %v523, %v531
          %v534 = vadd.f32 %v524, %v532
          %v535 = vlog2.pop %v533
          %v536 = vmul.f32 %v535, 0.6931472
          %v537 = vlog2.pop %v534
          %v538 = vmul.f32 %v537, 0.6931472
          %v539 = vadd.f32 %v515, %v536
          %v540 = vadd.f32 %v516, %v538
          %v541 = vsel %vm486, %v539, 0.0
          %v542 = vsel %vm486, %v540, 0.0
          %v543 = vadd.f32 %v541, %v542
          %544 = vadd.xlane.f32.xlu0 %v543
          %v545 = vpop.xlane.xlu0 %544
          %v546 = vrot.slane %v545, 4
          %v547 = vadd.f32 %v545, %v546
          %v548 = vrot.slane %v547, 2
          %v549 = vadd.f32 %v547, %v548
          %v550 = vrot.slane %v549, 1
          %v551 = vadd.f32 %v549, %v550
          %s552 = vtos %v551
          %v553 = vld [vmem:[#allocation4] sm:$0xff]
          %v554 = vld [vmem:[#allocation4 + $0x8] sm:$0xff]
          %v555 = vld [vmem:[#allocation5] sm:$0xff]
          %v556 = vld [vmem:[#allocation5 + $0x8] sm:$0xff]
          %v557 = vmax.f32 %v553, 0.0
          %v558 = vmax.f32 %v554, 0.0
          %v559 = vsub.f32 %v553, %v557
          %v560 = vsub.f32 %v554, %v558
          %v561 = vmul.f32 %v559, 1.442695
          %v562 = vpow.pop %v561
          %v563 = vmul.f32 %v560, 1.442695
          %v564 = vpow.pop %v563
          %v565 = vmul.f32 %v555, %v562
          %v566 = vmul.f32 %v556, %v564
          %v567 = vsub.f32 0.0, %v557
          %v568 = vsub.f32 0.0, %v558
          %v569 = vmul.f32 %v567, 1.442695
          %v570 = vpow.pop %v569
          %v571 = vmul.f32 %v568, 1.442695
          %v572 = vpow.pop %v571
          %v573 = vmul.f32 %v570, 1e-08
          %v574 = vmul.f32 %v572, 1e-08
          %v575 = vadd.f32 %v565, %v573
          %v576 = vadd.f32 %v566, %v574
          %v577 = vlog2.pop %v575
          %v578 = vmul.f32 %v577, 0.6931472
          %v579 = vlog2.pop %v576
          %v580 = vmul.f32 %v579, 0.6931472
          %v581 = vadd.f32 %v557, %v578
          %v582 = vadd.f32 %v558, %v580
          %v583 = vsel %vm486, %v581, 0.0
          %v584 = vsel %vm486, %v582, 0.0
          %v585 = vadd.f32 %v583, %v584
          %586 = vadd.xlane.f32.xlu0 %v585
          %v587 = vpop.xlane.xlu0 %586
          %v588 = vrot.slane %v587, 4
          %v589 = vadd.f32 %v587, %v588
          %v590 = vrot.slane %v589, 2
          %v591 = vadd.f32 %v589, %v590
          %v592 = vrot.slane %v591, 1
          %v593 = vadd.f32 %v591, %v592
          %s594 = vtos %v593
          %s595 = sadd.f32 %s552, %s594
          %s596 = smul.f32 %s595, 0.0625
          %v597 = vld [vmem:[%s1] sm:$0xff]
          %v598 = vld [vmem:[%s1 + $0x8] sm:$0xff]
          %v599 = vld [vmem:[%s2] sm:$0xff]
          %v600 = vld [vmem:[%s2 + $0x8] sm:$0xff]
          %v601 = vld [vmem:[%s3] sm:$0xff]
          %v602 = vld [vmem:[%s3 + $0x8] sm:$0xff]
          %v603 = vld [vmem:[%s4] sm:$0xff]
          %v604 = vld [vmem:[%s4 + $0x8] sm:$0xff]
          %v605 = vmul.f32 %v597, %v601
          %v606 = vmul.f32 %v598, %v602
          %607 = vadd.xlane.f32.xlu0 %v605
          %v608 = vpop.xlane.xlu0 %607
          %609 = vadd.xlane.f32.xlu0 %v606
          %v610 = vpop.xlane.xlu0 %609
          %v611 = vmul.f32 %v608, 5.0
          %v612 = vmul.f32 %v610, 5.0
          %v613 = vmax.f32 %v611, -5.0
          %v614 = vmax.f32 %v612, -5.0
          %v615 = vmin.f32 %v613, 5.0
          %v616 = vmin.f32 %v614, 5.0
          %v617 = vmul.f32 %v599, %v603
          %v618 = vmul.f32 %v600, %v604
          %619 = vadd.xlane.f32.xlu0 %v617
          %v620 = vpop.xlane.xlu0 %619
          %621 = vadd.xlane.f32.xlu0 %v618
          %v622 = vpop.xlane.xlu0 %621
          %v623 = vmul.f32 %v620, 5.0
          %v624 = vmul.f32 %v622, 5.0
          %v625 = vmax.f32 %v623, -5.0
          %v626 = vmax.f32 %v624, -5.0
          %v627 = vmin.f32 %v625, 5.0
          %v628 = vmin.f32 %v626, 5.0
          %v629 = vsel %vm486, %v615, 0.0
          %v630 = vsel %vm486, %v616, 0.0
          %v631 = vadd.f32 %v629, %v630
          %632 = vadd.xlane.f32.xlu0 %v631
          %v633 = vpop.xlane.xlu0 %632
          %v634 = vrot.slane %v633, 4
          %v635 = vadd.f32 %v633, %v634
          %v636 = vrot.slane %v635, 2
          %v637 = vadd.f32 %v635, %v636
          %v638 = vrot.slane %v637, 1
          %v639 = vadd.f32 %v637, %v638
          %s640 = vtos %v639
          %v641 = vsel %vm486, %v627, 0.0
          %v642 = vsel %vm486, %v628, 0.0
          %v643 = vadd.f32 %v641, %v642
          %644 = vadd.xlane.f32.xlu0 %v643
          %v645 = vpop.xlane.xlu0 %644
          %v646 = vrot.slane %v645, 4
          %v647 = vadd.f32 %v645, %v646
          %v648 = vrot.slane %v647, 2
          %v649 = vadd.f32 %v647, %v648
          %v650 = vrot.slane %v649, 1
          %v651 = vadd.f32 %v649, %v650
          %s652 = vtos %v651
          %s653 = sadd.f32 %s640, %s652
          %s654 = smul.f32 %s653, 0.0625
          %s655 = ssub.f32 %s596, %s654
          %v656 = vld [vmem:[%s5] sm:$0xff]
          %v657 = vld [vmem:[%s5 + $0x8] sm:$0xff]
          %v658 = vld [vmem:[%s6] sm:$0xff]
          %v659 = vld [vmem:[%s6 + $0x8] sm:$0xff]
          %v660 = vsub.f32 %v656, %v658
          %v661 = vsub.f32 %v657, %v659
          %v662 = vmul.f32 %v601, %v660
          %v663 = vmul.f32 %v602, %v661
          %664 = vadd.xlane.f32.xlu0 %v662
          %v665 = vpop.xlane.xlu0 %664
          %666 = vadd.xlane.f32.xlu0 %v663
          %v667 = vpop.xlane.xlu0 %666
          %v668 = vsub.f32 0.0, %v665
          %v669 = vsub.f32 0.0, %v667
          %v670 = vmax.f32 %v668, 0.0
          %v671 = vmax.f32 %v669, 0.0
          %v672 = vand.u32 2147483647, %v668
          %v673 = vand.u32 2147483647, %v669
          %v674 = vsub.f32 0.0, %v672
          %v675 = vsub.f32 0.0, %v673
          %v676 = vmul.f32 %v674, 1.442695
          %v677 = vpow.pop %v676
          %v678 = vmul.f32 %v675, 1.442695
          %v679 = vpow.pop %v678
          %v680 = vadd.f32 %v677, 1.0
          %v681 = vadd.f32 %v679, 1.0
          %v682 = vlog2.pop %v680
          %v683 = vmul.f32 %v682, 0.6931472
          %v684 = vlog2.pop %v681
          %v685 = vmul.f32 %v684, 0.6931472
          %v686 = vadd.f32 %v670, %v683
          %v687 = vadd.f32 %v671, %v685
          %v688 = vsel %vm486, %v686, 0.0
          %v689 = vsel %vm486, %v687, 0.0
          %v690 = vadd.f32 %v688, %v689
          %691 = vadd.xlane.f32.xlu0 %v690
          %v692 = vpop.xlane.xlu0 %691
          %v693 = vrot.slane %v692, 4
          %v694 = vadd.f32 %v692, %v693
          %v695 = vrot.slane %v694, 2
          %v696 = vadd.f32 %v694, %v695
          %v697 = vrot.slane %v696, 1
          %v698 = vadd.f32 %v696, %v697
          %s699 = vtos %v698
          %s700 = smul.f32 %s699, 0.0625
          %vm701 = vcmp.eq.s32.totalorder %v426, 0
          %v702 = vstv %s655
          %v703 = vsel %vm701, %v702, 0.0
          %vm704 = vcmp.eq.s32.totalorder %v426, 1
          %v705 = vstv %s700
          %v706 = vsel %vm704, %v705, %v703
          %707 = vst [vmem:[%s7] sm:$0x1] %v706
        $region94: #{lightgcl_forward.3} parent=81 // pred_fallthru
          _
        // Predicated region
        $region95: #{lightgcl_forward.3} parent=81 // pred_check
          %p708 = pneg %p183
        $region96: #{lightgcl_forward.3} parent=81 // pred_check_branch
          %710 = sbr.rel (%p708) target = $region98
        $region97: #{lightgcl_forward.3} parent=81 // pred_region
          _
        $region98: #{lightgcl_forward.3} parent=81 // pred_fallthru
          _
        // Predicated region
        $region99: #{lightgcl_forward.3} parent=81 // pred_check
          %p711 = pneg %p183
        $region100: #{lightgcl_forward.3} parent=81 // pred_check_branch
          %713 = sbr.rel (%p711) target = $region102
        $region101: #{lightgcl_forward.3} parent=81 // pred_region
          _
        $region102: #{lightgcl_forward.3} parent=81 // pred_fallthru
          _
      $region82: #{lightgcl_forward.3} parent=5 // pred_fallthru
        _
      %p714 = scmp.le.s32.totalorder 2, %s13
      // Predicated region
      $region103: #{lightgcl_forward.3} parent=5 // pred_check
        %p715 = pneg %p714
      $region104: #{lightgcl_forward.3} parent=5 // pred_check_branch
        %717 = sbr.rel (%p715) target = $region106
      $region105: #{lightgcl_forward.3} parent=5 // pred_region
        %s718 = ssub.s32 %s13, 2
      $region106: #{lightgcl_forward.3} parent=5 // pred_fallthru
        _
    $region6: #{lightgcl_forward.3} parent=1 // loop_footer
      %s17 = sadd.s32 1, %s13
    $region7: #{lightgcl_forward.3} parent=1 // loop_footer_branch
      %12 = sbr.rel target = $region3
    $region8: #{lightgcl_forward.3} parent=1 // loop_exit
      _

// kernel: lightgcl_forward.2
$region0: #{lightgcl_forward.2}
  #allocation0 [shape = 'u32[]', space=smem, size = 0x4, offset = 0x4, fixed_abs, tag = 'smem constant byte address 0x4 - core index']
  #allocation1 [shape = 'u32[72,128]{1,0:T(1,128)}', space=vmem, size = 0x9000, scoped, tag = 'internal scratch']
  #allocation2 [shape = 'bf16[256,128]{1,0:T(8,128)(2,1)}', space=vmem, size = 0x10000, scoped, tag = 'scratch operand']
  #allocation3 [shape = 'bf16[256,128]{1,0:T(8,128)(2,1)}', space=vmem, size = 0x10000, scoped, tag = 'scratch operand']
  #allocation4 [shape = 'f32[128,256]{1,0:T(8,128)}', space=vmem, size = 0x20000, scoped, tag = 'scratch operand']
  #allocation5 [shape = 'f32[16,128]{1,0:T(8,128)}', space=vmem, size = 0x2000, scoped, tag = 'scratch operand']
  #allocation6 [shape = 'f32[16,128]{1,0:T(8,128)}', space=vmem, size = 0x2000, scoped, tag = 'scratch operand']
  %s0 = inlined_call_operand.vmem [shape: bf16[256,256], index: 0, kind: input, shape index: {}]
  %s1 = inlined_call_operand.vmem [shape: bf16[256,16], index: 1, kind: input, shape index: {}]
  %s2 = inlined_call_operand.vmem [shape: bf16[16,256], index: 2, kind: input, shape index: {}]
  %s3 = inlined_call_operand.vmem [shape: bf16[16,256], index: 3, kind: input, shape index: {}]
  %s4 = inlined_call_operand.vmem [shape: bf16[256,16], index: 4, kind: input, shape index: {}]
  %s5 = inlined_call_operand.vmem [shape: f32[256,128], index: 5, kind: input, shape index: {}]
  %s6 = inlined_call_operand.vmem [shape: f32[256,128], index: 6, kind: input, shape index: {}]
  %s7 = inlined_call_operand.vmem [shape: f32[256,128], index: 7, kind: output, shape index: {0}]
  %s8 = inlined_call_operand.vmem [shape: f32[256,128], index: 8, kind: output, shape index: {1}]
  %s9 = inlined_call_operand.vmem [shape: f32[256,128], index: 9, kind: output, shape index: {2}]
  %s10 = inlined_call_operand.vmem [shape: f32[256,128], index: 10, kind: output, shape index: {3}]
  %11 = xla_tuple %s7, %s8, %s9, %s10
  %s12 = sld [smem:[#allocation0]]
  $region142: #{lightgcl_forward.2} parent=0
    _
  %s14 = ssub.s32 1, %s12
  %s15 = scalar_select 0, %s14, %s12
  $region1: #{lightgcl_forward.2} parent=0
    #allocation7 [shape = 'u8[8192]{0}', space=vmem, size = 0x2000, scoped, tag = 'input window, operand 2']
    loop: start=0, step=1, limit=6
    $region2: #{lightgcl_forward.2} parent=1 // loop_pre_header
      _
    $region3: #{lightgcl_forward.2} parent=1 // loop_header
      %s17 = sphi 0, %s21
      %p18 = scmp.ge.s32.totalorder %s17, 6
      %s24 = sphi 0, %s36
      %s25 = sphi 0, %s32
      %s26 = sphi 0, %s24
      %s27 = sphi 0, %s25
      %s28 = sphi 0, %s26
      %s29 = sphi 0, %s27
      %s39 = sphi 0, %s41
      %s42 = sphi 0, %s39
      %s43 = sphi 0, %s42
      %s59 = sphi 0, %s43
      %s65 = sphi 0, %s67
      %s68 = sphi 0, %s65
      %s69 = sphi 0, %s68
      %s85 = sphi 0, %s69
      %s91 = sphi 0, %s93
      %s94 = sphi 0, %s91
      %s95 = sphi 0, %s94
      %s111 = sphi 0, %s95
      %s115 = sphi 0, %s115
      %s117 = sphi 0, %s115
      %s118 = sphi 0, %s117
      %s132 = sphi 0, %s118
      %s136 = sphi 0, %s136
      %s138 = sphi 0, %s136
      %s139 = sphi 0, %s138
      %s153 = sphi 0, %s139
      %s159 = sphi 0, %s161
      %s162 = sphi 0, %s159
      %s163 = sphi 0, %s162
      %s179 = sphi 0, %s163
      %s183 = sphi 0, %s183
      %s185 = sphi 0, %s183
      %s186 = sphi 0, %s185
      %s200 = sphi 0, %s186
      %s204 = sphi 0, %s204
      %s206 = sphi 0, %s204
      %s207 = sphi 0, %s206
      %s221 = sphi 0, %s207
      %s225 = sphi 0, %s225
      %s227 = sphi 0, %s225
      %s228 = sphi 0, %s227
      %s242 = sphi 0, %s228
      %s246 = sphi 0, %s246
      %s248 = sphi 0, %s246
      %s249 = sphi 0, %s248
      %s263 = sphi 0, %s249
      %s267 = sphi 0, %s267
      %s269 = sphi 0, %s267
      %s270 = sphi 0, %s269
      %s284 = sphi 0, %s270
    $region4: #{lightgcl_forward.2} parent=1 // loop_header_branch
      %20 = sbr.rel (%p18) target = $region8
    $region5: #{lightgcl_forward.2} parent=1 // loop_body
      %s22 = ssub.s32 %s17, 1
      %s23 = ssub.s32 %s17, 2
      %s30 = sadd.s32 1, %s25
      %p31 = scmp.ge.s32.totalorder %s30, 2
      %s32 = scalar_select %p31, 0, %s30
      %s33 = sadd.s32 1, %s24
      %s34 = scalar_select %p31, %s33, %s24
      %p35 = scmp.ge.s32.totalorder %s34, 2
      %s36 = scalar_select %p35, 0, %s34
      %s37 = ssub.s32 %s25, %s32
      %p38 = scmp.eq.s32.totalorder %s37, 0
      %s40 = sadd.s32 %s39, 1
      %s41 = scalar_select %p38, %s39, %s40
      %p44 = pneg %p38
      %p45 = scmp.eq.s32.totalorder %s17, 3
      %p46 = por %p44, %p45
      %p47 = scmp.ne.s32.totalorder %s39, %s42
      %p48 = scmp.eq.s32.totalorder %s17, 0
      %p49 = por %p47, %p48
      %p50 = scmp.ne.s32.totalorder %s39, %s42
      %p51 = scmp.eq.s32.totalorder %s22, 3
      %p52 = por %p50, %p51
      %p53 = scmp.ne.s32.totalorder %s42, %s43
      %p54 = scmp.eq.s32.totalorder %s22, 0
      %p55 = por %p53, %p54
      %p56 = scmp.ne.s32.totalorder %s42, %s43
      %p57 = scmp.eq.s32.totalorder %s23, 3
      %p58 = por %p56, %p57
      %p60 = scmp.ne.s32.totalorder %s43, %s59
      %p61 = scmp.eq.s32.totalorder %s23, 0
      %p62 = por %p60, %p61
      %s63 = ssub.s32 %s25, %s32
      %p64 = scmp.eq.s32.totalorder %s63, 0
      %s66 = sadd.s32 %s65, 1
      %s67 = scalar_select %p64, %s65, %s66
      %p70 = pneg %p64
      %p71 = scmp.eq.s32.totalorder %s17, 3
      %p72 = por %p70, %p71
      %p73 = scmp.ne.s32.totalorder %s65, %s68
      %p74 = scmp.eq.s32.totalorder %s17, 0
      %p75 = por %p73, %p74
      %p76 = scmp.ne.s32.totalorder %s65, %s68
      %p77 = scmp.eq.s32.totalorder %s22, 3
      %p78 = por %p76, %p77
      %p79 = scmp.ne.s32.totalorder %s68, %s69
      %p80 = scmp.eq.s32.totalorder %s22, 0
      %p81 = por %p79, %p80
      %p82 = scmp.ne.s32.totalorder %s68, %s69
      %p83 = scmp.eq.s32.totalorder %s23, 3
      %p84 = por %p82, %p83
      %p86 = scmp.ne.s32.totalorder %s69, %s85
      %p87 = scmp.eq.s32.totalorder %s23, 0
      %p88 = por %p86, %p87
      %s89 = ssub.s32 %s25, %s32
      %p90 = scmp.eq.s32.totalorder %s89, 0
      %s92 = sadd.s32 %s91, 1
      %s93 = scalar_select %p90, %s91, %s92
      %p96 = pneg %p90
      %p97 = scmp.eq.s32.totalorder %s17, 3
      %p98 = por %p96, %p97
      %p99 = scmp.ne.s32.totalorder %s91, %s94
      %p100 = scmp.eq.s32.totalorder %s17, 0
      %p101 = por %p99, %p100
      %p102 = scmp.ne.s32.totalorder %s91, %s94
      %p103 = scmp.eq.s32.totalorder %s22, 3
      %p104 = por %p102, %p103
      %p105 = scmp.ne.s32.totalorder %s94, %s95
      %p106 = scmp.eq.s32.totalorder %s22, 0
      %p107 = por %p105, %p106
      %p108 = scmp.ne.s32.totalorder %s94, %s95
      %p109 = scmp.eq.s32.totalorder %s23, 3
      %p110 = por %p108, %p109
      %p112 = scmp.ne.s32.totalorder %s95, %s111
      %p113 = scmp.eq.s32.totalorder %s23, 0
      %p114 = por %p112, %p113
      %s116 = sadd.s32 %s115, 1
      %p119 = scmp.eq.s32.totalorder %s17, 3
      %p120 = scmp.ne.s32.totalorder %s115, %s117
      %p121 = scmp.eq.s32.totalorder %s17, 0
      %p122 = por %p120, %p121
      %p123 = scmp.ne.s32.totalorder %s115, %s117
      %p124 = scmp.eq.s32.totalorder %s22, 3
      %p125 = por %p123, %p124
      %p126 = scmp.ne.s32.totalorder %s117, %s118
      %p127 = scmp.eq.s32.totalorder %s22, 0
      %p128 = por %p126, %p127
      %p129 = scmp.ne.s32.totalorder %s117, %s118
      %p130 = scmp.eq.s32.totalorder %s23, 3
      %p131 = por %p129, %p130
      %p133 = scmp.ne.s32.totalorder %s118, %s132
      %p134 = scmp.eq.s32.totalorder %s23, 0
      %p135 = por %p133, %p134
      %s137 = sadd.s32 %s136, 1
      %p140 = scmp.eq.s32.totalorder %s17, 3
      %p141 = scmp.ne.s32.totalorder %s136, %s138
      %p142 = scmp.eq.s32.totalorder %s17, 0
      %p143 = por %p141, %p142
      %p144 = scmp.ne.s32.totalorder %s136, %s138
      %p145 = scmp.eq.s32.totalorder %s22, 3
      %p146 = por %p144, %p145
      %p147 = scmp.ne.s32.totalorder %s138, %s139
      %p148 = scmp.eq.s32.totalorder %s22, 0
      %p149 = por %p147, %p148
      %p150 = scmp.ne.s32.totalorder %s138, %s139
      %p151 = scmp.eq.s32.totalorder %s23, 3
      %p152 = por %p150, %p151
      %p154 = scmp.ne.s32.totalorder %s139, %s153
      %p155 = scmp.eq.s32.totalorder %s23, 0
      %p156 = por %p154, %p155
      %s157 = ssub.s32 %s25, %s32
      %p158 = scmp.eq.s32.totalorder %s157, 0
      %s160 = sadd.s32 %s159, 1
      %s161 = scalar_select %p158, %s159, %s160
      %p164 = pneg %p158
      %p165 = scmp.eq.s32.totalorder %s17, 3
      %p166 = por %p164, %p165
      %p167 = scmp.ne.s32.totalorder %s159, %s162
      %p168 = scmp.eq.s32.totalorder %s17, 0
      %p169 = por %p167, %p168
      %p170 = scmp.ne.s32.totalorder %s159, %s162
      %p171 = scmp.eq.s32.totalorder %s22, 3
      %p172 = por %p170, %p171
      %p173 = scmp.ne.s32.totalorder %s162, %s163
      %p174 = scmp.eq.s32.totalorder %s22, 0
      %p175 = por %p173, %p174
      %p176 = scmp.ne.s32.totalorder %s162, %s163
      %p177 = scmp.eq.s32.totalorder %s23, 3
      %p178 = por %p176, %p177
      %p180 = scmp.ne.s32.totalorder %s163, %s179
      %p181 = scmp.eq.s32.totalorder %s23, 0
      %p182 = por %p180, %p181
      %s184 = sadd.s32 %s183, 1
      %p187 = scmp.eq.s32.totalorder %s17, 3
      %p188 = scmp.ne.s32.totalorder %s183, %s185
      %p189 = scmp.eq.s32.totalorder %s17, 0
      %p190 = por %p188, %p189
      %p191 = scmp.ne.s32.totalorder %s183, %s185
      %p192 = scmp.eq.s32.totalorder %s22, 3
      %p193 = por %p191, %p192
      %p194 = scmp.ne.s32.totalorder %s185, %s186
      %p195 = scmp.eq.s32.totalorder %s22, 0
      %p196 = por %p194, %p195
      %p197 = scmp.ne.s32.totalorder %s185, %s186
      %p198 = scmp.eq.s32.totalorder %s23, 3
      %p199 = por %p197, %p198
      %p201 = scmp.ne.s32.totalorder %s186, %s200
      %p202 = scmp.eq.s32.totalorder %s23, 0
      %p203 = por %p201, %p202
      %s205 = sadd.s32 %s204, 1
      %p208 = scmp.eq.s32.totalorder %s17, 3
      %p209 = scmp.ne.s32.totalorder %s204, %s206
      %p210 = scmp.eq.s32.totalorder %s17, 0
      %p211 = por %p209, %p210
      %p212 = scmp.ne.s32.totalorder %s204, %s206
      %p213 = scmp.eq.s32.totalorder %s22, 3
      %p214 = por %p212, %p213
      %p215 = scmp.ne.s32.totalorder %s206, %s207
      %p216 = scmp.eq.s32.totalorder %s22, 0
      %p217 = por %p215, %p216
      %p218 = scmp.ne.s32.totalorder %s206, %s207
      %p219 = scmp.eq.s32.totalorder %s23, 3
      %p220 = por %p218, %p219
      %p222 = scmp.ne.s32.totalorder %s207, %s221
      %p223 = scmp.eq.s32.totalorder %s23, 0
      %p224 = por %p222, %p223
      %s226 = sadd.s32 %s225, 1
      %p229 = scmp.eq.s32.totalorder %s17, 3
      %p230 = scmp.ne.s32.totalorder %s225, %s227
      %p231 = scmp.eq.s32.totalorder %s17, 0
      %p232 = por %p230, %p231
      %p233 = scmp.ne.s32.totalorder %s225, %s227
      %p234 = scmp.eq.s32.totalorder %s22, 3
      %p235 = por %p233, %p234
      %p236 = scmp.ne.s32.totalorder %s227, %s228
      %p237 = scmp.eq.s32.totalorder %s22, 0
      %p238 = por %p236, %p237
      %p239 = scmp.ne.s32.totalorder %s227, %s228
      %p240 = scmp.eq.s32.totalorder %s23, 3
      %p241 = por %p239, %p240
      %p243 = scmp.ne.s32.totalorder %s228, %s242
      %p244 = scmp.eq.s32.totalorder %s23, 0
      %p245 = por %p243, %p244
      %s247 = sadd.s32 %s246, 1
      %p250 = scmp.eq.s32.totalorder %s17, 3
      %p251 = scmp.ne.s32.totalorder %s246, %s248
      %p252 = scmp.eq.s32.totalorder %s17, 0
      %p253 = por %p251, %p252
      %p254 = scmp.ne.s32.totalorder %s246, %s248
      %p255 = scmp.eq.s32.totalorder %s22, 3
      %p256 = por %p254, %p255
      %p257 = scmp.ne.s32.totalorder %s248, %s249
      %p258 = scmp.eq.s32.totalorder %s22, 0
      %p259 = por %p257, %p258
      %p260 = scmp.ne.s32.totalorder %s248, %s249
      %p261 = scmp.eq.s32.totalorder %s23, 3
      %p262 = por %p260, %p261
      %p264 = scmp.ne.s32.totalorder %s249, %s263
      %p265 = scmp.eq.s32.totalorder %s23, 0
      %p266 = por %p264, %p265
      %s268 = sadd.s32 %s267, 1
      %p271 = scmp.eq.s32.totalorder %s17, 3
      %p272 = scmp.ne.s32.totalorder %s267, %s269
      %p273 = scmp.eq.s32.totalorder %s17, 0
      %p274 = por %p272, %p273
      %p275 = scmp.ne.s32.totalorder %s267, %s269
      %p276 = scmp.eq.s32.totalorder %s22, 3
      %p277 = por %p275, %p276
      %p278 = scmp.ne.s32.totalorder %s269, %s270
      %p279 = scmp.eq.s32.totalorder %s22, 0
      %p280 = por %p278, %p279
      %p281 = scmp.ne.s32.totalorder %s269, %s270
      %p282 = scmp.eq.s32.totalorder %s23, 3
      %p283 = por %p281, %p282
      %p285 = scmp.ne.s32.totalorder %s270, %s284
      %p286 = scmp.eq.s32.totalorder %s23, 0
      %p287 = por %p285, %p286
      %p288 = scmp.le.s32.totalorder 1, %s17
      %p289 = scmp.lt.s32.totalorder %s17, 5
      %p290 = pnand %p288, %p289
      %p291 = pneg %p290
      // Predicated region
      $region9: #{lightgcl_forward.2} parent=5 // pred_check
        _
      $region10: #{lightgcl_forward.2} parent=5 // pred_check_branch
        %293 = sbr.rel (%p290) target = $region12
      $region11: #{lightgcl_forward.2} parent=5 // pred_region
        %s294 = ssub.s32 %s17, 1
        // Predicated region
        $region13: #{lightgcl_forward.2} parent=11 // pred_check
          %p295 = pneg %p128
        $region14: #{lightgcl_forward.2} parent=11 // pred_check_branch
          %297 = sbr.rel (%p295) target = $region16
        $region15: #{lightgcl_forward.2} parent=11 // pred_region
          _
        $region16: #{lightgcl_forward.2} parent=11 // pred_fallthru
          _
        // Predicated region
        $region17: #{lightgcl_forward.2} parent=11 // pred_check
          %p298 = pneg %p149
        $region18: #{lightgcl_forward.2} parent=11 // pred_check_branch
          %300 = sbr.rel (%p298) target = $region20
        $region19: #{lightgcl_forward.2} parent=11 // pred_region
          _
        $region20: #{lightgcl_forward.2} parent=11 // pred_fallthru
          _
        // Predicated region
        $region21: #{lightgcl_forward.2} parent=11 // pred_check
          %p301 = pneg %p196
        $region22: #{lightgcl_forward.2} parent=11 // pred_check_branch
          %303 = sbr.rel (%p301) target = $region24
        $region23: #{lightgcl_forward.2} parent=11 // pred_region
          _
        $region24: #{lightgcl_forward.2} parent=11 // pred_fallthru
          _
      $region12: #{lightgcl_forward.2} parent=5 // pred_fallthru
        _
      %p304 = scmp.lt.s32.totalorder %s17, 4
      // Predicated region
      $region25: #{lightgcl_forward.2} parent=5 // pred_check
        %p305 = pneg %p304
      $region26: #{lightgcl_forward.2} parent=5 // pred_check_branch
        %307 = sbr.rel (%p305) target = $region28
      $region27: #{lightgcl_forward.2} parent=5 // pred_region
        // Predicated region
        $region29: #{lightgcl_forward.2} parent=27 // pred_check
          %p308 = pneg %p49
        $region30: #{lightgcl_forward.2} parent=27 // pred_check_branch
          %310 = sbr.rel (%p308) target = $region32
        $region31: #{lightgcl_forward.2} parent=27 // pred_region
          %s311 = smul.u32 16, %s25
          %p312 = scmp.lt.s32.totalorder %s311, 31
          %s313 = scalar_select %p312, %s311, 31
          %s314 = smul.addr %s313, 2
          %s315 = smul.addr %s314, 4
          %s316 = scalar_lea.vmem %s0, %s315
          %s317 = smul.u32 16, %s25
        $region32: #{lightgcl_forward.2} parent=27 // pred_fallthru
          _
        // Predicated region
        $region33: #{lightgcl_forward.2} parent=27 // pred_check
          %p318 = pneg %p75
        $region34: #{lightgcl_forward.2} parent=27 // pred_check_branch
          %320 = sbr.rel (%p318) target = $region36
        $region35: #{lightgcl_forward.2} parent=27 // pred_region
          %s321 = smul.u32 16, %s25
          %p322 = scmp.lt.s32.totalorder %s321, 31
          %s323 = scalar_select %p322, %s321, 31
          %s324 = smul.addr %s323, 4
          %s325 = scalar_lea.vmem %s1, %s324
          %s326 = smul.u32 16, %s25
        $region36: #{lightgcl_forward.2} parent=27 // pred_fallthru
          _
        // Predicated region
        $region37: #{lightgcl_forward.2} parent=27 // pred_check
          %p327 = pneg %p101
        $region38: #{lightgcl_forward.2} parent=27 // pred_check_branch
          %329 = sbr.rel (%p327) target = $region40
        $region39: #{lightgcl_forward.2} parent=27 // pred_region
          %s330 = sand.u32 %s91, 1
          %s331 = sand.u32 %s91, 1
          %s332 = smul.addr %s331, 8
          %s333 = scalar_lea.vmem [#allocation7], %s332
          %s334 = smul.addr %s25, 4
          %s335 = scalar_lea.vmem %s2, %s334
          // Predicated region
          $region41: #{lightgcl_forward.2} parent=39 // pred_check
            _
          $region42: #{lightgcl_forward.2} parent=39 // pred_check_branch
            %337 = sbr.rel (0) target = $region44
          $region43: #{lightgcl_forward.2} parent=39 // pred_region
            // Predicated region
            $region45: #{lightgcl_forward.2} parent=43 // pred_check
              _
            $region46: #{lightgcl_forward.2} parent=43 // pred_check_branch
              %339 = sbr.rel target = $region48
            $region47: #{lightgcl_forward.2} parent=43 // pred_region
              // Predicated region
              $region60: #{lightgcl_forward.2} parent=47 // pred_check
                _
              $region61: #{lightgcl_forward.2} parent=47 // pred_check_branch
                %357 = sbr.rel (0) target = $region63
              $region62: #{lightgcl_forward.2} parent=47 // pred_region
                loop: start=0, step=1, limit=1
                $region64: #{lightgcl_forward.2} parent=62 // loop_pre_header
                  _
                $region65: #{lightgcl_forward.2} parent=62 // loop_header
                  %s359 = sphi 0, %s363
                  %p360 = scmp.ge.s32.totalorder %s359, 1
                  %s364 = sphi %s335, %s335
                  %s365 = sphi %s333, %s333
                $region66: #{lightgcl_forward.2} parent=62 // loop_header_branch
                  %362 = sbr.rel (%p360) target = $region70
                $region67: #{lightgcl_forward.2} parent=62 // loop_body
                  _
                $region68: #{lightgcl_forward.2} parent=62 // loop_footer
                  %s363 = sadd.s32 1, %s359
                $region69: #{lightgcl_forward.2} parent=62 // loop_footer_branch
                  %358 = sbr.rel target = $region65
                $region70: #{lightgcl_forward.2} parent=62 // loop_exit
                  _
                %s367 = ssub.s32 16, 1
                loop: start=0, step=1, limit=1
                $region71: #{lightgcl_forward.2} parent=62 // loop_pre_header
                  _
                $region72: #{lightgcl_forward.2} parent=62 // loop_header
                  %s369 = sphi 0, %s373
                  %p370 = scmp.ge.s32.totalorder %s369, 1
                  %s374 = sphi %s335, %s335
                  %s375 = sphi %s333, %s333
                $region73: #{lightgcl_forward.2} parent=62 // loop_header_branch
                  %372 = sbr.rel (%p370) target = $region77
                $region74: #{lightgcl_forward.2} parent=62 // loop_body
                  %v376 = vld [vmem:[%s374] sm:%s367]
                  %377 = vst [vmem:[%s375] sm:%s367] %v376
                  %v378 = vld [vmem:[%s374 + $0x8] sm:%s367]
                  %379 = vst [vmem:[%s375 + $0x4] sm:%s367] %v378
                $region75: #{lightgcl_forward.2} parent=62 // loop_footer
                  %s373 = sadd.s32 1, %s369
                $region76: #{lightgcl_forward.2} parent=62 // loop_footer_branch
                  %368 = sbr.rel target = $region72
                $region77: #{lightgcl_forward.2} parent=62 // loop_exit
                  _
              $region63: #{lightgcl_forward.2} parent=47 // pred_fallthru
                _
            $region48: #{lightgcl_forward.2} parent=43 // pred_fallthru
              _
            // Predicated region
            $region49: #{lightgcl_forward.2} parent=43 // pred_check
              _
            $region50: #{lightgcl_forward.2} parent=43 // pred_check_branch
              %341 = sbr.rel (0) target = $region52
            $region51: #{lightgcl_forward.2} parent=43 // pred_region
              %s343 = ssub.s32 16, 1
              loop: start=0, step=1, limit=1
              $region53: #{lightgcl_forward.2} parent=51 // loop_pre_header
                _
              $region54: #{lightgcl_forward.2} parent=51 // loop_header
                %s345 = sphi 0, %s349
                %p346 = scmp.ge.s32.totalorder %s345, 1
                %s350 = sphi %s335, %s335
                %s351 = sphi %s333, %s333
              $region55: #{lightgcl_forward.2} parent=51 // loop_header_branch
                %348 = sbr.rel (%p346) target = $region59
              $region56: #{lightgcl_forward.2} parent=51 // loop_body
                %v352 = vld [vmem:[%s350] sm:%s343]
                %353 = vst [vmem:[%s351] sm:%s343] %v352
                %v354 = vld [vmem:[%s350 + $0x8] sm:%s343]
                %355 = vst [vmem:[%s351 + $0x4] sm:%s343] %v354
              $region57: #{lightgcl_forward.2} parent=51 // loop_footer
                %s349 = sadd.s32 1, %s345
              $region58: #{lightgcl_forward.2} parent=51 // loop_footer_branch
                %344 = sbr.rel target = $region54
              $region59: #{lightgcl_forward.2} parent=51 // loop_exit
                _
            $region52: #{lightgcl_forward.2} parent=43 // pred_fallthru
              _
          $region44: #{lightgcl_forward.2} parent=39 // pred_fallthru
            _
          %380 = vnop
        $region40: #{lightgcl_forward.2} parent=27 // pred_fallthru
          _
        // Predicated region
        $region78: #{lightgcl_forward.2} parent=27 // pred_check
          %p381 = pneg %p169
        $region79: #{lightgcl_forward.2} parent=27 // pred_check_branch
          %383 = sbr.rel (%p381) target = $region81
        $region80: #{lightgcl_forward.2} parent=27 // pred_region
          %s384 = smul.u32 16, %s25
          %p385 = scmp.lt.s32.totalorder %s384, 31
          %s386 = scalar_select %p385, %s384, 31
          %s387 = smul.addr %s386, 8
          %s388 = scalar_lea.vmem %s5, %s387
          %s389 = smul.u32 16, %s25
        $region81: #{lightgcl_forward.2} parent=27 // pred_fallthru
          _
      $region28: #{lightgcl_forward.2} parent=5 // pred_fallthru
        _
      %p390 = scmp.le.s32.totalorder 1, %s17
      %p391 = scmp.lt.s32.totalorder %s17, 5
      %p392 = pnand %p390, %p391
      %p393 = pneg %p392
      // Predicated region
      $region82: #{lightgcl_forward.2} parent=5 // pred_check
        _
      $region83: #{lightgcl_forward.2} parent=5 // pred_check_branch
        %395 = sbr.rel (%p392) target = $region85
      $region84: #{lightgcl_forward.2} parent=5 // pred_region
        %s396 = ssub.s32 %s17, 1
        %s397 = sand.u32 %s94, 1
        %s398 = sand.u32 %s94, 1
        %s399 = smul.addr %s398, 8
        %s400 = scalar_lea.vmem [#allocation7], %s399
        // Predicated region
        $region86: #{lightgcl_forward.2} parent=84 // pred_check
          %p401 = pneg %p107
        $region87: #{lightgcl_forward.2} parent=84 // pred_check_branch
          %403 = sbr.rel (%p401) target = $region89
        $region88: #{lightgcl_forward.2} parent=84 // pred_region
          _
        $region89: #{lightgcl_forward.2} parent=84 // pred_fallthru
          _
        %s404 = smul.u32 16, %s27
        %p405 = scmp.lt.s32.totalorder %s404, 31
        %s406 = scalar_select %p405, %s404, 31
        %s407 = smul.addr %s406, 2
        %s408 = smul.addr %s407, 4
        %s409 = scalar_lea.vmem %s0, %s408
        %p410 = pneg %p55
        %p411 = pneg %p52
        %s412 = smul.u32 16, %s27
        %p413 = scmp.lt.s32.totalorder %s412, 31
        %s414 = scalar_select %p413, %s412, 31
        %s415 = smul.addr %s414, 4
        %s416 = scalar_lea.vmem %s1, %s415
        %p417 = pneg %p81
        %p418 = pneg %p78
        %s419 = sand.u32 %s94, 1
        %s420 = sand.u32 %s94, 1
        %s421 = smul.addr %s420, 8
        %s422 = scalar_lea.vmem [#allocation7], %s421
        %p423 = pneg %p107
        %p424 = pneg %p104
        %p425 = pneg %p128
        %p426 = pneg %p125
        %p427 = pneg %p149
        %p428 = pneg %p146
        %s429 = smul.u32 16, %s27
        %p430 = scmp.lt.s32.totalorder %s429, 31
        %s431 = scalar_select %p430, %s429, 31
        %s432 = smul.addr %s431, 8
        %s433 = scalar_lea.vmem %s5, %s432
        %p434 = pneg %p175
        %p435 = pneg %p172
        %p436 = pneg %p196
        %p437 = pneg %p193
        %p438 = pneg %p217
        %p439 = pneg %p214
        %p440 = pneg %p238
        %p441 = pneg %p235
        %p442 = pneg %p259
        %p443 = pneg %p256
        %p444 = pneg %p280
        %p445 = pneg %p277
        %s446 = smul.u32 16, %s27
        %p447 = scmp.lt.s32.totalorder %s446, 31
        %s448 = scalar_select %p447, %s446, 31
        %s449 = smul.addr %s448, 2
        %s450 = smul.addr %s449, 4
        %s451 = scalar_lea.vmem %s0, %s450
        %s452 = smul.u32 16, %s27
        %s453 = smul.u32 16, %s27
        %p454 = scmp.lt.s32.totalorder %s453, 31
        %s455 = scalar_select %p454, %s453, 31
        %s456 = smul.addr %s455, 4
        %s457 = scalar_lea.vmem %s1, %s456
        %s458 = smul.u32 16, %s27
        %s459 = smul.u32 16, %s27
        %p460 = scmp.lt.s32.totalorder %s459, 31
        %s461 = scalar_select %p460, %s459, 31
        %s462 = smul.addr %s461, 8
        %s463 = scalar_lea.vmem %s5, %s462
        %s464 = smul.u32 16, %s27
        %s466 = smul.u32 %s27, 128
        %p467 = scmp.eq.s32.totalorder %s26, 0
        %p468 = scmp.eq.s32.totalorder %s27, 0
        %p469 = pnand %p467, %p468
        %p470 = pneg %p469
        // Predicated region
        $region90: #{lightgcl_forward.2} parent=84 // pred_check
          _
        $region91: #{lightgcl_forward.2} parent=84 // pred_check_branch
          %472 = sbr.rel (%p469) target = $region93
        $region92: #{lightgcl_forward.2} parent=84 // pred_region
          %v473 = vld [vmem:[%s6] sm:$0xff]
          %v474 = vld [vmem:[%s6 + $0x8] sm:$0xff]
          %v475 = vld [vmem:[%s6 + $0x10] sm:$0xff]
          %v476 = vld [vmem:[%s6 + $0x18] sm:$0xff]
          %v477 = vld [vmem:[%s6 + $0x20] sm:$0xff]
          %v478 = vld [vmem:[%s6 + $0x28] sm:$0xff]
          %v479 = vld [vmem:[%s6 + $0x30] sm:$0xff]
          %v480 = vld [vmem:[%s6 + $0x38] sm:$0xff]
          %v481 = vld [vmem:[%s6 + $0x40] sm:$0xff]
          %v482 = vld [vmem:[%s6 + $0x48] sm:$0xff]
          %v483 = vld [vmem:[%s6 + $0x50] sm:$0xff]
          %v484 = vld [vmem:[%s6 + $0x58] sm:$0xff]
          %v485 = vld [vmem:[%s6 + $0x60] sm:$0xff]
          %v486 = vld [vmem:[%s6 + $0x68] sm:$0xff]
          %v487 = vld [vmem:[%s6 + $0x70] sm:$0xff]
          %v488 = vld [vmem:[%s6 + $0x78] sm:$0xff]
          %v489 = vld [vmem:[%s6 + $0x80] sm:$0xff]
          %v490 = vld [vmem:[%s6 + $0x88] sm:$0xff]
          %v491 = vld [vmem:[%s6 + $0x90] sm:$0xff]
          %v492 = vld [vmem:[%s6 + $0x98] sm:$0xff]
          %v493 = vld [vmem:[%s6 + $0xa0] sm:$0xff]
          %v494 = vld [vmem:[%s6 + $0xa8] sm:$0xff]
          %v495 = vld [vmem:[%s6 + $0xb0] sm:$0xff]
          %v496 = vld [vmem:[%s6 + $0xb8] sm:$0xff]
          %v497 = vld [vmem:[%s6 + $0xc0] sm:$0xff]
          %v498 = vld [vmem:[%s6 + $0xc8] sm:$0xff]
          %v499 = vld [vmem:[%s6 + $0xd0] sm:$0xff]
          %v500 = vld [vmem:[%s6 + $0xd8] sm:$0xff]
          %v501 = vld [vmem:[%s6 + $0xe0] sm:$0xff]
          %v502 = vld [vmem:[%s6 + $0xe8] sm:$0xff]
          %v503 = vld [vmem:[%s6 + $0xf0] sm:$0xff]
          %v504 = vld [vmem:[%s6 + $0xf8] sm:$0xff]
          %505 = vst [vmem:[%s8] sm:$0xff] %v473
          %506 = vst [vmem:[%s8 + $0x8] sm:$0xff] %v474
          %507 = vst [vmem:[%s8 + $0x10] sm:$0xff] %v475
          %508 = vst [vmem:[%s8 + $0x18] sm:$0xff] %v476
          %509 = vst [vmem:[%s8 + $0x20] sm:$0xff] %v477
          %510 = vst [vmem:[%s8 + $0x28] sm:$0xff] %v478
          %511 = vst [vmem:[%s8 + $0x30] sm:$0xff] %v479
          %512 = vst [vmem:[%s8 + $0x38] sm:$0xff] %v480
          %513 = vst [vmem:[%s8 + $0x40] sm:$0xff] %v481
          %514 = vst [vmem:[%s8 + $0x48] sm:$0xff] %v482
          %515 = vst [vmem:[%s8 + $0x50] sm:$0xff] %v483
          %516 = vst [vmem:[%s8 + $0x58] sm:$0xff] %v484
          %517 = vst [vmem:[%s8 + $0x60] sm:$0xff] %v485
          %518 = vst [vmem:[%s8 + $0x68] sm:$0xff] %v486
          %519 = vst [vmem:[%s8 + $0x70] sm:$0xff] %v487
          %520 = vst [vmem:[%s8 + $0x78] sm:$0xff] %v488
          %521 = vst [vmem:[%s8 + $0x80] sm:$0xff] %v489
          %522 = vst [vmem:[%s8 + $0x88] sm:$0xff] %v490
          %523 = vst [vmem:[%s8 + $0x90] sm:$0xff] %v491
          %524 = vst [vmem:[%s8 + $0x98] sm:$0xff] %v492
          %525 = vst [vmem:[%s8 + $0xa0] sm:$0xff] %v493
          %526 = vst [vmem:[%s8 + $0xa8] sm:$0xff] %v494
          %527 = vst [vmem:[%s8 + $0xb0] sm:$0xff] %v495
          %528 = vst [vmem:[%s8 + $0xb8] sm:$0xff] %v496
          %529 = vst [vmem:[%s8 + $0xc0] sm:$0xff] %v497
          %530 = vst [vmem:[%s8 + $0xc8] sm:$0xff] %v498
          %531 = vst [vmem:[%s8 + $0xd0] sm:$0xff] %v499
          %532 = vst [vmem:[%s8 + $0xd8] sm:$0xff] %v500
          %533 = vst [vmem:[%s8 + $0xe0] sm:$0xff] %v501
          %534 = vst [vmem:[%s8 + $0xe8] sm:$0xff] %v502
          %535 = vst [vmem:[%s8 + $0xf0] sm:$0xff] %v503
          %536 = vst [vmem:[%s8 + $0xf8] sm:$0xff] %v504
          %537 = vst [vmem:[%s10] sm:$0xff] %v473
          %538 = vst [vmem:[%s10 + $0x8] sm:$0xff] %v474
          %539 = vst [vmem:[%s10 + $0x10] sm:$0xff] %v475
          %540 = vst [vmem:[%s10 + $0x18] sm:$0xff] %v476
          %541 = vst [vmem:[%s10 + $0x20] sm:$0xff] %v477
          %542 = vst [vmem:[%s10 + $0x28] sm:$0xff] %v478
          %543 = vst [vmem:[%s10 + $0x30] sm:$0xff] %v479
          %544 = vst [vmem:[%s10 + $0x38] sm:$0xff] %v480
          %545 = vst [vmem:[%s10 + $0x40] sm:$0xff] %v481
          %546 = vst [vmem:[%s10 + $0x48] sm:$0xff] %v482
          %547 = vst [vmem:[%s10 + $0x50] sm:$0xff] %v483
          %548 = vst [vmem:[%s10 + $0x58] sm:$0xff] %v484
          %549 = vst [vmem:[%s10 + $0x60] sm:$0xff] %v485
          %550 = vst [vmem:[%s10 + $0x68] sm:$0xff] %v486
          %551 = vst [vmem:[%s10 + $0x70] sm:$0xff] %v487
          %552 = vst [vmem:[%s10 + $0x78] sm:$0xff] %v488
          %553 = vst [vmem:[%s10 + $0x80] sm:$0xff] %v489
          %554 = vst [vmem:[%s10 + $0x88] sm:$0xff] %v490
          %555 = vst [vmem:[%s10 + $0x90] sm:$0xff] %v491
          %556 = vst [vmem:[%s10 + $0x98] sm:$0xff] %v492
          %557 = vst [vmem:[%s10 + $0xa0] sm:$0xff] %v493
          %558 = vst [vmem:[%s10 + $0xa8] sm:$0xff] %v494
          %559 = vst [vmem:[%s10 + $0xb0] sm:$0xff] %v495
          %560 = vst [vmem:[%s10 + $0xb8] sm:$0xff] %v496
          %561 = vst [vmem:[%s10 + $0xc0] sm:$0xff] %v497
          %562 = vst [vmem:[%s10 + $0xc8] sm:$0xff] %v498
          %563 = vst [vmem:[%s10 + $0xd0] sm:$0xff] %v499
          %564 = vst [vmem:[%s10 + $0xd8] sm:$0xff] %v500
          %565 = vst [vmem:[%s10 + $0xe0] sm:$0xff] %v501
          %566 = vst [vmem:[%s10 + $0xe8] sm:$0xff] %v502
          %567 = vst [vmem:[%s10 + $0xf0] sm:$0xff] %v503
          %568 = vst [vmem:[%s10 + $0xf8] sm:$0xff] %v504
          %v569 = vpack.c.bf16 %v473, %v473
          %v570 = vpack.c.bf16 %v474, %v474
          %v571 = vpack.c.bf16 %v475, %v475
          %v572 = vpack.c.bf16 %v476, %v476
          %v573 = vpack.c.bf16 %v477, %v477
          %v574 = vpack.c.bf16 %v478, %v478
          %v575 = vpack.c.bf16 %v479, %v479
          %v576 = vpack.c.bf16 %v480, %v480
          %v577 = vpack.c.bf16 %v481, %v481
          %v578 = vpack.c.bf16 %v482, %v482
          %v579 = vpack.c.bf16 %v483, %v483
          %v580 = vpack.c.bf16 %v484, %v484
          %v581 = vpack.c.bf16 %v485, %v485
          %v582 = vpack.c.bf16 %v486, %v486
          %v583 = vpack.c.bf16 %v487, %v487
          %v584 = vpack.c.bf16 %v488, %v488
          %v585 = vpack.c.bf16 %v489, %v489
          %v586 = vpack.c.bf16 %v490, %v490
          %v587 = vpack.c.bf16 %v491, %v491
          %v588 = vpack.c.bf16 %v492, %v492
          %v589 = vpack.c.bf16 %v493, %v493
          %v590 = vpack.c.bf16 %v494, %v494
          %v591 = vpack.c.bf16 %v495, %v495
          %v592 = vpack.c.bf16 %v496, %v496
          %v593 = vpack.c.bf16 %v497, %v497
          %v594 = vpack.c.bf16 %v498, %v498
          %v595 = vpack.c.bf16 %v499, %v499
          %v596 = vpack.c.bf16 %v500, %v500
          %v597 = vpack.c.bf16 %v501, %v501
          %v598 = vpack.c.bf16 %v502, %v502
          %v599 = vpack.c.bf16 %v503, %v503
          %v600 = vpack.c.bf16 %v504, %v504
          %601 = vst [vmem:[#allocation3] sm:$0xf] %v569
          %602 = vst [vmem:[#allocation3 + $0x4] sm:$0xf] %v570
          %603 = vst [vmem:[#allocation3 + $0x8] sm:$0xf] %v571
          %604 = vst [vmem:[#allocation3 + $0xc] sm:$0xf] %v572
          %605 = vst [vmem:[#allocation3 + $0x10] sm:$0xf] %v573
          %606 = vst [vmem:[#allocation3 + $0x14] sm:$0xf] %v574
          %607 = vst [vmem:[#allocation3 + $0x18] sm:$0xf] %v575
          %608 = vst [vmem:[#allocation3 + $0x1c] sm:$0xf] %v576
          %609 = vst [vmem:[#allocation3 + $0x20] sm:$0xf] %v577
          %610 = vst [vmem:[#allocation3 + $0x24] sm:$0xf] %v578
          %611 = vst [vmem:[#allocation3 + $0x28] sm:$0xf] %v579
          %612 = vst [vmem:[#allocation3 + $0x2c] sm:$0xf] %v580
          %613 = vst [vmem:[#allocation3 + $0x30] sm:$0xf] %v581
          %614 = vst [vmem:[#allocation3 + $0x34] sm:$0xf] %v582
          %615 = vst [vmem:[#allocation3 + $0x38] sm:$0xf] %v583
          %616 = vst [vmem:[#allocation3 + $0x3c] sm:$0xf] %v584
          %617 = vst [vmem:[#allocation3 + $0x40] sm:$0xf] %v585
          %618 = vst [vmem:[#allocation3 + $0x44] sm:$0xf] %v586
          %619 = vst [vmem:[#allocation3 + $0x48] sm:$0xf] %v587
          %620 = vst [vmem:[#allocation3 + $0x4c] sm:$0xf] %v588
          %621 = vst [vmem:[#allocation3 + $0x50] sm:$0xf] %v589
          %622 = vst [vmem:[#allocation3 + $0x54] sm:$0xf] %v590
          %623 = vst [vmem:[#allocation3 + $0x58] sm:$0xf] %v591
          %624 = vst [vmem:[#allocation3 + $0x5c] sm:$0xf] %v592
          %625 = vst [vmem:[#allocation3 + $0x60] sm:$0xf] %v593
          %626 = vst [vmem:[#allocation3 + $0x64] sm:$0xf] %v594
          %627 = vst [vmem:[#allocation3 + $0x68] sm:$0xf] %v595
          %628 = vst [vmem:[#allocation3 + $0x6c] sm:$0xf] %v596
          %629 = vst [vmem:[#allocation3 + $0x70] sm:$0xf] %v597
          %630 = vst [vmem:[#allocation3 + $0x74] sm:$0xf] %v598
          %631 = vst [vmem:[#allocation3 + $0x78] sm:$0xf] %v599
          %632 = vst [vmem:[#allocation3 + $0x7c] sm:$0xf] %v600
        $region93: #{lightgcl_forward.2} parent=84 // pred_fallthru
          _
        // Predicated region
        $region94: #{lightgcl_forward.2} parent=84 // pred_check
          %p633 = pneg %p467
        $region95: #{lightgcl_forward.2} parent=84 // pred_check_branch
          %635 = sbr.rel (%p633) target = $region97
        $region96: #{lightgcl_forward.2} parent=84 // pred_region
          %v636 = vld [vmem:[%s463] sm:$0xff]
          %v637 = vld [vmem:[%s463 + $0x8] sm:$0xff]
          %v638 = vld [vmem:[%s463 + $0x10] sm:$0xff]
          %v639 = vld [vmem:[%s463 + $0x18] sm:$0xff]
          %v640 = vld [vmem:[%s463 + $0x20] sm:$0xff]
          %v641 = vld [vmem:[%s463 + $0x28] sm:$0xff]
          %v642 = vld [vmem:[%s463 + $0x30] sm:$0xff]
          %v643 = vld [vmem:[%s463 + $0x38] sm:$0xff]
          %v644 = vld [vmem:[%s463 + $0x40] sm:$0xff]
          %v645 = vld [vmem:[%s463 + $0x48] sm:$0xff]
          %v646 = vld [vmem:[%s463 + $0x50] sm:$0xff]
          %v647 = vld [vmem:[%s463 + $0x58] sm:$0xff]
          %v648 = vld [vmem:[%s463 + $0x60] sm:$0xff]
          %v649 = vld [vmem:[%s463 + $0x68] sm:$0xff]
          %v650 = vld [vmem:[%s463 + $0x70] sm:$0xff]
          %v651 = vld [vmem:[%s463 + $0x78] sm:$0xff]
          %s652 = scalar_lea.vmem %s7, %s466
          %653 = vst [vmem:[%s652] sm:$0xff] %v636
          %654 = vst [vmem:[%s652 + $0x8] sm:$0xff] %v637
          %655 = vst [vmem:[%s652 + $0x10] sm:$0xff] %v638
          %656 = vst [vmem:[%s652 + $0x18] sm:$0xff] %v639
          %657 = vst [vmem:[%s652 + $0x20] sm:$0xff] %v640
          %658 = vst [vmem:[%s652 + $0x28] sm:$0xff] %v641
          %659 = vst [vmem:[%s652 + $0x30] sm:$0xff] %v642
          %660 = vst [vmem:[%s652 + $0x38] sm:$0xff] %v643
          %661 = vst [vmem:[%s652 + $0x40] sm:$0xff] %v644
          %662 = vst [vmem:[%s652 + $0x48] sm:$0xff] %v645
          %663 = vst [vmem:[%s652 + $0x50] sm:$0xff] %v646
          %664 = vst [vmem:[%s652 + $0x58] sm:$0xff] %v647
          %665 = vst [vmem:[%s652 + $0x60] sm:$0xff] %v648
          %666 = vst [vmem:[%s652 + $0x68] sm:$0xff] %v649
          %667 = vst [vmem:[%s652 + $0x70] sm:$0xff] %v650
          %668 = vst [vmem:[%s652 + $0x78] sm:$0xff] %v651
          %s669 = scalar_lea.vmem %s9, %s466
          %670 = vst [vmem:[%s669] sm:$0xff] %v636
          %671 = vst [vmem:[%s669 + $0x8] sm:$0xff] %v637
          %672 = vst [vmem:[%s669 + $0x10] sm:$0xff] %v638
          %673 = vst [vmem:[%s669 + $0x18] sm:$0xff] %v639
          %674 = vst [vmem:[%s669 + $0x20] sm:$0xff] %v640
          %675 = vst [vmem:[%s669 + $0x28] sm:$0xff] %v641
          %676 = vst [vmem:[%s669 + $0x30] sm:$0xff] %v642
          %677 = vst [vmem:[%s669 + $0x38] sm:$0xff] %v643
          %678 = vst [vmem:[%s669 + $0x40] sm:$0xff] %v644
          %679 = vst [vmem:[%s669 + $0x48] sm:$0xff] %v645
          %680 = vst [vmem:[%s669 + $0x50] sm:$0xff] %v646
          %681 = vst [vmem:[%s669 + $0x58] sm:$0xff] %v647
          %682 = vst [vmem:[%s669 + $0x60] sm:$0xff] %v648
          %683 = vst [vmem:[%s669 + $0x68] sm:$0xff] %v649
          %684 = vst [vmem:[%s669 + $0x70] sm:$0xff] %v650
          %685 = vst [vmem:[%s669 + $0x78] sm:$0xff] %v651
          %v686 = vpack.c.bf16 %v636, %v636
          %v687 = vpack.c.bf16 %v637, %v637
          %v688 = vpack.c.bf16 %v638, %v638
          %v689 = vpack.c.bf16 %v639, %v639
          %v690 = vpack.c.bf16 %v640, %v640
          %v691 = vpack.c.bf16 %v641, %v641
          %v692 = vpack.c.bf16 %v642, %v642
          %v693 = vpack.c.bf16 %v643, %v643
          %v694 = vpack.c.bf16 %v644, %v644
          %v695 = vpack.c.bf16 %v645, %v645
          %v696 = vpack.c.bf16 %v646, %v646
          %v697 = vpack.c.bf16 %v647, %v647
          %v698 = vpack.c.bf16 %v648, %v648
          %v699 = vpack.c.bf16 %v649, %v649
          %v700 = vpack.c.bf16 %v650, %v650
          %v701 = vpack.c.bf16 %v651, %v651
          %s702 = sshra.s32 %s466, 3
          %s703 = sand.u32 %s466, 7
          %s704 = smul.addr %s702, 4
          %s705 = scalar_lea.vmem [#allocation2], %s704
          %706 = vst [vmem:[%s705] sm:$0xf] %v686
          %707 = vst [vmem:[%s705 + $0x4] sm:$0xf] %v687
          %708 = vst [vmem:[%s705 + $0x8] sm:$0xf] %v688
          %709 = vst [vmem:[%s705 + $0xc] sm:$0xf] %v689
          %710 = vst [vmem:[%s705 + $0x10] sm:$0xf] %v690
          %711 = vst [vmem:[%s705 + $0x14] sm:$0xf] %v691
          %712 = vst [vmem:[%s705 + $0x18] sm:$0xf] %v692
          %713 = vst [vmem:[%s705 + $0x1c] sm:$0xf] %v693
          %714 = vst [vmem:[%s705 + $0x20] sm:$0xf] %v694
          %715 = vst [vmem:[%s705 + $0x24] sm:$0xf] %v695
          %716 = vst [vmem:[%s705 + $0x28] sm:$0xf] %v696
          %717 = vst [vmem:[%s705 + $0x2c] sm:$0xf] %v697
          %718 = vst [vmem:[%s705 + $0x30] sm:$0xf] %v698
          %719 = vst [vmem:[%s705 + $0x34] sm:$0xf] %v699
          %720 = vst [vmem:[%s705 + $0x38] sm:$0xf] %v700
          %721 = vst [vmem:[%s705 + $0x3c] sm:$0xf] %v701
        $region97: #{lightgcl_forward.2} parent=84 // pred_fallthru
          _
        // Predicated region
        $region98: #{lightgcl_forward.2} parent=84 // pred_check
          %p722 = pneg %p468
        $region99: #{lightgcl_forward.2} parent=84 // pred_check_branch
          %724 = sbr.rel (%p722) target = $region101
        $region100: #{lightgcl_forward.2} parent=84 // pred_region
          %v725 = vld [vmem:[%s3] sm:$0xff]
          %v726 = vld [vmem:[%s3 + $0x8] sm:$0xff]
          %v727 = vld [vmem:[#allocation3] sm:$0xf]
          %v728 = vld [vmem:[#allocation3 + $0x4] sm:$0xf]
          %v729 = vld [vmem:[#allocation3 + $0x8] sm:$0xf]
          %v730 = vld [vmem:[#allocation3 + $0xc] sm:$0xf]
          %v731 = vld [vmem:[#allocation3 + $0x10] sm:$0xf]
          %v732 = vld [vmem:[#allocation3 + $0x14] sm:$0xf]
          %v733 = vld [vmem:[#allocation3 + $0x18] sm:$0xf]
          %v734 = vld [vmem:[#allocation3 + $0x1c] sm:$0xf]
          %v735 = vld [vmem:[#allocation3 + $0x20] sm:$0xf]
          %v736 = vld [vmem:[#allocation3 + $0x24] sm:$0xf]
          %v737 = vld [vmem:[#allocation3 + $0x28] sm:$0xf]
          %v738 = vld [vmem:[#allocation3 + $0x2c] sm:$0xf]
          %v739 = vld [vmem:[#allocation3 + $0x30] sm:$0xf]
          %v740 = vld [vmem:[#allocation3 + $0x34] sm:$0xf]
          %v741 = vld [vmem:[#allocation3 + $0x38] sm:$0xf]
          %v742 = vld [vmem:[#allocation3 + $0x3c] sm:$0xf]
          %v743 = vld [vmem:[#allocation3 + $0x40] sm:$0xf]
          %v744 = vld [vmem:[#allocation3 + $0x44] sm:$0xf]
          %v745 = vld [vmem:[#allocation3 + $0x48] sm:$0xf]
          %v746 = vld [vmem:[#allocation3 + $0x4c] sm:$0xf]
          %v747 = vld [vmem:[#allocation3 + $0x50] sm:$0xf]
          %v748 = vld [vmem:[#allocation3 + $0x54] sm:$0xf]
          %v749 = vld [vmem:[#allocation3 + $0x58] sm:$0xf]
          %v750 = vld [vmem:[#allocation3 + $0x5c] sm:$0xf]
          %v751 = vld [vmem:[#allocation3 + $0x60] sm:$0xf]
          %v752 = vld [vmem:[#allocation3 + $0x64] sm:$0xf]
          %v753 = vld [vmem:[#allocation3 + $0x68] sm:$0xf]
          %v754 = vld [vmem:[#allocation3 + $0x6c] sm:$0xf]
          %v755 = vld [vmem:[#allocation3 + $0x70] sm:$0xf]
          %v756 = vld [vmem:[#allocation3 + $0x74] sm:$0xf]
          %v757 = vld [vmem:[#allocation3 + $0x78] sm:$0xf]
          %v758 = vld [vmem:[#allocation3 + $0x7c] sm:$0xf]
          %v761 = vunpack.c.l.b16 %v725
          %v762 = vunpack.c.h.b16 %v725
          %v763 = vunpack.c.l.b16 %v726
          %v764 = vunpack.c.h.b16 %v726
          %v765 = vpack.c.b16 %v763, %v761
          %v766 = vpack.c.b16 %v764, %v762
          %v801 = vunpack.c.l.b16 %v727
          %v802 = vunpack.c.l.b16 %v728
          %v803 = vunpack.c.l.b16 %v729
          %v804 = vunpack.c.l.b16 %v730
          %v805 = vunpack.c.l.b16 %v731
          %v806 = vunpack.c.l.b16 %v732
          %v807 = vunpack.c.l.b16 %v733
          %v808 = vunpack.c.l.b16 %v734
          %v809 = vunpack.c.l.b16 %v735
          %v810 = vunpack.c.l.b16 %v736
          %v811 = vunpack.c.l.b16 %v737
          %v812 = vunpack.c.l.b16 %v738
          %v813 = vunpack.c.l.b16 %v739
          %v814 = vunpack.c.l.b16 %v740
          %v815 = vunpack.c.l.b16 %v741
          %v816 = vunpack.c.l.b16 %v742
          %v817 = vunpack.c.l.b16 %v743
          %v818 = vunpack.c.l.b16 %v744
          %v819 = vunpack.c.l.b16 %v745
          %v820 = vunpack.c.l.b16 %v746
          %v821 = vunpack.c.l.b16 %v747
          %v822 = vunpack.c.l.b16 %v748
          %v823 = vunpack.c.l.b16 %v749
          %v824 = vunpack.c.l.b16 %v750
          %v825 = vunpack.c.l.b16 %v751
          %v826 = vunpack.c.l.b16 %v752
          %v827 = vunpack.c.l.b16 %v753
          %v828 = vunpack.c.l.b16 %v754
          %v829 = vunpack.c.l.b16 %v755
          %v830 = vunpack.c.l.b16 %v756
          %v831 = vunpack.c.l.b16 %v757
          %v832 = vunpack.c.l.b16 %v758
          %v833 = vpack.c.b16 %v802, %v801
          %v834 = vpack.c.b16 %v804, %v803
          %v835 = vpack.c.b16 %v806, %v805
          %v836 = vpack.c.b16 %v808, %v807
          %v837 = vpack.c.b16 %v810, %v809
          %v838 = vpack.c.b16 %v812, %v811
          %v839 = vpack.c.b16 %v814, %v813
          %v840 = vpack.c.b16 %v816, %v815
          %v841 = vpack.c.b16 %v818, %v817
          %v842 = vpack.c.b16 %v820, %v819
          %v843 = vpack.c.b16 %v822, %v821
          %v844 = vpack.c.b16 %v824, %v823
          %v845 = vpack.c.b16 %v826, %v825
          %v846 = vpack.c.b16 %v828, %v827
          %v847 = vpack.c.b16 %v830, %v829
          %v848 = vpack.c.b16 %v832, %v831
          %865 = vmatpush.bf16.msra.mxu0 %v840
          %866 = vmatpush.bf16.msra.mxu0 %v839
          %867 = vmatpush.bf16.msra.mxu0 %v838
          %868 = vmatpush.bf16.msra.mxu0 %v837
          %869 = vmatpush.bf16.msra.mxu0 %v836
          %870 = vmatpush.bf16.msra.mxu0 %v835
          %871 = vmatpush.bf16.msra.mxu0 %v834
          %872 = vmatpush.bf16.msra.mxu0 %v833
          %873 = vmatmul.bf16.gmra.mxu0 %v765
          %v874 = vpop.f32.mrf.mxu0
          %v875 = vadd.f32 0.0, %v874
          %v876 = vpop.f32.mrf.mxu0
          %v877 = vadd.f32 0.0, %v876
          %878 = vdwg.mxu0
          %879 = vmatpush.bf16.msra.mxu0 %v848
          %880 = vmatpush.bf16.msra.mxu0 %v847
          %881 = vmatpush.bf16.msra.mxu0 %v846
          %882 = vmatpush.bf16.msra.mxu0 %v845
          %883 = vmatpush.bf16.msra.mxu0 %v844
          %884 = vmatpush.bf16.msra.mxu0 %v843
          %885 = vmatpush.bf16.msra.mxu0 %v842
          %886 = vmatpush.bf16.msra.mxu0 %v841
          %887 = vmatmul.bf16.gmra.mxu0 %v766
          %v888 = vpop.f32.mrf.mxu0
          %v889 = vadd.f32 %v875, %v888
          %v890 = vpop.f32.mrf.mxu0
          %v891 = vadd.f32 %v877, %v890
          %892 = vdwg.mxu0
          %893 = vst [vmem:[#allocation6] sm:$0xff] %v889
          %894 = vst [vmem:[#allocation6 + $0x8] sm:$0xff] %v891
          %895 = vst [vmem:[#allocation4] sm:$0xff] 0.0
          %896 = vst [vmem:[#allocation4 + $0x8] sm:$0xff] 0.0
          %897 = vst [vmem:[#allocation4 + $0x10] sm:$0xff] 0.0
          %898 = vst [vmem:[#allocation4 + $0x18] sm:$0xff] 0.0
          %899 = vst [vmem:[#allocation4 + $0x20] sm:$0xff] 0.0
          %900 = vst [vmem:[#allocation4 + $0x28] sm:$0xff] 0.0
          %901 = vst [vmem:[#allocation4 + $0x30] sm:$0xff] 0.0
          %902 = vst [vmem:[#allocation4 + $0x38] sm:$0xff] 0.0
          %903 = vst [vmem:[#allocation4 + $0x40] sm:$0xff] 0.0
          %904 = vst [vmem:[#allocation4 + $0x48] sm:$0xff] 0.0
          %905 = vst [vmem:[#allocation4 + $0x50] sm:$0xff] 0.0
          %906 = vst [vmem:[#allocation4 + $0x58] sm:$0xff] 0.0
          %907 = vst [vmem:[#allocation4 + $0x60] sm:$0xff] 0.0
          %908 = vst [vmem:[#allocation4 + $0x68] sm:$0xff] 0.0
          %909 = vst [vmem:[#allocation4 + $0x70] sm:$0xff] 0.0
          %910 = vst [vmem:[#allocation4 + $0x78] sm:$0xff] 0.0
          %911 = vst [vmem:[#allocation4 + $0x80] sm:$0xff] 0.0
          %912 = vst [vmem:[#allocation4 + $0x88] sm:$0xff] 0.0
          %913 = vst [vmem:[#allocation4 + $0x90] sm:$0xff] 0.0
          %914 = vst [vmem:[#allocation4 + $0x98] sm:$0xff] 0.0
          %915 = vst [vmem:[#allocation4 + $0xa0] sm:$0xff] 0.0
          %916 = vst [vmem:[#allocation4 + $0xa8] sm:$0xff] 0.0
          %917 = vst [vmem:[#allocation4 + $0xb0] sm:$0xff] 0.0
          %918 = vst [vmem:[#allocation4 + $0xb8] sm:$0xff] 0.0
          %919 = vst [vmem:[#allocation4 + $0xc0] sm:$0xff] 0.0
          %920 = vst [vmem:[#allocation4 + $0xc8] sm:$0xff] 0.0
          %921 = vst [vmem:[#allocation4 + $0xd0] sm:$0xff] 0.0
          %922 = vst [vmem:[#allocation4 + $0xd8] sm:$0xff] 0.0
          %923 = vst [vmem:[#allocation4 + $0xe0] sm:$0xff] 0.0
          %924 = vst [vmem:[#allocation4 + $0xe8] sm:$0xff] 0.0
          %925 = vst [vmem:[#allocation4 + $0xf0] sm:$0xff] 0.0
          %926 = vst [vmem:[#allocation4 + $0xf8] sm:$0xff] 0.0
          %927 = vst [vmem:[#allocation5] sm:$0xff] 0.0
          %928 = vst [vmem:[#allocation5 + $0x8] sm:$0xff] 0.0
        $region101: #{lightgcl_forward.2} parent=84 // pred_fallthru
          _
        %v929 = vld [vmem:[%s451] sm:$0xff]
        %v930 = vld [vmem:[%s451 + $0x8] sm:$0xff]
        %v931 = vld [vmem:[%s451 + $0x10] sm:$0xff]
        %v932 = vld [vmem:[%s451 + $0x18] sm:$0xff]
        %v933 = vld [vmem:[%s451 + $0x20] sm:$0xff]
        %v934 = vld [vmem:[%s451 + $0x28] sm:$0xff]
        %v935 = vld [vmem:[%s451 + $0x30] sm:$0xff]
        %v936 = vld [vmem:[%s451 + $0x38] sm:$0xff]
        %v937 = vld [vmem:[%s451 + $0x40] sm:$0xff]
        %v938 = vld [vmem:[%s451 + $0x48] sm:$0xff]
        %v939 = vld [vmem:[%s451 + $0x50] sm:$0xff]
        %v940 = vld [vmem:[%s451 + $0x58] sm:$0xff]
        %v941 = vld [vmem:[%s451 + $0x60] sm:$0xff]
        %v942 = vld [vmem:[%s451 + $0x68] sm:$0xff]
        %v943 = vld [vmem:[%s451 + $0x70] sm:$0xff]
        %v944 = vld [vmem:[%s451 + $0x78] sm:$0xff]
        %s945 = sshra.s32 %s466, 3
        %s946 = sand.u32 %s466, 7
        %s947 = smul.addr %s945, 4
        %s948 = scalar_lea.vmem [#allocation2], %s947
        %v949 = vld [vmem:[%s948] sm:$0xf]
        %v950 = vld [vmem:[%s948 + $0x4] sm:$0xf]
        %v951 = vld [vmem:[%s948 + $0x8] sm:$0xf]
        %v952 = vld [vmem:[%s948 + $0xc] sm:$0xf]
        %v953 = vld [vmem:[%s948 + $0x10] sm:$0xf]
        %v954 = vld [vmem:[%s948 + $0x14] sm:$0xf]
        %v955 = vld [vmem:[%s948 + $0x18] sm:$0xf]
        %v956 = vld [vmem:[%s948 + $0x1c] sm:$0xf]
        %v957 = vld [vmem:[%s948 + $0x20] sm:$0xf]
        %v958 = vld [vmem:[%s948 + $0x24] sm:$0xf]
        %v959 = vld [vmem:[%s948 + $0x28] sm:$0xf]
        %v960 = vld [vmem:[%s948 + $0x2c] sm:$0xf]
        %v961 = vld [vmem:[%s948 + $0x30] sm:$0xf]
        %v962 = vld [vmem:[%s948 + $0x34] sm:$0xf]
        %v963 = vld [vmem:[%s948 + $0x38] sm:$0xf]
        %v964 = vld [vmem:[%s948 + $0x3c] sm:$0xf]
        %v965 = vld [vmem:[#allocation3] sm:$0xf]
        %v966 = vld [vmem:[#allocation3 + $0x4] sm:$0xf]
        %v967 = vld [vmem:[#allocation3 + $0x8] sm:$0xf]
        %v968 = vld [vmem:[#allocation3 + $0xc] sm:$0xf]
        %v969 = vld [vmem:[#allocation3 + $0x10] sm:$0xf]
        %v970 = vld [vmem:[#allocation3 + $0x14] sm:$0xf]
        %v971 = vld [vmem:[#allocation3 + $0x18] sm:$0xf]
        %v972 = vld [vmem:[#allocation3 + $0x1c] sm:$0xf]
        %v973 = vld [vmem:[#allocation3 + $0x20] sm:$0xf]
        %v974 = vld [vmem:[#allocation3 + $0x24] sm:$0xf]
        %v975 = vld [vmem:[#allocation3 + $0x28] sm:$0xf]
        %v976 = vld [vmem:[#allocation3 + $0x2c] sm:$0xf]
        %v977 = vld [vmem:[#allocation3 + $0x30] sm:$0xf]
        %v978 = vld [vmem:[#allocation3 + $0x34] sm:$0xf]
        %v979 = vld [vmem:[#allocation3 + $0x38] sm:$0xf]
        %v980 = vld [vmem:[#allocation3 + $0x3c] sm:$0xf]
        %v981 = vld [vmem:[#allocation3 + $0x40] sm:$0xf]
        %v982 = vld [vmem:[#allocation3 + $0x44] sm:$0xf]
        %v983 = vld [vmem:[#allocation3 + $0x48] sm:$0xf]
        %v984 = vld [vmem:[#allocation3 + $0x4c] sm:$0xf]
        %v985 = vld [vmem:[#allocation3 + $0x50] sm:$0xf]
        %v986 = vld [vmem:[#allocation3 + $0x54] sm:$0xf]
        %v987 = vld [vmem:[#allocation3 + $0x58] sm:$0xf]
        %v988 = vld [vmem:[#allocation3 + $0x5c] sm:$0xf]
        %v989 = vld [vmem:[#allocation3 + $0x60] sm:$0xf]
        %v990 = vld [vmem:[#allocation3 + $0x64] sm:$0xf]
        %v991 = vld [vmem:[#allocation3 + $0x68] sm:$0xf]
        %v992 = vld [vmem:[#allocation3 + $0x6c] sm:$0xf]
        %v993 = vld [vmem:[#allocation3 + $0x70] sm:$0xf]
        %v994 = vld [vmem:[#allocation3 + $0x74] sm:$0xf]
        %v995 = vld [vmem:[#allocation3 + $0x78] sm:$0xf]
        %v996 = vld [vmem:[#allocation3 + $0x7c] sm:$0xf]
        %v1013 = vunpack.c.l.b16 %v929
        %v1014 = vunpack.c.h.b16 %v929
        %v1015 = vunpack.c.l.b16 %v930
        %v1016 = vunpack.c.h.b16 %v930
        %v1017 = vunpack.c.l.b16 %v931
        %v1018 = vunpack.c.h.b16 %v931
        %v1019 = vunpack.c.l.b16 %v932
        %v1020 = vunpack.c.h.b16 %v932
        %v1021 = vunpack.c.l.b16 %v933
        %v1022 = vunpack.c.h.b16 %v933
        %v1023 = vunpack.c.l.b16 %v934
        %v1024 = vunpack.c.h.b16 %v934
        %v1025 = vunpack.c.l.b16 %v935
        %v1026 = vunpack.c.h.b16 %v935
        %v1027 = vunpack.c.l.b16 %v936
        %v1028 = vunpack.c.h.b16 %v936
        %v1029 = vunpack.c.l.b16 %v937
        %v1030 = vunpack.c.h.b16 %v937
        %v1031 = vunpack.c.l.b16 %v938
        %v1032 = vunpack.c.h.b16 %v938
        %v1033 = vunpack.c.l.b16 %v939
        %v1034 = vunpack.c.h.b16 %v939
        %v1035 = vunpack.c.l.b16 %v940
        %v1036 = vunpack.c.h.b16 %v940
        %v1037 = vunpack.c.l.b16 %v941
        %v1038 = vunpack.c.h.b16 %v941
        %v1039 = vunpack.c.l.b16 %v942
        %v1040 = vunpack.c.h.b16 %v942
        %v1041 = vunpack.c.l.b16 %v943
        %v1042 = vunpack.c.h.b16 %v943
        %v1043 = vunpack.c.l.b16 %v944
        %v1044 = vunpack.c.h.b16 %v944
        %v1045 = vpack.c.b16 %v1015, %v1013
        %v1046 = vpack.c.b16 %v1016, %v1014
        %v1047 = vpack.c.b16 %v1019, %v1017
        %v1048 = vpack.c.b16 %v1020, %v1018
        %v1049 = vpack.c.b16 %v1023, %v1021
        %v1050 = vpack.c.b16 %v1024, %v1022
        %v1051 = vpack.c.b16 %v1027, %v1025
        %v1052 = vpack.c.b16 %v1028, %v1026
        %v1053 = vpack.c.b16 %v1031, %v1029
        %v1054 = vpack.c.b16 %v1032, %v1030
        %v1055 = vpack.c.b16 %v1035, %v1033
        %v1056 = vpack.c.b16 %v1036, %v1034
        %v1057 = vpack.c.b16 %v1039, %v1037
        %v1058 = vpack.c.b16 %v1040, %v1038
        %v1059 = vpack.c.b16 %v1043, %v1041
        %v1060 = vpack.c.b16 %v1044, %v1042
        %v1109 = vunpack.c.l.b16 %v965
        %v1110 = vunpack.c.l.b16 %v966
        %v1111 = vunpack.c.l.b16 %v967
        %v1112 = vunpack.c.l.b16 %v968
        %v1113 = vunpack.c.l.b16 %v969
        %v1114 = vunpack.c.l.b16 %v970
        %v1115 = vunpack.c.l.b16 %v971
        %v1116 = vunpack.c.l.b16 %v972
        %v1117 = vunpack.c.l.b16 %v973
        %v1118 = vunpack.c.l.b16 %v974
        %v1119 = vunpack.c.l.b16 %v975
        %v1120 = vunpack.c.l.b16 %v976
        %v1121 = vunpack.c.l.b16 %v977
        %v1122 = vunpack.c.l.b16 %v978
        %v1123 = vunpack.c.l.b16 %v979
        %v1124 = vunpack.c.l.b16 %v980
        %v1125 = vunpack.c.l.b16 %v981
        %v1126 = vunpack.c.l.b16 %v982
        %v1127 = vunpack.c.l.b16 %v983
        %v1128 = vunpack.c.l.b16 %v984
        %v1129 = vunpack.c.l.b16 %v985
        %v1130 = vunpack.c.l.b16 %v986
        %v1131 = vunpack.c.l.b16 %v987
        %v1132 = vunpack.c.l.b16 %v988
        %v1133 = vunpack.c.l.b16 %v989
        %v1134 = vunpack.c.l.b16 %v990
        %v1135 = vunpack.c.l.b16 %v991
        %v1136 = vunpack.c.l.b16 %v992
        %v1137 = vunpack.c.l.b16 %v993
        %v1138 = vunpack.c.l.b16 %v994
        %v1139 = vunpack.c.l.b16 %v995
        %v1140 = vunpack.c.l.b16 %v996
        %v1141 = vpack.c.b16 %v1110, %v1109
        %v1142 = vpack.c.b16 %v1112, %v1111
        %v1143 = vpack.c.b16 %v1114, %v1113
        %v1144 = vpack.c.b16 %v1116, %v1115
        %v1145 = vpack.c.b16 %v1118, %v1117
        %v1146 = vpack.c.b16 %v1120, %v1119
        %v1147 = vpack.c.b16 %v1122, %v1121
        %v1148 = vpack.c.b16 %v1124, %v1123
        %v1149 = vpack.c.b16 %v1126, %v1125
        %v1150 = vpack.c.b16 %v1128, %v1127
        %v1151 = vpack.c.b16 %v1130, %v1129
        %v1152 = vpack.c.b16 %v1132, %v1131
        %v1153 = vpack.c.b16 %v1134, %v1133
        %v1154 = vpack.c.b16 %v1136, %v1135
        %v1155 = vpack.c.b16 %v1138, %v1137
        %v1156 = vpack.c.b16 %v1140, %v1139
        %1173 = vmatpush.bf16.msra.mxu0 %v1148
        %1174 = vmatpush.bf16.msra.mxu0 %v1147
        %1175 = vmatpush.bf16.msra.mxu0 %v1146
        %1176 = vmatpush.bf16.msra.mxu0 %v1145
        %1177 = vmatpush.bf16.msra.mxu0 %v1144
        %1178 = vmatpush.bf16.msra.mxu0 %v1143
        %1179 = vmatpush.bf16.msra.mxu0 %v1142
        %1180 = vmatpush.bf16.msra.mxu0 %v1141
        %1181 = vmatmul.bf16.gmra.mxu0 %v1045
        %v1182 = vpop.f32.mrf.mxu0
        %v1183 = vadd.f32 0.0, %v1182
        %v1184 = vpop.f32.mrf.mxu0
        %v1185 = vadd.f32 0.0, %v1184
        %1186 = vmatmul.bf16.gmra.mxu0 %v1047
        %v1187 = vpop.f32.mrf.mxu0
        %v1188 = vadd.f32 0.0, %v1187
        %v1189 = vpop.f32.mrf.mxu0
        %v1190 = vadd.f32 0.0, %v1189
        %1191 = vmatmul.bf16.gmra.mxu0 %v1049
        %v1192 = vpop.f32.mrf.mxu0
        %v1193 = vadd.f32 0.0, %v1192
        %v1194 = vpop.f32.mrf.mxu0
        %v1195 = vadd.f32 0.0, %v1194
        %1196 = vmatmul.bf16.gmra.mxu0 %v1051
        %v1197 = vpop.f32.mrf.mxu0
        %v1198 = vadd.f32 0.0, %v1197
        %v1199 = vpop.f32.mrf.mxu0
        %v1200 = vadd.f32 0.0, %v1199
        %1201 = vmatmul.bf16.gmra.mxu0 %v1053
        %v1202 = vpop.f32.mrf.mxu0
        %v1203 = vadd.f32 0.0, %v1202
        %v1204 = vpop.f32.mrf.mxu0
        %v1205 = vadd.f32 0.0, %v1204
        %1206 = vmatmul.bf16.gmra.mxu0 %v1055
        %v1207 = vpop.f32.mrf.mxu0
        %v1208 = vadd.f32 0.0, %v1207
        %v1209 = vpop.f32.mrf.mxu0
        %v1210 = vadd.f32 0.0, %v1209
        %1211 = vmatmul.bf16.gmra.mxu0 %v1057
        %v1212 = vpop.f32.mrf.mxu0
        %v1213 = vadd.f32 0.0, %v1212
        %v1214 = vpop.f32.mrf.mxu0
        %v1215 = vadd.f32 0.0, %v1214
        %1216 = vmatmul.bf16.gmra.mxu0 %v1059
        %v1217 = vpop.f32.mrf.mxu0
        %v1218 = vadd.f32 0.0, %v1217
        %v1219 = vpop.f32.mrf.mxu0
        %v1220 = vadd.f32 0.0, %v1219
        %1221 = vdwg.mxu0
        %1222 = vmatpush.bf16.msra.mxu0 %v1156
        %1223 = vmatpush.bf16.msra.mxu0 %v1155
        %1224 = vmatpush.bf16.msra.mxu0 %v1154
        %1225 = vmatpush.bf16.msra.mxu0 %v1153
        %1226 = vmatpush.bf16.msra.mxu0 %v1152
        %1227 = vmatpush.bf16.msra.mxu0 %v1151
        %1228 = vmatpush.bf16.msra.mxu0 %v1150
        %1229 = vmatpush.bf16.msra.mxu0 %v1149
        %1230 = vmatmul.bf16.gmra.mxu0 %v1046
        %v1231 = vpop.f32.mrf.mxu0
        %v1232 = vadd.f32 %v1183, %v1231
        %v1233 = vpop.f32.mrf.mxu0
        %v1234 = vadd.f32 %v1185, %v1233
        %1235 = vmatmul.bf16.gmra.mxu0 %v1048
        %v1236 = vpop.f32.mrf.mxu0
        %v1237 = vadd.f32 %v1188, %v1236
        %v1238 = vpop.f32.mrf.mxu0
        %v1239 = vadd.f32 %v1190, %v1238
        %1240 = vmatmul.bf16.gmra.mxu0 %v1050
        %v1241 = vpop.f32.mrf.mxu0
        %v1242 = vadd.f32 %v1193, %v1241
        %v1243 = vpop.f32.mrf.mxu0
        %v1244 = vadd.f32 %v1195, %v1243
        %1245 = vmatmul.bf16.gmra.mxu0 %v1052
        %v1246 = vpop.f32.mrf.mxu0
        %v1247 = vadd.f32 %v1198, %v1246
        %v1248 = vpop.f32.mrf.mxu0
        %v1249 = vadd.f32 %v1200, %v1248
        %1250 = vmatmul.bf16.gmra.mxu0 %v1054
        %v1251 = vpop.f32.mrf.mxu0
        %v1252 = vadd.f32 %v1203, %v1251
        %v1253 = vpop.f32.mrf.mxu0
        %v1254 = vadd.f32 %v1205, %v1253
        %1255 = vmatmul.bf16.gmra.mxu0 %v1056
        %v1256 = vpop.f32.mrf.mxu0
        %v1257 = vadd.f32 %v1208, %v1256
        %v1258 = vpop.f32.mrf.mxu0
        %v1259 = vadd.f32 %v1210, %v1258
        %1260 = vmatmul.bf16.gmra.mxu0 %v1058
        %v1261 = vpop.f32.mrf.mxu0
        %v1262 = vadd.f32 %v1213, %v1261
        %v1263 = vpop.f32.mrf.mxu0
        %v1264 = vadd.f32 %v1215, %v1263
        %1265 = vmatmul.bf16.gmra.mxu0 %v1060
        %v1266 = vpop.f32.mrf.mxu0
        %v1267 = vadd.f32 %v1218, %v1266
        %v1268 = vpop.f32.mrf.mxu0
        %v1269 = vadd.f32 %v1220, %v1268
        %1270 = vdwg.mxu0
        %v1271 = vld [vmem:[#allocation4] sm:$0xff]
        %v1272 = vld [vmem:[#allocation4 + $0x8] sm:$0xff]
        %v1273 = vld [vmem:[#allocation4 + $0x10] sm:$0xff]
        %v1274 = vld [vmem:[#allocation4 + $0x18] sm:$0xff]
        %v1275 = vld [vmem:[#allocation4 + $0x20] sm:$0xff]
        %v1276 = vld [vmem:[#allocation4 + $0x28] sm:$0xff]
        %v1277 = vld [vmem:[#allocation4 + $0x30] sm:$0xff]
        %v1278 = vld [vmem:[#allocation4 + $0x38] sm:$0xff]
        %v1279 = vld [vmem:[#allocation4 + $0x40] sm:$0xff]
        %v1280 = vld [vmem:[#allocation4 + $0x48] sm:$0xff]
        %v1281 = vld [vmem:[#allocation4 + $0x50] sm:$0xff]
        %v1282 = vld [vmem:[#allocation4 + $0x58] sm:$0xff]
        %v1283 = vld [vmem:[#allocation4 + $0x60] sm:$0xff]
        %v1284 = vld [vmem:[#allocation4 + $0x68] sm:$0xff]
        %v1285 = vld [vmem:[#allocation4 + $0x70] sm:$0xff]
        %v1286 = vld [vmem:[#allocation4 + $0x78] sm:$0xff]
        %v1287 = vld [vmem:[#allocation4 + $0x80] sm:$0xff]
        %v1288 = vld [vmem:[#allocation4 + $0x88] sm:$0xff]
        %v1289 = vld [vmem:[#allocation4 + $0x90] sm:$0xff]
        %v1290 = vld [vmem:[#allocation4 + $0x98] sm:$0xff]
        %v1291 = vld [vmem:[#allocation4 + $0xa0] sm:$0xff]
        %v1292 = vld [vmem:[#allocation4 + $0xa8] sm:$0xff]
        %v1293 = vld [vmem:[#allocation4 + $0xb0] sm:$0xff]
        %v1294 = vld [vmem:[#allocation4 + $0xb8] sm:$0xff]
        %v1295 = vld [vmem:[#allocation4 + $0xc0] sm:$0xff]
        %v1296 = vld [vmem:[#allocation4 + $0xc8] sm:$0xff]
        %v1297 = vld [vmem:[#allocation4 + $0xd0] sm:$0xff]
        %v1298 = vld [vmem:[#allocation4 + $0xd8] sm:$0xff]
        %v1299 = vld [vmem:[#allocation4 + $0xe0] sm:$0xff]
        %v1300 = vld [vmem:[#allocation4 + $0xe8] sm:$0xff]
        %v1301 = vld [vmem:[#allocation4 + $0xf0] sm:$0xff]
        %v1302 = vld [vmem:[#allocation4 + $0xf8] sm:$0xff]
        %v1319 = vunpack.c.l.b16 %v949
        %v1320 = vunpack.c.l.b16 %v950
        %v1321 = vunpack.c.l.b16 %v951
        %v1322 = vunpack.c.l.b16 %v952
        %v1323 = vunpack.c.l.b16 %v953
        %v1324 = vunpack.c.l.b16 %v954
        %v1325 = vunpack.c.l.b16 %v955
        %v1326 = vunpack.c.l.b16 %v956
        %v1327 = vunpack.c.l.b16 %v957
        %v1328 = vunpack.c.l.b16 %v958
        %v1329 = vunpack.c.l.b16 %v959
        %v1330 = vunpack.c.l.b16 %v960
        %v1331 = vunpack.c.l.b16 %v961
        %v1332 = vunpack.c.l.b16 %v962
        %v1333 = vunpack.c.l.b16 %v963
        %v1334 = vunpack.c.l.b16 %v964
        %v1335 = vpack.c.b16 %v1320, %v1319
        %v1336 = vpack.c.b16 %v1322, %v1321
        %v1337 = vpack.c.b16 %v1324, %v1323
        %v1338 = vpack.c.b16 %v1326, %v1325
        %v1339 = vpack.c.b16 %v1328, %v1327
        %v1340 = vpack.c.b16 %v1330, %v1329
        %v1341 = vpack.c.b16 %v1332, %v1331
        %v1342 = vpack.c.b16 %v1334, %v1333
        %1351 = vxpose.xlu0.c.b16.start [1/8] %v1335, 128
        %1352 = vxpose.xlu0.c.b16.cont [2/8] %v1336, 128
        %1353 = vxpose.xlu0.c.b16.cont [3/8] %v1337, 128
        %1354 = vxpose.xlu0.c.b16.cont [4/8] %v1338, 128
        %1355 = vxpose.xlu0.c.b16.cont [5/8] %v1339, 128
        %1356 = vxpose.xlu0.c.b16.cont [6/8] %v1340, 128
        %1357 = vxpose.xlu0.c.b16.cont [7/8] %v1341, 128
        %1358 = vxpose.xlu0.c.b16.end [8/8] %v1342, 128
        %v1359 = vpop.trf.xlu0
        %v1360 = vpop.trf.xlu0
        %v1361 = vpop.trf.xlu0
        %v1362 = vpop.trf.xlu0
        %v1363 = vpop.trf.xlu0
        %v1364 = vpop.trf.xlu0
        %v1365 = vpop.trf.xlu0
        %v1366 = vpop.trf.xlu0
        %1367 = vmatpush.bf16.msra.mxu0 %v1059
        %1368 = vmatpush.bf16.msra.mxu0 %v1057
        %1369 = vmatpush.bf16.msra.mxu0 %v1055
        %1370 = vmatpush.bf16.msra.mxu0 %v1053
        %1371 = vmatpush.bf16.msra.mxu0 %v1051
        %1372 = vmatpush.bf16.msra.mxu0 %v1049
        %1373 = vmatpush.bf16.msra.mxu0 %v1047
        %1374 = vmatpush.bf16.msra.mxu0 %v1045
        %1375 = vmatmul.bf16.gmra.mxu0 %v1359
        %v1376 = vpop.f32.mrf.mxu0
        %v1377 = vadd.f32 0.0, %v1376
        %v1378 = vpop.f32.mrf.mxu0
        %v1379 = vadd.f32 0.0, %v1378
        %1380 = vmatmul.bf16.gmra.mxu0 %v1360
        %v1381 = vpop.f32.mrf.mxu0
        %v1382 = vadd.f32 0.0, %v1381
        %v1383 = vpop.f32.mrf.mxu0
        %v1384 = vadd.f32 0.0, %v1383
        %1385 = vmatmul.bf16.gmra.mxu0 %v1361
        %v1386 = vpop.f32.mrf.mxu0
        %v1387 = vadd.f32 0.0, %v1386
        %v1388 = vpop.f32.mrf.mxu0
        %v1389 = vadd.f32 0.0, %v1388
        %1390 = vmatmul.bf16.gmra.mxu0 %v1362
        %v1391 = vpop.f32.mrf.mxu0
        %v1392 = vadd.f32 0.0, %v1391
        %v1393 = vpop.f32.mrf.mxu0
        %v1394 = vadd.f32 0.0, %v1393
        %1395 = vmatmul.bf16.gmra.mxu0 %v1363
        %v1396 = vpop.f32.mrf.mxu0
        %v1397 = vadd.f32 0.0, %v1396
        %v1398 = vpop.f32.mrf.mxu0
        %v1399 = vadd.f32 0.0, %v1398
        %1400 = vmatmul.bf16.gmra.mxu0 %v1364
        %v1401 = vpop.f32.mrf.mxu0
        %v1402 = vadd.f32 0.0, %v1401
        %v1403 = vpop.f32.mrf.mxu0
        %v1404 = vadd.f32 0.0, %v1403
        %1405 = vmatmul.bf16.gmra.mxu0 %v1365
        %v1406 = vpop.f32.mrf.mxu0
        %v1407 = vadd.f32 0.0, %v1406
        %v1408 = vpop.f32.mrf.mxu0
        %v1409 = vadd.f32 0.0, %v1408
        %1410 = vmatmul.bf16.gmra.mxu0 %v1366
        %v1411 = vpop.f32.mrf.mxu0
        %v1412 = vadd.f32 0.0, %v1411
        %v1413 = vpop.f32.mrf.mxu0
        %v1414 = vadd.f32 0.0, %v1413
        %1415 = vdwg.mxu0
        %1416 = vmatpush.bf16.msra.mxu0 %v1060
        %1417 = vmatpush.bf16.msra.mxu0 %v1058
        %1418 = vmatpush.bf16.msra.mxu0 %v1056
        %1419 = vmatpush.bf16.msra.mxu0 %v1054
        %1420 = vmatpush.bf16.msra.mxu0 %v1052
        %1421 = vmatpush.bf16.msra.mxu0 %v1050
        %1422 = vmatpush.bf16.msra.mxu0 %v1048
        %1423 = vmatpush.bf16.msra.mxu0 %v1046
        %1424 = vmatmul.bf16.gmra.mxu0 %v1359
        %v1425 = vpop.f32.mrf.mxu0
        %v1426 = vadd.f32 0.0, %v1425
        %v1427 = vpop.f32.mrf.mxu0
        %v1428 = vadd.f32 0.0, %v1427
        %1429 = vmatmul.bf16.gmra.mxu0 %v1360
        %v1430 = vpop.f32.mrf.mxu0
        %v1431 = vadd.f32 0.0, %v1430
        %v1432 = vpop.f32.mrf.mxu0
        %v1433 = vadd.f32 0.0, %v1432
        %1434 = vmatmul.bf16.gmra.mxu0 %v1361
        %v1435 = vpop.f32.mrf.mxu0
        %v1436 = vadd.f32 0.0, %v1435
        %v1437 = vpop.f32.mrf.mxu0
        %v1438 = vadd.f32 0.0, %v1437
        %1439 = vmatmul.bf16.gmra.mxu0 %v1362
        %v1440 = vpop.f32.mrf.mxu0
        %v1441 = vadd.f32 0.0, %v1440
        %v1442 = vpop.f32.mrf.mxu0
        %v1443 = vadd.f32 0.0, %v1442
        %1444 = vmatmul.bf16.gmra.mxu0 %v1363
        %v1445 = vpop.f32.mrf.mxu0
        %v1446 = vadd.f32 0.0, %v1445
        %v1447 = vpop.f32.mrf.mxu0
        %v1448 = vadd.f32 0.0, %v1447
        %1449 = vmatmul.bf16.gmra.mxu0 %v1364
        %v1450 = vpop.f32.mrf.mxu0
        %v1451 = vadd.f32 0.0, %v1450
        %v1452 = vpop.f32.mrf.mxu0
        %v1453 = vadd.f32 0.0, %v1452
        %1454 = vmatmul.bf16.gmra.mxu0 %v1365
        %v1455 = vpop.f32.mrf.mxu0
        %v1456 = vadd.f32 0.0, %v1455
        %v1457 = vpop.f32.mrf.mxu0
        %v1458 = vadd.f32 0.0, %v1457
        %1459 = vmatmul.bf16.gmra.mxu0 %v1366
        %v1460 = vpop.f32.mrf.mxu0
        %v1461 = vadd.f32 0.0, %v1460
        %v1462 = vpop.f32.mrf.mxu0
        %v1463 = vadd.f32 0.0, %v1462
        %1464 = vdwg.mxu0
        %v1465 = vadd.f32 %v1271, %v1377
        %v1466 = vadd.f32 %v1272, %v1426
        %v1467 = vadd.f32 %v1273, %v1379
        %v1468 = vadd.f32 %v1274, %v1428
        %v1469 = vadd.f32 %v1275, %v1382
        %v1470 = vadd.f32 %v1276, %v1431
        %v1471 = vadd.f32 %v1277, %v1384
        %v1472 = vadd.f32 %v1278, %v1433
        %v1473 = vadd.f32 %v1279, %v1387
        %v1474 = vadd.f32 %v1280, %v1436
        %v1475 = vadd.f32 %v1281, %v1389
        %v1476 = vadd.f32 %v1282, %v1438
        %v1477 = vadd.f32 %v1283, %v1392
        %v1478 = vadd.f32 %v1284, %v1441
        %v1479 = vadd.f32 %v1285, %v1394
        %v1480 = vadd.f32 %v1286, %v1443
        %v1481 = vadd.f32 %v1287, %v1397
        %v1482 = vadd.f32 %v1288, %v1446
        %v1483 = vadd.f32 %v1289, %v1399
        %v1484 = vadd.f32 %v1290, %v1448
        %v1485 = vadd.f32 %v1291, %v1402
        %v1486 = vadd.f32 %v1292, %v1451
        %v1487 = vadd.f32 %v1293, %v1404
        %v1488 = vadd.f32 %v1294, %v1453
        %v1489 = vadd.f32 %v1295, %v1407
        %v1490 = vadd.f32 %v1296, %v1456
        %v1491 = vadd.f32 %v1297, %v1409
        %v1492 = vadd.f32 %v1298, %v1458
        %v1493 = vadd.f32 %v1299, %v1412
        %v1494 = vadd.f32 %v1300, %v1461
        %v1495 = vadd.f32 %v1301, %v1414
        %v1496 = vadd.f32 %v1302, %v1463
        %1497 = vst [vmem:[#allocation4] sm:$0xff] %v1465
        %1498 = vst [vmem:[#allocation4 + $0x8] sm:$0xff] %v1466
        %1499 = vst [vmem:[#allocation4 + $0x10] sm:$0xff] %v1467
        %1500 = vst [vmem:[#allocation4 + $0x18] sm:$0xff] %v1468
        %1501 = vst [vmem:[#allocation4 + $0x20] sm:$0xff] %v1469
        %1502 = vst [vmem:[#allocation4 + $0x28] sm:$0xff] %v1470
        %1503 = vst [vmem:[#allocation4 + $0x30] sm:$0xff] %v1471
        %1504 = vst [vmem:[#allocation4 + $0x38] sm:$0xff] %v1472
        %1505 = vst [vmem:[#allocation4 + $0x40] sm:$0xff] %v1473
        %1506 = vst [vmem:[#allocation4 + $0x48] sm:$0xff] %v1474
        %1507 = vst [vmem:[#allocation4 + $0x50] sm:$0xff] %v1475
        %1508 = vst [vmem:[#allocation4 + $0x58] sm:$0xff] %v1476
        %1509 = vst [vmem:[#allocation4 + $0x60] sm:$0xff] %v1477
        %1510 = vst [vmem:[#allocation4 + $0x68] sm:$0xff] %v1478
        %1511 = vst [vmem:[#allocation4 + $0x70] sm:$0xff] %v1479
        %1512 = vst [vmem:[#allocation4 + $0x78] sm:$0xff] %v1480
        %1513 = vst [vmem:[#allocation4 + $0x80] sm:$0xff] %v1481
        %1514 = vst [vmem:[#allocation4 + $0x88] sm:$0xff] %v1482
        %1515 = vst [vmem:[#allocation4 + $0x90] sm:$0xff] %v1483
        %1516 = vst [vmem:[#allocation4 + $0x98] sm:$0xff] %v1484
        %1517 = vst [vmem:[#allocation4 + $0xa0] sm:$0xff] %v1485
        %1518 = vst [vmem:[#allocation4 + $0xa8] sm:$0xff] %v1486
        %1519 = vst [vmem:[#allocation4 + $0xb0] sm:$0xff] %v1487
        %1520 = vst [vmem:[#allocation4 + $0xb8] sm:$0xff] %v1488
        %1521 = vst [vmem:[#allocation4 + $0xc0] sm:$0xff] %v1489
        %1522 = vst [vmem:[#allocation4 + $0xc8] sm:$0xff] %v1490
        %1523 = vst [vmem:[#allocation4 + $0xd0] sm:$0xff] %v1491
        %1524 = vst [vmem:[#allocation4 + $0xd8] sm:$0xff] %v1492
        %1525 = vst [vmem:[#allocation4 + $0xe0] sm:$0xff] %v1493
        %1526 = vst [vmem:[#allocation4 + $0xe8] sm:$0xff] %v1494
        %1527 = vst [vmem:[#allocation4 + $0xf0] sm:$0xff] %v1495
        %1528 = vst [vmem:[#allocation4 + $0xf8] sm:$0xff] %v1496
        %v1529 = vld [vmem:[#allocation5] sm:$0xff]
        %v1530 = vld [vmem:[#allocation5 + $0x8] sm:$0xff]
        %v1531 = vld [vmem:[%s400] sm:$0xf]
        %v1532 = vld [vmem:[%s400 + $0x4] sm:$0xf]
        %v1535 = vunpack.c.l.b16 %v1531
        %v1536 = vunpack.c.l.b16 %v1532
        %v1537 = vpack.c.b16 %v1536, %v1535
        %1539 = vmatpush.bf16.msra.mxu0 %v1342
        %1540 = vmatpush.bf16.msra.mxu0 %v1341
        %1541 = vmatpush.bf16.msra.mxu0 %v1340
        %1542 = vmatpush.bf16.msra.mxu0 %v1339
        %1543 = vmatpush.bf16.msra.mxu0 %v1338
        %1544 = vmatpush.bf16.msra.mxu0 %v1337
        %1545 = vmatpush.bf16.msra.mxu0 %v1336
        %1546 = vmatpush.bf16.msra.mxu0 %v1335
        %1547 = vmatmul.bf16.gmra.mxu0 %v1537
        %v1548 = vpop.f32.mrf.mxu0
        %v1549 = vadd.f32 0.0, %v1548
        %v1550 = vpop.f32.mrf.mxu0
        %v1551 = vadd.f32 0.0, %v1550
        %1552 = vdwg.mxu0
        %v1553 = vadd.f32 %v1529, %v1549
        %v1554 = vadd.f32 %v1530, %v1551
        %1555 = vst [vmem:[#allocation5] sm:$0xff] %v1553
        %1556 = vst [vmem:[#allocation5 + $0x8] sm:$0xff] %v1554
        %v1557 = vld [vmem:[%s457] sm:$0xf]
        %v1558 = vld [vmem:[%s457 + $0x4] sm:$0xf]
        %v1559 = vld [vmem:[%s457 + $0x8] sm:$0xf]
        %v1560 = vld [vmem:[%s457 + $0xc] sm:$0xf]
        %v1561 = vld [vmem:[%s457 + $0x10] sm:$0xf]
        %v1562 = vld [vmem:[%s457 + $0x14] sm:$0xf]
        %v1563 = vld [vmem:[%s457 + $0x18] sm:$0xf]
        %v1564 = vld [vmem:[%s457 + $0x1c] sm:$0xf]
        %v1565 = vld [vmem:[%s457 + $0x20] sm:$0xf]
        %v1566 = vld [vmem:[%s457 + $0x24] sm:$0xf]
        %v1567 = vld [vmem:[%s457 + $0x28] sm:$0xf]
        %v1568 = vld [vmem:[%s457 + $0x2c] sm:$0xf]
        %v1569 = vld [vmem:[%s457 + $0x30] sm:$0xf]
        %v1570 = vld [vmem:[%s457 + $0x34] sm:$0xf]
        %v1571 = vld [vmem:[%s457 + $0x38] sm:$0xf]
        %v1572 = vld [vmem:[%s457 + $0x3c] sm:$0xf]
        %v1573 = vld [vmem:[#allocation6] sm:$0xff]
        %v1574 = vld [vmem:[#allocation6 + $0x8] sm:$0xff]
        %v1575 = vpack.c.bf16 %v1574, %v1573
        %v1592 = vunpack.c.l.b16 %v1557
        %v1593 = vunpack.c.l.b16 %v1558
        %v1594 = vunpack.c.l.b16 %v1559
        %v1595 = vunpack.c.l.b16 %v1560
        %v1596 = vunpack.c.l.b16 %v1561
        %v1597 = vunpack.c.l.b16 %v1562
        %v1598 = vunpack.c.l.b16 %v1563
        %v1599 = vunpack.c.l.b16 %v1564
        %v1600 = vunpack.c.l.b16 %v1565
        %v1601 = vunpack.c.l.b16 %v1566
        %v1602 = vunpack.c.l.b16 %v1567
        %v1603 = vunpack.c.l.b16 %v1568
        %v1604 = vunpack.c.l.b16 %v1569
        %v1605 = vunpack.c.l.b16 %v1570
        %v1606 = vunpack.c.l.b16 %v1571
        %v1607 = vunpack.c.l.b16 %v1572
        %v1608 = vpack.c.b16 %v1593, %v1592
        %v1609 = vpack.c.b16 %v1595, %v1594
        %v1610 = vpack.c.b16 %v1597, %v1596
        %v1611 = vpack.c.b16 %v1599, %v1598
        %v1612 = vpack.c.b16 %v1601, %v1600
        %v1613 = vpack.c.b16 %v1603, %v1602
        %v1614 = vpack.c.b16 %v1605, %v1604
        %v1615 = vpack.c.b16 %v1607, %v1606
        %vm1616 = vcmask 130048
        %v1618 = vsel %vm1616, %v1608, 0
        %v1621 = vsel %vm1616, %v1609, 0
        %v1624 = vsel %vm1616, %v1610, 0
        %v1627 = vsel %vm1616, %v1611, 0
        %v1630 = vsel %vm1616, %v1612, 0
        %v1633 = vsel %vm1616, %v1613, 0
        %v1636 = vsel %vm1616, %v1614, 0
        %v1639 = vsel %vm1616, %v1615, 0
        %1641 = vmatpush.bf16.msra.mxu0 0
        %1642 = vmatpush.bf16.msra.mxu0 0
        %1643 = vmatpush.bf16.msra.mxu0 0
        %1644 = vmatpush.bf16.msra.mxu0 0
        %1645 = vmatpush.bf16.msra.mxu0 0
        %1646 = vmatpush.bf16.msra.mxu0 0
        %1647 = vmatpush.bf16.msra.mxu0 0
        %1648 = vmatpush.bf16.msra.mxu0 %v1575
        %1649 = vmatmul.bf16.gmra.mxu0 %v1618
        %v1650 = vpop.f32.mrf.mxu0
        %v1651 = vadd.f32 0.0, %v1650
        %v1652 = vpop.f32.mrf.mxu0
        %v1653 = vadd.f32 0.0, %v1652
        %1654 = vmatmul.bf16.gmra.mxu0 %v1621
        %v1655 = vpop.f32.mrf.mxu0
        %v1656 = vadd.f32 0.0, %v1655
        %v1657 = vpop.f32.mrf.mxu0
        %v1658 = vadd.f32 0.0, %v1657
        %1659 = vmatmul.bf16.gmra.mxu0 %v1624
        %v1660 = vpop.f32.mrf.mxu0
        %v1661 = vadd.f32 0.0, %v1660
        %v1662 = vpop.f32.mrf.mxu0
        %v1663 = vadd.f32 0.0, %v1662
        %1664 = vmatmul.bf16.gmra.mxu0 %v1627
        %v1665 = vpop.f32.mrf.mxu0
        %v1666 = vadd.f32 0.0, %v1665
        %v1667 = vpop.f32.mrf.mxu0
        %v1668 = vadd.f32 0.0, %v1667
        %1669 = vmatmul.bf16.gmra.mxu0 %v1630
        %v1670 = vpop.f32.mrf.mxu0
        %v1671 = vadd.f32 0.0, %v1670
        %v1672 = vpop.f32.mrf.mxu0
        %v1673 = vadd.f32 0.0, %v1672
        %1674 = vmatmul.bf16.gmra.mxu0 %v1633
        %v1675 = vpop.f32.mrf.mxu0
        %v1676 = vadd.f32 0.0, %v1675
        %v1677 = vpop.f32.mrf.mxu0
        %v1678 = vadd.f32 0.0, %v1677
        %1679 = vmatmul.bf16.gmra.mxu0 %v1636
        %v1680 = vpop.f32.mrf.mxu0
        %v1681 = vadd.f32 0.0, %v1680
        %v1682 = vpop.f32.mrf.mxu0
        %v1683 = vadd.f32 0.0, %v1682
        %1684 = vmatmul.bf16.gmra.mxu0 %v1639
        %v1685 = vpop.f32.mrf.mxu0
        %v1686 = vadd.f32 0.0, %v1685
        %v1687 = vpop.f32.mrf.mxu0
        %v1688 = vadd.f32 0.0, %v1687
        %1689 = vdwg.mxu0
        %s1690 = scalar_lea.vmem %s7, %s466
        %v1691 = vld [vmem:[%s1690] sm:$0xff]
        %v1692 = vld [vmem:[%s1690 + $0x8] sm:$0xff]
        %v1693 = vld [vmem:[%s1690 + $0x10] sm:$0xff]
        %v1694 = vld [vmem:[%s1690 + $0x18] sm:$0xff]
        %v1695 = vld [vmem:[%s1690 + $0x20] sm:$0xff]
        %v1696 = vld [vmem:[%s1690 + $0x28] sm:$0xff]
        %v1697 = vld [vmem:[%s1690 + $0x30] sm:$0xff]
        %v1698 = vld [vmem:[%s1690 + $0x38] sm:$0xff]
        %v1699 = vld [vmem:[%s1690 + $0x40] sm:$0xff]
        %v1700 = vld [vmem:[%s1690 + $0x48] sm:$0xff]
        %v1701 = vld [vmem:[%s1690 + $0x50] sm:$0xff]
        %v1702 = vld [vmem:[%s1690 + $0x58] sm:$0xff]
        %v1703 = vld [vmem:[%s1690 + $0x60] sm:$0xff]
        %v1704 = vld [vmem:[%s1690 + $0x68] sm:$0xff]
        %v1705 = vld [vmem:[%s1690 + $0x70] sm:$0xff]
        %v1706 = vld [vmem:[%s1690 + $0x78] sm:$0xff]
        %v1707 = vadd.f32 %v1691, %v1232
        %v1708 = vadd.f32 %v1692, %v1234
        %v1709 = vadd.f32 %v1693, %v1237
        %v1710 = vadd.f32 %v1694, %v1239
        %v1711 = vadd.f32 %v1695, %v1242
        %v1712 = vadd.f32 %v1696, %v1244
        %v1713 = vadd.f32 %v1697, %v1247
        %v1714 = vadd.f32 %v1698, %v1249
        %v1715 = vadd.f32 %v1699, %v1252
        %v1716 = vadd.f32 %v1700, %v1254
        %v1717 = vadd.f32 %v1701, %v1257
        %v1718 = vadd.f32 %v1702, %v1259
        %v1719 = vadd.f32 %v1703, %v1262
        %v1720 = vadd.f32 %v1704, %v1264
        %v1721 = vadd.f32 %v1705, %v1267
        %v1722 = vadd.f32 %v1706, %v1269
        %1723 = vst [vmem:[%s1690] sm:$0xff] %v1707
        %1724 = vst [vmem:[%s1690 + $0x8] sm:$0xff] %v1708
        %1725 = vst [vmem:[%s1690 + $0x10] sm:$0xff] %v1709
        %1726 = vst [vmem:[%s1690 + $0x18] sm:$0xff] %v1710
        %1727 = vst [vmem:[%s1690 + $0x20] sm:$0xff] %v1711
        %1728 = vst [vmem:[%s1690 + $0x28] sm:$0xff] %v1712
        %1729 = vst [vmem:[%s1690 + $0x30] sm:$0xff] %v1713
        %1730 = vst [vmem:[%s1690 + $0x38] sm:$0xff] %v1714
        %1731 = vst [vmem:[%s1690 + $0x40] sm:$0xff] %v1715
        %1732 = vst [vmem:[%s1690 + $0x48] sm:$0xff] %v1716
        %1733 = vst [vmem:[%s1690 + $0x50] sm:$0xff] %v1717
        %1734 = vst [vmem:[%s1690 + $0x58] sm:$0xff] %v1718
        %1735 = vst [vmem:[%s1690 + $0x60] sm:$0xff] %v1719
        %1736 = vst [vmem:[%s1690 + $0x68] sm:$0xff] %v1720
        %1737 = vst [vmem:[%s1690 + $0x70] sm:$0xff] %v1721
        %1738 = vst [vmem:[%s1690 + $0x78] sm:$0xff] %v1722
        %s1739 = scalar_lea.vmem %s9, %s466
        %v1740 = vld [vmem:[%s1739] sm:$0xff]
        %v1741 = vld [vmem:[%s1739 + $0x8] sm:$0xff]
        %v1742 = vld [vmem:[%s1739 + $0x10] sm:$0xff]
        %v1743 = vld [vmem:[%s1739 + $0x18] sm:$0xff]
        %v1744 = vld [vmem:[%s1739 + $0x20] sm:$0xff]
        %v1745 = vld [vmem:[%s1739 + $0x28] sm:$0xff]
        %v1746 = vld [vmem:[%s1739 + $0x30] sm:$0xff]
        %v1747 = vld [vmem:[%s1739 + $0x38] sm:$0xff]
        %v1748 = vld [vmem:[%s1739 + $0x40] sm:$0xff]
        %v1749 = vld [vmem:[%s1739 + $0x48] sm:$0xff]
        %v1750 = vld [vmem:[%s1739 + $0x50] sm:$0xff]
        %v1751 = vld [vmem:[%s1739 + $0x58] sm:$0xff]
        %v1752 = vld [vmem:[%s1739 + $0x60] sm:$0xff]
        %v1753 = vld [vmem:[%s1739 + $0x68] sm:$0xff]
        %v1754 = vld [vmem:[%s1739 + $0x70] sm:$0xff]
        %v1755 = vld [vmem:[%s1739 + $0x78] sm:$0xff]
        %v1756 = vadd.f32 %v1740, %v1651
        %v1757 = vadd.f32 %v1741, %v1653
        %v1758 = vadd.f32 %v1742, %v1656
        %v1759 = vadd.f32 %v1743, %v1658
        %v1760 = vadd.f32 %v1744, %v1661
        %v1761 = vadd.f32 %v1745, %v1663
        %v1762 = vadd.f32 %v1746, %v1666
        %v1763 = vadd.f32 %v1747, %v1668
        %v1764 = vadd.f32 %v1748, %v1671
        %v1765 = vadd.f32 %v1749, %v1673
        %v1766 = vadd.f32 %v1750, %v1676
        %v1767 = vadd.f32 %v1751, %v1678
        %v1768 = vadd.f32 %v1752, %v1681
        %v1769 = vadd.f32 %v1753, %v1683
        %v1770 = vadd.f32 %v1754, %v1686
        %v1771 = vadd.f32 %v1755, %v1688
        %1772 = vst [vmem:[%s1739] sm:$0xff] %v1756
        %1773 = vst [vmem:[%s1739 + $0x8] sm:$0xff] %v1757
        %1774 = vst [vmem:[%s1739 + $0x10] sm:$0xff] %v1758
        %1775 = vst [vmem:[%s1739 + $0x18] sm:$0xff] %v1759
        %1776 = vst [vmem:[%s1739 + $0x20] sm:$0xff] %v1760
        %1777 = vst [vmem:[%s1739 + $0x28] sm:$0xff] %v1761
        %1778 = vst [vmem:[%s1739 + $0x30] sm:$0xff] %v1762
        %1779 = vst [vmem:[%s1739 + $0x38] sm:$0xff] %v1763
        %1780 = vst [vmem:[%s1739 + $0x40] sm:$0xff] %v1764
        %1781 = vst [vmem:[%s1739 + $0x48] sm:$0xff] %v1765
        %1782 = vst [vmem:[%s1739 + $0x50] sm:$0xff] %v1766
        %1783 = vst [vmem:[%s1739 + $0x58] sm:$0xff] %v1767
        %1784 = vst [vmem:[%s1739 + $0x60] sm:$0xff] %v1768
        %1785 = vst [vmem:[%s1739 + $0x68] sm:$0xff] %v1769
        %1786 = vst [vmem:[%s1739 + $0x70] sm:$0xff] %v1770
        %1787 = vst [vmem:[%s1739 + $0x78] sm:$0xff] %v1771
        %v1788 = vpack.c.bf16 %v1232, %v1232
        %v1789 = vpack.c.bf16 %v1234, %v1234
        %v1790 = vpack.c.bf16 %v1237, %v1237
        %v1791 = vpack.c.bf16 %v1239, %v1239
        %v1792 = vpack.c.bf16 %v1242, %v1242
        %v1793 = vpack.c.bf16 %v1244, %v1244
        %v1794 = vpack.c.bf16 %v1247, %v1247
        %v1795 = vpack.c.bf16 %v1249, %v1249
        %v1796 = vpack.c.bf16 %v1252, %v1252
        %v1797 = vpack.c.bf16 %v1254, %v1254
        %v1798 = vpack.c.bf16 %v1257, %v1257
        %v1799 = vpack.c.bf16 %v1259, %v1259
        %v1800 = vpack.c.bf16 %v1262, %v1262
        %v1801 = vpack.c.bf16 %v1264, %v1264
        %v1802 = vpack.c.bf16 %v1267, %v1267
        %v1803 = vpack.c.bf16 %v1269, %v1269
        %1804 = vst [vmem:[%s948] sm:$0xf] %v1788
        %1805 = vst [vmem:[%s948 + $0x4] sm:$0xf] %v1789
        %1806 = vst [vmem:[%s948 + $0x8] sm:$0xf] %v1790
        %1807 = vst [vmem:[%s948 + $0xc] sm:$0xf] %v1791
        %1808 = vst [vmem:[%s948 + $0x10] sm:$0xf] %v1792
        %1809 = vst [vmem:[%s948 + $0x14] sm:$0xf] %v1793
        %1810 = vst [vmem:[%s948 + $0x18] sm:$0xf] %v1794
        %1811 = vst [vmem:[%s948 + $0x1c] sm:$0xf] %v1795
        %1812 = vst [vmem:[%s948 + $0x20] sm:$0xf] %v1796
        %1813 = vst [vmem:[%s948 + $0x24] sm:$0xf] %v1797
        %1814 = vst [vmem:[%s948 + $0x28] sm:$0xf] %v1798
        %1815 = vst [vmem:[%s948 + $0x2c] sm:$0xf] %v1799
        %1816 = vst [vmem:[%s948 + $0x30] sm:$0xf] %v1800
        %1817 = vst [vmem:[%s948 + $0x34] sm:$0xf] %v1801
        %1818 = vst [vmem:[%s948 + $0x38] sm:$0xf] %v1802
        %1819 = vst [vmem:[%s948 + $0x3c] sm:$0xf] %v1803
        %p1820 = scmp.eq.s32.totalorder %s27, 1
        // Predicated region
        $region102: #{lightgcl_forward.2} parent=84 // pred_check
          %p1821 = pneg %p1820
        $region103: #{lightgcl_forward.2} parent=84 // pred_check_branch
          %1823 = sbr.rel (%p1821) target = $region105
        $region104: #{lightgcl_forward.2} parent=84 // pred_region
          %v1824 = vld [vmem:[#allocation4] sm:$0xff]
          %v1825 = vld [vmem:[#allocation4 + $0x8] sm:$0xff]
          %v1826 = vld [vmem:[#allocation4 + $0x10] sm:$0xff]
          %v1827 = vld [vmem:[#allocation4 + $0x18] sm:$0xff]
          %v1828 = vld [vmem:[#allocation4 + $0x20] sm:$0xff]
          %v1829 = vld [vmem:[#allocation4 + $0x28] sm:$0xff]
          %v1830 = vld [vmem:[#allocation4 + $0x30] sm:$0xff]
          %v1831 = vld [vmem:[#allocation4 + $0x38] sm:$0xff]
          %v1832 = vld [vmem:[#allocation4 + $0x40] sm:$0xff]
          %v1833 = vld [vmem:[#allocation4 + $0x48] sm:$0xff]
          %v1834 = vld [vmem:[#allocation4 + $0x50] sm:$0xff]
          %v1835 = vld [vmem:[#allocation4 + $0x58] sm:$0xff]
          %v1836 = vld [vmem:[#allocation4 + $0x60] sm:$0xff]
          %v1837 = vld [vmem:[#allocation4 + $0x68] sm:$0xff]
          %v1838 = vld [vmem:[#allocation4 + $0x70] sm:$0xff]
          %v1839 = vld [vmem:[#allocation4 + $0x78] sm:$0xff]
          %v1840 = vld [vmem:[#allocation4 + $0x80] sm:$0xff]
          %v1841 = vld [vmem:[#allocation4 + $0x88] sm:$0xff]
          %v1842 = vld [vmem:[#allocation4 + $0x90] sm:$0xff]
          %v1843 = vld [vmem:[#allocation4 + $0x98] sm:$0xff]
          %v1844 = vld [vmem:[#allocation4 + $0xa0] sm:$0xff]
          %v1845 = vld [vmem:[#allocation4 + $0xa8] sm:$0xff]
          %v1846 = vld [vmem:[#allocation4 + $0xb0] sm:$0xff]
          %v1847 = vld [vmem:[#allocation4 + $0xb8] sm:$0xff]
          %v1848 = vld [vmem:[#allocation4 + $0xc0] sm:$0xff]
          %v1849 = vld [vmem:[#allocation4 + $0xc8] sm:$0xff]
          %v1850 = vld [vmem:[#allocation4 + $0xd0] sm:$0xff]
          %v1851 = vld [vmem:[#allocation4 + $0xd8] sm:$0xff]
          %v1852 = vld [vmem:[#allocation4 + $0xe0] sm:$0xff]
          %v1853 = vld [vmem:[#allocation4 + $0xe8] sm:$0xff]
          %v1854 = vld [vmem:[#allocation4 + $0xf0] sm:$0xff]
          %v1855 = vld [vmem:[#allocation4 + $0xf8] sm:$0xff]
          %1856 = vxpose.xlu0.b32.start [1/16] %v1824, 128
          %1857 = vxpose.xlu0.b32.cont [2/16] %v1826, 128
          %1858 = vxpose.xlu0.b32.cont [3/16] %v1828, 128
          %1859 = vxpose.xlu0.b32.cont [4/16] %v1830, 128
          %1860 = vxpose.xlu0.b32.cont [5/16] %v1832, 128
          %1861 = vxpose.xlu0.b32.cont [6/16] %v1834, 128
          %1862 = vxpose.xlu0.b32.cont [7/16] %v1836, 128
          %1863 = vxpose.xlu0.b32.cont [8/16] %v1838, 128
          %1864 = vxpose.xlu0.b32.cont [9/16] %v1840, 128
          %1865 = vxpose.xlu0.b32.cont [10/16] %v1842, 128
          %1866 = vxpose.xlu0.b32.cont [11/16] %v1844, 128
          %1867 = vxpose.xlu0.b32.cont [12/16] %v1846, 128
          %1868 = vxpose.xlu0.b32.cont [13/16] %v1848, 128
          %1869 = vxpose.xlu0.b32.cont [14/16] %v1850, 128
          %1870 = vxpose.xlu0.b32.cont [15/16] %v1852, 128
          %1871 = vxpose.xlu0.b32.end [16/16] %v1854, 128
          %v1872 = vpop.trf.xlu0
          %v1873 = vpop.trf.xlu0
          %v1874 = vpop.trf.xlu0
          %v1875 = vpop.trf.xlu0
          %v1876 = vpop.trf.xlu0
          %v1877 = vpop.trf.xlu0
          %v1878 = vpop.trf.xlu0
          %v1879 = vpop.trf.xlu0
          %v1880 = vpop.trf.xlu0
          %v1881 = vpop.trf.xlu0
          %v1882 = vpop.trf.xlu0
          %v1883 = vpop.trf.xlu0
          %v1884 = vpop.trf.xlu0
          %v1885 = vpop.trf.xlu0
          %v1886 = vpop.trf.xlu0
          %v1887 = vpop.trf.xlu0
          %1888 = vxpose.xlu0.b32.start [1/16] %v1825, 128
          %1889 = vxpose.xlu0.b32.cont [2/16] %v1827, 128
          %1890 = vxpose.xlu0.b32.cont [3/16] %v1829, 128
          %1891 = vxpose.xlu0.b32.cont [4/16] %v1831, 128
          %1892 = vxpose.xlu0.b32.cont [5/16] %v1833, 128
          %1893 = vxpose.xlu0.b32.cont [6/16] %v1835, 128
          %1894 = vxpose.xlu0.b32.cont [7/16] %v1837, 128
          %1895 = vxpose.xlu0.b32.cont [8/16] %v1839, 128
          %1896 = vxpose.xlu0.b32.cont [9/16] %v1841, 128
          %1897 = vxpose.xlu0.b32.cont [10/16] %v1843, 128
          %1898 = vxpose.xlu0.b32.cont [11/16] %v1845, 128
          %1899 = vxpose.xlu0.b32.cont [12/16] %v1847, 128
          %1900 = vxpose.xlu0.b32.cont [13/16] %v1849, 128
          %1901 = vxpose.xlu0.b32.cont [14/16] %v1851, 128
          %1902 = vxpose.xlu0.b32.cont [15/16] %v1853, 128
          %1903 = vxpose.xlu0.b32.end [16/16] %v1855, 128
          %v1904 = vpop.trf.xlu0
          %v1905 = vpop.trf.xlu0
          %v1906 = vpop.trf.xlu0
          %v1907 = vpop.trf.xlu0
          %v1908 = vpop.trf.xlu0
          %v1909 = vpop.trf.xlu0
          %v1910 = vpop.trf.xlu0
          %v1911 = vpop.trf.xlu0
          %v1912 = vpop.trf.xlu0
          %v1913 = vpop.trf.xlu0
          %v1914 = vpop.trf.xlu0
          %v1915 = vpop.trf.xlu0
          %v1916 = vpop.trf.xlu0
          %v1917 = vpop.trf.xlu0
          %v1918 = vpop.trf.xlu0
          %v1919 = vpop.trf.xlu0
          %v1920 = vld [vmem:[%s4] sm:$0xf]
          %v1921 = vld [vmem:[%s4 + $0x4] sm:$0xf]
          %v1922 = vld [vmem:[%s4 + $0x8] sm:$0xf]
          %v1923 = vld [vmem:[%s4 + $0xc] sm:$0xf]
          %v1924 = vld [vmem:[%s4 + $0x10] sm:$0xf]
          %v1925 = vld [vmem:[%s4 + $0x14] sm:$0xf]
          %v1926 = vld [vmem:[%s4 + $0x18] sm:$0xf]
          %v1927 = vld [vmem:[%s4 + $0x1c] sm:$0xf]
          %v1928 = vld [vmem:[%s4 + $0x20] sm:$0xf]
          %v1929 = vld [vmem:[%s4 + $0x24] sm:$0xf]
          %v1930 = vld [vmem:[%s4 + $0x28] sm:$0xf]
          %v1931 = vld [vmem:[%s4 + $0x2c] sm:$0xf]
          %v1932 = vld [vmem:[%s4 + $0x30] sm:$0xf]
          %v1933 = vld [vmem:[%s4 + $0x34] sm:$0xf]
          %v1934 = vld [vmem:[%s4 + $0x38] sm:$0xf]
          %v1935 = vld [vmem:[%s4 + $0x3c] sm:$0xf]
          %v1936 = vld [vmem:[%s4 + $0x40] sm:$0xf]
          %v1937 = vld [vmem:[%s4 + $0x44] sm:$0xf]
          %v1938 = vld [vmem:[%s4 + $0x48] sm:$0xf]
          %v1939 = vld [vmem:[%s4 + $0x4c] sm:$0xf]
          %v1940 = vld [vmem:[%s4 + $0x50] sm:$0xf]
          %v1941 = vld [vmem:[%s4 + $0x54] sm:$0xf]
          %v1942 = vld [vmem:[%s4 + $0x58] sm:$0xf]
          %v1943 = vld [vmem:[%s4 + $0x5c] sm:$0xf]
          %v1944 = vld [vmem:[%s4 + $0x60] sm:$0xf]
          %v1945 = vld [vmem:[%s4 + $0x64] sm:$0xf]
          %v1946 = vld [vmem:[%s4 + $0x68] sm:$0xf]
          %v1947 = vld [vmem:[%s4 + $0x6c] sm:$0xf]
          %v1948 = vld [vmem:[%s4 + $0x70] sm:$0xf]
          %v1949 = vld [vmem:[%s4 + $0x74] sm:$0xf]
          %v1950 = vld [vmem:[%s4 + $0x78] sm:$0xf]
          %v1951 = vld [vmem:[%s4 + $0x7c] sm:$0xf]
          %v1952 = vld [vmem:[#allocation5] sm:$0xff]
          %v1953 = vld [vmem:[#allocation5 + $0x8] sm:$0xff]
          %v1954 = vpack.c.bf16 %v1953, %v1952
          %v1987 = vunpack.c.l.b16 %v1920
          %v1988 = vunpack.c.l.b16 %v1921
          %v1989 = vunpack.c.l.b16 %v1922
          %v1990 = vunpack.c.l.b16 %v1923
          %v1991 = vunpack.c.l.b16 %v1924
          %v1992 = vunpack.c.l.b16 %v1925
          %v1993 = vunpack.c.l.b16 %v1926
          %v1994 = vunpack.c.l.b16 %v1927
          %v1995 = vunpack.c.l.b16 %v1928
          %v1996 = vunpack.c.l.b16 %v1929
          %v1997 = vunpack.c.l.b16 %v1930
          %v1998 = vunpack.c.l.b16 %v1931
          %v1999 = vunpack.c.l.b16 %v1932
          %v2000 = vunpack.c.l.b16 %v1933
          %v2001 = vunpack.c.l.b16 %v1934
          %v2002 = vunpack.c.l.b16 %v1935
          %v2003 = vunpack.c.l.b16 %v1936
          %v2004 = vunpack.c.l.b16 %v1937
          %v2005 = vunpack.c.l.b16 %v1938
          %v2006 = vunpack.c.l.b16 %v1939
          %v2007 = vunpack.c.l.b16 %v1940
          %v2008 = vunpack.c.l.b16 %v1941
          %v2009 = vunpack.c.l.b16 %v1942
          %v2010 = vunpack.c.l.b16 %v1943
          %v2011 = vunpack.c.l.b16 %v1944
          %v2012 = vunpack.c.l.b16 %v1945
          %v2013 = vunpack.c.l.b16 %v1946
          %v2014 = vunpack.c.l.b16 %v1947
          %v2015 = vunpack.c.l.b16 %v1948
          %v2016 = vunpack.c.l.b16 %v1949
          %v2017 = vunpack.c.l.b16 %v1950
          %v2018 = vunpack.c.l.b16 %v1951
          %v2019 = vpack.c.b16 %v1988, %v1987
          %v2020 = vpack.c.b16 %v1990, %v1989
          %v2021 = vpack.c.b16 %v1992, %v1991
          %v2022 = vpack.c.b16 %v1994, %v1993
          %v2023 = vpack.c.b16 %v1996, %v1995
          %v2024 = vpack.c.b16 %v1998, %v1997
          %v2025 = vpack.c.b16 %v2000, %v1999
          %v2026 = vpack.c.b16 %v2002, %v2001
          %v2027 = vpack.c.b16 %v2004, %v2003
          %v2028 = vpack.c.b16 %v2006, %v2005
          %v2029 = vpack.c.b16 %v2008, %v2007
          %v2030 = vpack.c.b16 %v2010, %v2009
          %v2031 = vpack.c.b16 %v2012, %v2011
          %v2032 = vpack.c.b16 %v2014, %v2013
          %v2033 = vpack.c.b16 %v2016, %v2015
          %v2034 = vpack.c.b16 %v2018, %v2017
          %v2036 = vsel %vm1616, %v2019, 0
          %v2039 = vsel %vm1616, %v2020, 0
          %v2042 = vsel %vm1616, %v2021, 0
          %v2045 = vsel %vm1616, %v2022, 0
          %v2048 = vsel %vm1616, %v2023, 0
          %v2051 = vsel %vm1616, %v2024, 0
          %v2054 = vsel %vm1616, %v2025, 0
          %v2057 = vsel %vm1616, %v2026, 0
          %v2060 = vsel %vm1616, %v2027, 0
          %v2063 = vsel %vm1616, %v2028, 0
          %v2066 = vsel %vm1616, %v2029, 0
          %v2069 = vsel %vm1616, %v2030, 0
          %v2072 = vsel %vm1616, %v2031, 0
          %v2075 = vsel %vm1616, %v2032, 0
          %v2078 = vsel %vm1616, %v2033, 0
          %v2081 = vsel %vm1616, %v2034, 0
          %2083 = vmatpush.bf16.msra.mxu0 0
          %2084 = vmatpush.bf16.msra.mxu0 0
          %2085 = vmatpush.bf16.msra.mxu0 0
          %2086 = vmatpush.bf16.msra.mxu0 0
          %2087 = vmatpush.bf16.msra.mxu0 0
          %2088 = vmatpush.bf16.msra.mxu0 0
          %2089 = vmatpush.bf16.msra.mxu0 0
          %2090 = vmatpush.bf16.msra.mxu0 %v1954
          %2091 = vmatmul.bf16.gmra.mxu0 %v2036
          %v2092 = vpop.f32.mrf.mxu0
          %v2093 = vadd.f32 0.0, %v2092
          %v2094 = vpop.f32.mrf.mxu0
          %v2095 = vadd.f32 0.0, %v2094
          %2096 = vmatmul.bf16.gmra.mxu0 %v2039
          %v2097 = vpop.f32.mrf.mxu0
          %v2098 = vadd.f32 0.0, %v2097
          %v2099 = vpop.f32.mrf.mxu0
          %v2100 = vadd.f32 0.0, %v2099
          %2101 = vmatmul.bf16.gmra.mxu0 %v2042
          %v2102 = vpop.f32.mrf.mxu0
          %v2103 = vadd.f32 0.0, %v2102
          %v2104 = vpop.f32.mrf.mxu0
          %v2105 = vadd.f32 0.0, %v2104
          %2106 = vmatmul.bf16.gmra.mxu0 %v2045
          %v2107 = vpop.f32.mrf.mxu0
          %v2108 = vadd.f32 0.0, %v2107
          %v2109 = vpop.f32.mrf.mxu0
          %v2110 = vadd.f32 0.0, %v2109
          %2111 = vmatmul.bf16.gmra.mxu0 %v2048
          %v2112 = vpop.f32.mrf.mxu0
          %v2113 = vadd.f32 0.0, %v2112
          %v2114 = vpop.f32.mrf.mxu0
          %v2115 = vadd.f32 0.0, %v2114
          %2116 = vmatmul.bf16.gmra.mxu0 %v2051
          %v2117 = vpop.f32.mrf.mxu0
          %v2118 = vadd.f32 0.0, %v2117
          %v2119 = vpop.f32.mrf.mxu0
          %v2120 = vadd.f32 0.0, %v2119
          %2121 = vmatmul.bf16.gmra.mxu0 %v2054
          %v2122 = vpop.f32.mrf.mxu0
          %v2123 = vadd.f32 0.0, %v2122
          %v2124 = vpop.f32.mrf.mxu0
          %v2125 = vadd.f32 0.0, %v2124
          %2126 = vmatmul.bf16.gmra.mxu0 %v2057
          %v2127 = vpop.f32.mrf.mxu0
          %v2128 = vadd.f32 0.0, %v2127
          %v2129 = vpop.f32.mrf.mxu0
          %v2130 = vadd.f32 0.0, %v2129
          %2131 = vmatmul.bf16.gmra.mxu0 %v2060
          %v2132 = vpop.f32.mrf.mxu0
          %v2133 = vadd.f32 0.0, %v2132
          %v2134 = vpop.f32.mrf.mxu0
          %v2135 = vadd.f32 0.0, %v2134
          %2136 = vmatmul.bf16.gmra.mxu0 %v2063
          %v2137 = vpop.f32.mrf.mxu0
          %v2138 = vadd.f32 0.0, %v2137
          %v2139 = vpop.f32.mrf.mxu0
          %v2140 = vadd.f32 0.0, %v2139
          %2141 = vmatmul.bf16.gmra.mxu0 %v2066
          %v2142 = vpop.f32.mrf.mxu0
          %v2143 = vadd.f32 0.0, %v2142
          %v2144 = vpop.f32.mrf.mxu0
          %v2145 = vadd.f32 0.0, %v2144
          %2146 = vmatmul.bf16.gmra.mxu0 %v2069
          %v2147 = vpop.f32.mrf.mxu0
          %v2148 = vadd.f32 0.0, %v2147
          %v2149 = vpop.f32.mrf.mxu0
          %v2150 = vadd.f32 0.0, %v2149
          %2151 = vmatmul.bf16.gmra.mxu0 %v2072
          %v2152 = vpop.f32.mrf.mxu0
          %v2153 = vadd.f32 0.0, %v2152
          %v2154 = vpop.f32.mrf.mxu0
          %v2155 = vadd.f32 0.0, %v2154
          %2156 = vmatmul.bf16.gmra.mxu0 %v2075
          %v2157 = vpop.f32.mrf.mxu0
          %v2158 = vadd.f32 0.0, %v2157
          %v2159 = vpop.f32.mrf.mxu0
          %v2160 = vadd.f32 0.0, %v2159
          %2161 = vmatmul.bf16.gmra.mxu0 %v2078
          %v2162 = vpop.f32.mrf.mxu0
          %v2163 = vadd.f32 0.0, %v2162
          %v2164 = vpop.f32.mrf.mxu0
          %v2165 = vadd.f32 0.0, %v2164
          %2166 = vmatmul.bf16.gmra.mxu0 %v2081
          %v2167 = vpop.f32.mrf.mxu0
          %v2168 = vadd.f32 0.0, %v2167
          %v2169 = vpop.f32.mrf.mxu0
          %v2170 = vadd.f32 0.0, %v2169
          %2171 = vdwg.mxu0
          %v2172 = vld [vmem:[%s8] sm:$0xff]
          %v2173 = vld [vmem:[%s8 + $0x8] sm:$0xff]
          %v2174 = vld [vmem:[%s8 + $0x10] sm:$0xff]
          %v2175 = vld [vmem:[%s8 + $0x18] sm:$0xff]
          %v2176 = vld [vmem:[%s8 + $0x20] sm:$0xff]
          %v2177 = vld [vmem:[%s8 + $0x28] sm:$0xff]
          %v2178 = vld [vmem:[%s8 + $0x30] sm:$0xff]
          %v2179 = vld [vmem:[%s8 + $0x38] sm:$0xff]
          %v2180 = vld [vmem:[%s8 + $0x40] sm:$0xff]
          %v2181 = vld [vmem:[%s8 + $0x48] sm:$0xff]
          %v2182 = vld [vmem:[%s8 + $0x50] sm:$0xff]
          %v2183 = vld [vmem:[%s8 + $0x58] sm:$0xff]
          %v2184 = vld [vmem:[%s8 + $0x60] sm:$0xff]
          %v2185 = vld [vmem:[%s8 + $0x68] sm:$0xff]
          %v2186 = vld [vmem:[%s8 + $0x70] sm:$0xff]
          %v2187 = vld [vmem:[%s8 + $0x78] sm:$0xff]
          %v2188 = vld [vmem:[%s8 + $0x80] sm:$0xff]
          %v2189 = vld [vmem:[%s8 + $0x88] sm:$0xff]
          %v2190 = vld [vmem:[%s8 + $0x90] sm:$0xff]
          %v2191 = vld [vmem:[%s8 + $0x98] sm:$0xff]
          %v2192 = vld [vmem:[%s8 + $0xa0] sm:$0xff]
          %v2193 = vld [vmem:[%s8 + $0xa8] sm:$0xff]
          %v2194 = vld [vmem:[%s8 + $0xb0] sm:$0xff]
          %v2195 = vld [vmem:[%s8 + $0xb8] sm:$0xff]
          %v2196 = vld [vmem:[%s8 + $0xc0] sm:$0xff]
          %v2197 = vld [vmem:[%s8 + $0xc8] sm:$0xff]
          %v2198 = vld [vmem:[%s8 + $0xd0] sm:$0xff]
          %v2199 = vld [vmem:[%s8 + $0xd8] sm:$0xff]
          %v2200 = vld [vmem:[%s8 + $0xe0] sm:$0xff]
          %v2201 = vld [vmem:[%s8 + $0xe8] sm:$0xff]
          %v2202 = vld [vmem:[%s8 + $0xf0] sm:$0xff]
          %v2203 = vld [vmem:[%s8 + $0xf8] sm:$0xff]
          %v2204 = vadd.f32 %v2172, %v1872
          %v2205 = vadd.f32 %v2173, %v1873
          %v2206 = vadd.f32 %v2174, %v1874
          %v2207 = vadd.f32 %v2175, %v1875
          %v2208 = vadd.f32 %v2176, %v1876
          %v2209 = vadd.f32 %v2177, %v1877
          %v2210 = vadd.f32 %v2178, %v1878
          %v2211 = vadd.f32 %v2179, %v1879
          %v2212 = vadd.f32 %v2180, %v1880
          %v2213 = vadd.f32 %v2181, %v1881
          %v2214 = vadd.f32 %v2182, %v1882
          %v2215 = vadd.f32 %v2183, %v1883
          %v2216 = vadd.f32 %v2184, %v1884
          %v2217 = vadd.f32 %v2185, %v1885
          %v2218 = vadd.f32 %v2186, %v1886
          %v2219 = vadd.f32 %v2187, %v1887
          %v2220 = vadd.f32 %v2188, %v1904
          %v2221 = vadd.f32 %v2189, %v1905
          %v2222 = vadd.f32 %v2190, %v1906
          %v2223 = vadd.f32 %v2191, %v1907
          %v2224 = vadd.f32 %v2192, %v1908
          %v2225 = vadd.f32 %v2193, %v1909
          %v2226 = vadd.f32 %v2194, %v1910
          %v2227 = vadd.f32 %v2195, %v1911
          %v2228 = vadd.f32 %v2196, %v1912
          %v2229 = vadd.f32 %v2197, %v1913
          %v2230 = vadd.f32 %v2198, %v1914
          %v2231 = vadd.f32 %v2199, %v1915
          %v2232 = vadd.f32 %v2200, %v1916
          %v2233 = vadd.f32 %v2201, %v1917
          %v2234 = vadd.f32 %v2202, %v1918
          %v2235 = vadd.f32 %v2203, %v1919
          %2236 = vst [vmem:[%s8] sm:$0xff] %v2204
          %2237 = vst [vmem:[%s8 + $0x8] sm:$0xff] %v2205
          %2238 = vst [vmem:[%s8 + $0x10] sm:$0xff] %v2206
          %2239 = vst [vmem:[%s8 + $0x18] sm:$0xff] %v2207
          %2240 = vst [vmem:[%s8 + $0x20] sm:$0xff] %v2208
          %2241 = vst [vmem:[%s8 + $0x28] sm:$0xff] %v2209
          %2242 = vst [vmem:[%s8 + $0x30] sm:$0xff] %v2210
          %2243 = vst [vmem:[%s8 + $0x38] sm:$0xff] %v2211
          %2244 = vst [vmem:[%s8 + $0x40] sm:$0xff] %v2212
          %2245 = vst [vmem:[%s8 + $0x48] sm:$0xff] %v2213
          %2246 = vst [vmem:[%s8 + $0x50] sm:$0xff] %v2214
          %2247 = vst [vmem:[%s8 + $0x58] sm:$0xff] %v2215
          %2248 = vst [vmem:[%s8 + $0x60] sm:$0xff] %v2216
          %2249 = vst [vmem:[%s8 + $0x68] sm:$0xff] %v2217
          %2250 = vst [vmem:[%s8 + $0x70] sm:$0xff] %v2218
          %2251 = vst [vmem:[%s8 + $0x78] sm:$0xff] %v2219
          %2252 = vst [vmem:[%s8 + $0x80] sm:$0xff] %v2220
          %2253 = vst [vmem:[%s8 + $0x88] sm:$0xff] %v2221
          %2254 = vst [vmem:[%s8 + $0x90] sm:$0xff] %v2222
          %2255 = vst [vmem:[%s8 + $0x98] sm:$0xff] %v2223
          %2256 = vst [vmem:[%s8 + $0xa0] sm:$0xff] %v2224
          %2257 = vst [vmem:[%s8 + $0xa8] sm:$0xff] %v2225
          %2258 = vst [vmem:[%s8 + $0xb0] sm:$0xff] %v2226
          %2259 = vst [vmem:[%s8 + $0xb8] sm:$0xff] %v2227
          %2260 = vst [vmem:[%s8 + $0xc0] sm:$0xff] %v2228
          %2261 = vst [vmem:[%s8 + $0xc8] sm:$0xff] %v2229
          %2262 = vst [vmem:[%s8 + $0xd0] sm:$0xff] %v2230
          %2263 = vst [vmem:[%s8 + $0xd8] sm:$0xff] %v2231
          %2264 = vst [vmem:[%s8 + $0xe0] sm:$0xff] %v2232
          %2265 = vst [vmem:[%s8 + $0xe8] sm:$0xff] %v2233
          %2266 = vst [vmem:[%s8 + $0xf0] sm:$0xff] %v2234
          %2267 = vst [vmem:[%s8 + $0xf8] sm:$0xff] %v2235
          %v2268 = vld [vmem:[%s10] sm:$0xff]
          %v2269 = vld [vmem:[%s10 + $0x8] sm:$0xff]
          %v2270 = vld [vmem:[%s10 + $0x10] sm:$0xff]
          %v2271 = vld [vmem:[%s10 + $0x18] sm:$0xff]
          %v2272 = vld [vmem:[%s10 + $0x20] sm:$0xff]
          %v2273 = vld [vmem:[%s10 + $0x28] sm:$0xff]
          %v2274 = vld [vmem:[%s10 + $0x30] sm:$0xff]
          %v2275 = vld [vmem:[%s10 + $0x38] sm:$0xff]
          %v2276 = vld [vmem:[%s10 + $0x40] sm:$0xff]
          %v2277 = vld [vmem:[%s10 + $0x48] sm:$0xff]
          %v2278 = vld [vmem:[%s10 + $0x50] sm:$0xff]
          %v2279 = vld [vmem:[%s10 + $0x58] sm:$0xff]
          %v2280 = vld [vmem:[%s10 + $0x60] sm:$0xff]
          %v2281 = vld [vmem:[%s10 + $0x68] sm:$0xff]
          %v2282 = vld [vmem:[%s10 + $0x70] sm:$0xff]
          %v2283 = vld [vmem:[%s10 + $0x78] sm:$0xff]
          %v2284 = vld [vmem:[%s10 + $0x80] sm:$0xff]
          %v2285 = vld [vmem:[%s10 + $0x88] sm:$0xff]
          %v2286 = vld [vmem:[%s10 + $0x90] sm:$0xff]
          %v2287 = vld [vmem:[%s10 + $0x98] sm:$0xff]
          %v2288 = vld [vmem:[%s10 + $0xa0] sm:$0xff]
          %v2289 = vld [vmem:[%s10 + $0xa8] sm:$0xff]
          %v2290 = vld [vmem:[%s10 + $0xb0] sm:$0xff]
          %v2291 = vld [vmem:[%s10 + $0xb8] sm:$0xff]
          %v2292 = vld [vmem:[%s10 + $0xc0] sm:$0xff]
          %v2293 = vld [vmem:[%s10 + $0xc8] sm:$0xff]
          %v2294 = vld [vmem:[%s10 + $0xd0] sm:$0xff]
          %v2295 = vld [vmem:[%s10 + $0xd8] sm:$0xff]
          %v2296 = vld [vmem:[%s10 + $0xe0] sm:$0xff]
          %v2297 = vld [vmem:[%s10 + $0xe8] sm:$0xff]
          %v2298 = vld [vmem:[%s10 + $0xf0] sm:$0xff]
          %v2299 = vld [vmem:[%s10 + $0xf8] sm:$0xff]
          %v2300 = vadd.f32 %v2268, %v2093
          %v2301 = vadd.f32 %v2269, %v2095
          %v2302 = vadd.f32 %v2270, %v2098
          %v2303 = vadd.f32 %v2271, %v2100
          %v2304 = vadd.f32 %v2272, %v2103
          %v2305 = vadd.f32 %v2273, %v2105
          %v2306 = vadd.f32 %v2274, %v2108
          %v2307 = vadd.f32 %v2275, %v2110
          %v2308 = vadd.f32 %v2276, %v2113
          %v2309 = vadd.f32 %v2277, %v2115
          %v2310 = vadd.f32 %v2278, %v2118
          %v2311 = vadd.f32 %v2279, %v2120
          %v2312 = vadd.f32 %v2280, %v2123
          %v2313 = vadd.f32 %v2281, %v2125
          %v2314 = vadd.f32 %v2282, %v2128
          %v2315 = vadd.f32 %v2283, %v2130
          %v2316 = vadd.f32 %v2284, %v2133
          %v2317 = vadd.f32 %v2285, %v2135
          %v2318 = vadd.f32 %v2286, %v2138
          %v2319 = vadd.f32 %v2287, %v2140
          %v2320 = vadd.f32 %v2288, %v2143
          %v2321 = vadd.f32 %v2289, %v2145
          %v2322 = vadd.f32 %v2290, %v2148
          %v2323 = vadd.f32 %v2291, %v2150
          %v2324 = vadd.f32 %v2292, %v2153
          %v2325 = vadd.f32 %v2293, %v2155
          %v2326 = vadd.f32 %v2294, %v2158
          %v2327 = vadd.f32 %v2295, %v2160
          %v2328 = vadd.f32 %v2296, %v2163
          %v2329 = vadd.f32 %v2297, %v2165
          %v2330 = vadd.f32 %v2298, %v2168
          %v2331 = vadd.f32 %v2299, %v2170
          %2332 = vst [vmem:[%s10] sm:$0xff] %v2300
          %2333 = vst [vmem:[%s10 + $0x8] sm:$0xff] %v2301
          %2334 = vst [vmem:[%s10 + $0x10] sm:$0xff] %v2302
          %2335 = vst [vmem:[%s10 + $0x18] sm:$0xff] %v2303
          %2336 = vst [vmem:[%s10 + $0x20] sm:$0xff] %v2304
          %2337 = vst [vmem:[%s10 + $0x28] sm:$0xff] %v2305
          %2338 = vst [vmem:[%s10 + $0x30] sm:$0xff] %v2306
          %2339 = vst [vmem:[%s10 + $0x38] sm:$0xff] %v2307
          %2340 = vst [vmem:[%s10 + $0x40] sm:$0xff] %v2308
          %2341 = vst [vmem:[%s10 + $0x48] sm:$0xff] %v2309
          %2342 = vst [vmem:[%s10 + $0x50] sm:$0xff] %v2310
          %2343 = vst [vmem:[%s10 + $0x58] sm:$0xff] %v2311
          %2344 = vst [vmem:[%s10 + $0x60] sm:$0xff] %v2312
          %2345 = vst [vmem:[%s10 + $0x68] sm:$0xff] %v2313
          %2346 = vst [vmem:[%s10 + $0x70] sm:$0xff] %v2314
          %2347 = vst [vmem:[%s10 + $0x78] sm:$0xff] %v2315
          %2348 = vst [vmem:[%s10 + $0x80] sm:$0xff] %v2316
          %2349 = vst [vmem:[%s10 + $0x88] sm:$0xff] %v2317
          %2350 = vst [vmem:[%s10 + $0x90] sm:$0xff] %v2318
          %2351 = vst [vmem:[%s10 + $0x98] sm:$0xff] %v2319
          %2352 = vst [vmem:[%s10 + $0xa0] sm:$0xff] %v2320
          %2353 = vst [vmem:[%s10 + $0xa8] sm:$0xff] %v2321
          %2354 = vst [vmem:[%s10 + $0xb0] sm:$0xff] %v2322
          %2355 = vst [vmem:[%s10 + $0xb8] sm:$0xff] %v2323
          %2356 = vst [vmem:[%s10 + $0xc0] sm:$0xff] %v2324
          %2357 = vst [vmem:[%s10 + $0xc8] sm:$0xff] %v2325
          %2358 = vst [vmem:[%s10 + $0xd0] sm:$0xff] %v2326
          %2359 = vst [vmem:[%s10 + $0xd8] sm:$0xff] %v2327
          %2360 = vst [vmem:[%s10 + $0xe0] sm:$0xff] %v2328
          %2361 = vst [vmem:[%s10 + $0xe8] sm:$0xff] %v2329
          %2362 = vst [vmem:[%s10 + $0xf0] sm:$0xff] %v2330
          %2363 = vst [vmem:[%s10 + $0xf8] sm:$0xff] %v2331
          %v2364 = vpack.c.bf16 %v1872, %v1872
          %v2365 = vpack.c.bf16 %v1873, %v1873
          %v2366 = vpack.c.bf16 %v1874, %v1874
          %v2367 = vpack.c.bf16 %v1875, %v1875
          %v2368 = vpack.c.bf16 %v1876, %v1876
          %v2369 = vpack.c.bf16 %v1877, %v1877
          %v2370 = vpack.c.bf16 %v1878, %v1878
          %v2371 = vpack.c.bf16 %v1879, %v1879
          %v2372 = vpack.c.bf16 %v1880, %v1880
          %v2373 = vpack.c.bf16 %v1881, %v1881
          %v2374 = vpack.c.bf16 %v1882, %v1882
          %v2375 = vpack.c.bf16 %v1883, %v1883
          %v2376 = vpack.c.bf16 %v1884, %v1884
          %v2377 = vpack.c.bf16 %v1885, %v1885
          %v2378 = vpack.c.bf16 %v1886, %v1886
          %v2379 = vpack.c.bf16 %v1887, %v1887
          %v2380 = vpack.c.bf16 %v1904, %v1904
          %v2381 = vpack.c.bf16 %v1905, %v1905
          %v2382 = vpack.c.bf16 %v1906, %v1906
          %v2383 = vpack.c.bf16 %v1907, %v1907
          %v2384 = vpack.c.bf16 %v1908, %v1908
          %v2385 = vpack.c.bf16 %v1909, %v1909
          %v2386 = vpack.c.bf16 %v1910, %v1910
          %v2387 = vpack.c.bf16 %v1911, %v1911
          %v2388 = vpack.c.bf16 %v1912, %v1912
          %v2389 = vpack.c.bf16 %v1913, %v1913
          %v2390 = vpack.c.bf16 %v1914, %v1914
          %v2391 = vpack.c.bf16 %v1915, %v1915
          %v2392 = vpack.c.bf16 %v1916, %v1916
          %v2393 = vpack.c.bf16 %v1917, %v1917
          %v2394 = vpack.c.bf16 %v1918, %v1918
          %v2395 = vpack.c.bf16 %v1919, %v1919
          %2396 = vst [vmem:[#allocation3] sm:$0xf] %v2364
          %2397 = vst [vmem:[#allocation3 + $0x4] sm:$0xf] %v2365
          %2398 = vst [vmem:[#allocation3 + $0x8] sm:$0xf] %v2366
          %2399 = vst [vmem:[#allocation3 + $0xc] sm:$0xf] %v2367
          %2400 = vst [vmem:[#allocation3 + $0x10] sm:$0xf] %v2368
          %2401 = vst [vmem:[#allocation3 + $0x14] sm:$0xf] %v2369
          %2402 = vst [vmem:[#allocation3 + $0x18] sm:$0xf] %v2370
          %2403 = vst [vmem:[#allocation3 + $0x1c] sm:$0xf] %v2371
          %2404 = vst [vmem:[#allocation3 + $0x20] sm:$0xf] %v2372
          %2405 = vst [vmem:[#allocation3 + $0x24] sm:$0xf] %v2373
          %2406 = vst [vmem:[#allocation3 + $0x28] sm:$0xf] %v2374
          %2407 = vst [vmem:[#allocation3 + $0x2c] sm:$0xf] %v2375
          %2408 = vst [vmem:[#allocation3 + $0x30] sm:$0xf] %v2376
          %2409 = vst [vmem:[#allocation3 + $0x34] sm:$0xf] %v2377
          %2410 = vst [vmem:[#allocation3 + $0x38] sm:$0xf] %v2378
          %2411 = vst [vmem:[#allocation3 + $0x3c] sm:$0xf] %v2379
          %2412 = vst [vmem:[#allocation3 + $0x40] sm:$0xf] %v2380
          %2413 = vst [vmem:[#allocation3 + $0x44] sm:$0xf] %v2381
          %2414 = vst [vmem:[#allocation3 + $0x48] sm:$0xf] %v2382
          %2415 = vst [vmem:[#allocation3 + $0x4c] sm:$0xf] %v2383
          %2416 = vst [vmem:[#allocation3 + $0x50] sm:$0xf] %v2384
          %2417 = vst [vmem:[#allocation3 + $0x54] sm:$0xf] %v2385
          %2418 = vst [vmem:[#allocation3 + $0x58] sm:$0xf] %v2386
          %2419 = vst [vmem:[#allocation3 + $0x5c] sm:$0xf] %v2387
          %2420 = vst [vmem:[#allocation3 + $0x60] sm:$0xf] %v2388
          %2421 = vst [vmem:[#allocation3 + $0x64] sm:$0xf] %v2389
          %2422 = vst [vmem:[#allocation3 + $0x68] sm:$0xf] %v2390
          %2423 = vst [vmem:[#allocation3 + $0x6c] sm:$0xf] %v2391
          %2424 = vst [vmem:[#allocation3 + $0x70] sm:$0xf] %v2392
          %2425 = vst [vmem:[#allocation3 + $0x74] sm:$0xf] %v2393
          %2426 = vst [vmem:[#allocation3 + $0x78] sm:$0xf] %v2394
          %2427 = vst [vmem:[#allocation3 + $0x7c] sm:$0xf] %v2395
        $region105: #{lightgcl_forward.2} parent=84 // pred_fallthru
          _
        // Predicated region
        $region106: #{lightgcl_forward.2} parent=84 // pred_check
          %p2428 = pneg %p214
        $region107: #{lightgcl_forward.2} parent=84 // pred_check_branch
          %2430 = sbr.rel (%p2428) target = $region109
        $region108: #{lightgcl_forward.2} parent=84 // pred_region
          _
        $region109: #{lightgcl_forward.2} parent=84 // pred_fallthru
          _
        // Predicated region
        $region110: #{lightgcl_forward.2} parent=84 // pred_check
          %p2431 = pneg %p235
        $region111: #{lightgcl_forward.2} parent=84 // pred_check_branch
          %2433 = sbr.rel (%p2431) target = $region113
        $region112: #{lightgcl_forward.2} parent=84 // pred_region
          _
        $region113: #{lightgcl_forward.2} parent=84 // pred_fallthru
          _
        // Predicated region
        $region114: #{lightgcl_forward.2} parent=84 // pred_check
          %p2434 = pneg %p256
        $region115: #{lightgcl_forward.2} parent=84 // pred_check_branch
          %2436 = sbr.rel (%p2434) target = $region117
        $region116: #{lightgcl_forward.2} parent=84 // pred_region
          _
        $region117: #{lightgcl_forward.2} parent=84 // pred_fallthru
          _
        // Predicated region
        $region118: #{lightgcl_forward.2} parent=84 // pred_check
          %p2437 = pneg %p277
        $region119: #{lightgcl_forward.2} parent=84 // pred_check_branch
          %2439 = sbr.rel (%p2437) target = $region121
        $region120: #{lightgcl_forward.2} parent=84 // pred_region
          _
        $region121: #{lightgcl_forward.2} parent=84 // pred_fallthru
          _
        // Predicated region
        $region122: #{lightgcl_forward.2} parent=84 // pred_check
          %p2440 = pneg %p214
        $region123: #{lightgcl_forward.2} parent=84 // pred_check_branch
          %2442 = sbr.rel (%p2440) target = $region125
        $region124: #{lightgcl_forward.2} parent=84 // pred_region
          _
        $region125: #{lightgcl_forward.2} parent=84 // pred_fallthru
          _
        // Predicated region
        $region126: #{lightgcl_forward.2} parent=84 // pred_check
          %p2443 = pneg %p235
        $region127: #{lightgcl_forward.2} parent=84 // pred_check_branch
          %2445 = sbr.rel (%p2443) target = $region129
        $region128: #{lightgcl_forward.2} parent=84 // pred_region
          _
        $region129: #{lightgcl_forward.2} parent=84 // pred_fallthru
          _
        // Predicated region
        $region130: #{lightgcl_forward.2} parent=84 // pred_check
          %p2446 = pneg %p256
        $region131: #{lightgcl_forward.2} parent=84 // pred_check_branch
          %2448 = sbr.rel (%p2446) target = $region133
        $region132: #{lightgcl_forward.2} parent=84 // pred_region
          _
        $region133: #{lightgcl_forward.2} parent=84 // pred_fallthru
          _
        // Predicated region
        $region134: #{lightgcl_forward.2} parent=84 // pred_check
          %p2449 = pneg %p277
        $region135: #{lightgcl_forward.2} parent=84 // pred_check_branch
          %2451 = sbr.rel (%p2449) target = $region137
        $region136: #{lightgcl_forward.2} parent=84 // pred_region
          _
        $region137: #{lightgcl_forward.2} parent=84 // pred_fallthru
          _
      $region85: #{lightgcl_forward.2} parent=5 // pred_fallthru
        _
      %p2452 = scmp.le.s32.totalorder 2, %s17
      // Predicated region
      $region138: #{lightgcl_forward.2} parent=5 // pred_check
        %p2453 = pneg %p2452
      $region139: #{lightgcl_forward.2} parent=5 // pred_check_branch
        %2455 = sbr.rel (%p2453) target = $region141
      $region140: #{lightgcl_forward.2} parent=5 // pred_region
        %s2456 = ssub.s32 %s17, 2
      $region141: #{lightgcl_forward.2} parent=5 // pred_fallthru
        _
    $region6: #{lightgcl_forward.2} parent=1 // loop_footer
      %s21 = sadd.s32 1, %s17
    $region7: #{lightgcl_forward.2} parent=1 // loop_footer_branch
      %16 = sbr.rel target = $region3
    $region8: #{lightgcl_forward.2} parent=1 // loop_exit
      _

</llo_original>
